<compile_context>
chip_gen: v7x
topology: tpu7x:2x2x1
jax: 0.10.0
libtpu: 0.0.40
codegen_flags: <defaults>
</compile_context>

<pallas_src>
import functools

import jax
import jax.numpy as jnp
from jax.experimental import pallas as pl
from jax.experimental.pallas import tpu as pltpu

_LANES = 128                     # TPU lane width
_MAX_TILE_ROWS_1TC = 4096        # rows / grid step cap, 1-TensorCore chips (v5e/v6e)
_MAX_TILE_ROWS_2TC = 2048        # rows / grid step cap, 2-TC chips (v7x / megacore)
_MAX_K_BLOCK = 64 * _LANES       # centroid columns per K grid step (bounds unroll)


def _round_up(x, m):
    return -(-x // m) * m


@functools.lru_cache(maxsize=None)
def _vmem_params():
    """Per-generation VMEM budget/limit + TensorCores-per-chip heuristic."""
    vmem_bytes = 64 * 1024 * 1024                    # conservative fallback (v7x-sized)
    try:
        info = pltpu.get_tpu_info()
        vmem_bytes = int(getattr(info, "vmem_capacity_bytes", vmem_bytes))
    except Exception:
        pass
    try:
        kind = (jax.devices()[0].device_kind or "").lower()
    except Exception:
        kind = ""
    multi_tc = any(t in kind for t in ("v4", "v5p", "v7"))      # 2 TCs / chip
    budget = max(16 * 1024 * 1024, (vmem_bytes * 7) // 16)      # 28 MiB @64, 56 MiB @128
    limit = int(min((vmem_bytes * 3) // 4, 100 * 1024 * 1024))  # 48 MiB @64, 96 MiB @128
    return budget, limit, multi_tc


@functools.lru_cache(maxsize=None)
def _single_buffer_ok():
    """Probe whether BlockSpec(pipeline_mode=pl.Buffered(1)) lowers here.

    Single-buffering the grid-constant centroid operands halves their fixed
    VMEM cost; if unsupported we silently fall back to default buffering."""
    def _k(x_ref, o_ref):
        o_ref[...] = x_ref[...] + 1.0
    try:
        x = jnp.zeros((8, _LANES), jnp.float32)
        out = pl.pallas_call(
            _k,
            out_shape=jax.ShapeDtypeStruct((8, _LANES), jnp.float32),
            grid_spec=pltpu.PrefetchScalarGridSpec(
                num_scalar_prefetch=0, grid=(1,),
                in_specs=[pl.BlockSpec((8, _LANES), lambda i: (0, 0),
                                       pipeline_mode=pl.Buffered(1))],
                out_specs=pl.BlockSpec((8, _LANES), lambda i: (0, 0)),
            ),
        )(x)
        jax.block_until_ready(out)
        return True
    except Exception:
        return False


def _choose_k_block(k_pad0, c_dim, ct_itemsize, budget):
    """Centroid columns per K grid step: multiple of 128, resident if it fits."""
    col_bytes = c_dim * ct_itemsize + 4              # ct column + half-norm entry
    if k_pad0 <= _MAX_K_BLOCK and k_pad0 * col_bytes <= budget // 3:
        return k_pad0                                # whole codebook, single K step
    blk = (budget // 3) // (2 * col_bytes) // _LANES * _LANES
    return int(max(_LANES, min(blk, _MAX_K_BLOCK, k_pad0)))


def _choose_tile_rows(n_rows, bytes_per_row, fixed_bytes, budget, multi_tc):
    """Rows per grid step: multiple of 128, as big as the VMEM budget allows.

    Single-TC chips (v5e/v6e) take the largest tile (per-step overhead
    amortization is the main mem-bound lever); 2-TC chips keep >= 2 grid steps
    and prefer an even step count so both TensorCores get equal work."""
    avail = max(budget - fixed_bytes, bytes_per_row)
    tile = (avail // max(bytes_per_row, 1)) // _LANES * _LANES
    max_rows = _MAX_TILE_ROWS_2TC if multi_tc else _MAX_TILE_ROWS_1TC
    tile = int(max(_LANES, min(tile, max_rows, _round_up(n_rows, _LANES))))
    if multi_tc and n_rows > _LANES:
        half = _round_up(pl.cdiv(n_rows, 2), _LANES)
        tile = max(_LANES, min(tile, half))
        nt = pl.cdiv(n_rows, tile)
        if nt > 1 and nt % 2 == 1:
            alt = _round_up(pl.cdiv(n_rows, nt + 1), _LANES)
            if alt >= _LANES and pl.cdiv(n_rows, alt) % 2 == 0:
                tile = alt
    return tile


# ---------------------------------------------------------------------------
# Kernels
# ---------------------------------------------------------------------------
def _assign_kernel(feats_ref, ct_ref, hc2_ref, out_ref, run_min, run_arg, *, norm):
    """feats_ref: (T, C); ct_ref: (C, k_blk); hc2_ref: (1, k_blk) f32;
    out_ref: (T//128, 128) int32; run_min/run_arg: (T, 128) f32/int32 scratch."""
    k_step = pl.program_id(1)
    k_blk = ct_ref.shape[1]

    @pl.when(k_step == 0)
    def _():
        run_min[...] = jnp.full_like(run_min, jnp.finfo(jnp.float32).max)
        run_arg[...] = jnp.zeros_like(run_arg)

    f = feats_ref[...]
    if norm:
        # F.normalize(p=2): x * rsqrt(max(||x||^2, 1e-24))  (sum-of-squares in f32)
        f32 = f.astype(jnp.float32)
        sq = jnp.sum(f32 * f32, axis=-1, keepdims=True)
        f = f32 * jax.lax.rsqrt(jnp.maximum(sq, 1e-24))
    if f.dtype != ct_ref.dtype:
        f = f.astype(ct_ref.dtype)      # keep MXU operands in the centroid dtype

    lane_iota = jax.lax.broadcasted_iota(jnp.int32, (1, _LANES), 1)
    k_base = k_step * k_blk

    # argmin_k ||f - c_k||^2 == argmin_k (0.5*||c_k||^2 - f.c_k).
    # Per 128-lane K block: one MXU matmul + subtract, then a VPU compare/select
    # into the running (min, argmin).  Padded clusters carry +FLT_MAX half-norms
    # and never win; strict '<' gives first-occurrence semantics across blocks.
    for b in range(k_blk // _LANES):
        lo, hi = b * _LANES, (b + 1) * _LANES
        dots = jnp.dot(f, ct_ref[:, lo:hi], preferred_element_type=jnp.float32)
        d = hc2_ref[:, lo:hi] - dots                               # (T, 128) f32
        better = d < run_min[...]
        run_arg[...] = jnp.where(better, lane_iota + (k_base + lo), run_arg[...])
        run_min[...] = jnp.where(better, d, run_min[...])

    @pl.when(k_step == pl.num_programs(1) - 1)
    def _():
        # Single XLU cross-lane reduction at the very end; first-occurrence
        # tie-break = smallest k index among the min-achieving lanes.
        n_sub, lanes = out_ref.shape
        m3 = run_min[...].reshape(n_sub, lanes, _LANES)   # leading-dim split: free
        a3 = run_arg[...].reshape(n_sub, lanes, _LANES)
        row_min = jnp.min(m3, axis=-1, keepdims=True)
        cand = jnp.where(m3 == row_min, a3, jnp.iinfo(jnp.int32).max)
        out_ref[...] = jnp.min(cand, axis=-1)             # (T//128, 128) int32


def _gather_kernel(idx_ref, cent_ref, out_ref):
    """idx_ref: (T, 1) int32; cent_ref: (Kp, C); out_ref: (T, C)."""
    idx = idx_ref[...]                                             # (T, 1)
    k_pad = cent_ref.shape[0]
    iota_k = jax.lax.broadcasted_iota(jnp.int32, (1, k_pad), 1)
    # One-hot in the centroid dtype (0/1 exact in bf16/f32); no per-step cast of
    # the resident centroid block.
    onehot = (iota_k == idx).astype(cent_ref.dtype)                # (T, Kp)
    # NOTE: out-of-range / negative ids produce all-zero rows (torch would raise).
    feats = jnp.dot(onehot, cent_ref[...], preferred_element_type=jnp.float32)
    out_ref[...] = feats.astype(out_ref.dtype)


# ---------------------------------------------------------------------------
# Pallas call builders
# ---------------------------------------------------------------------------
def _assign_pallas(feats_flat, ct, hc2, *, norm, tile, k_blk, vmem_limit):
    n, c_dim = feats_flat.shape
    k_pad = ct.shape[1]
    num_tiles = pl.cdiv(n, tile)
    num_k = k_pad // k_blk
    n_sub = tile // _LANES

    if num_k == 1 and _single_buffer_ok():
        # Grid-constant centroid operands: DMA'd once, no second pipeline buffer.
        ct_spec = pl.BlockSpec((c_dim, k_blk), lambda i, kk: (0, 0),
                               pipeline_mode=pl.Buffered(1))
        hc_spec = pl.BlockSpec((1, k_blk), lambda i, kk: (0, 0),
                               pipeline_mode=pl.Buffered(1))
    else:
        ct_spec = pl.BlockSpec((c_dim, k_blk), lambda i, kk: (0, kk))
        hc_spec = pl.BlockSpec((1, k_blk), lambda i, kk: (0, kk))

    return pl.pallas_call(
        functools.partial(_assign_kernel, norm=norm),
        out_shape=jax.ShapeDtypeStruct((num_tiles, n_sub, _LANES), jnp.int32),
        grid_spec=pltpu.PrefetchScalarGridSpec(
            num_scalar_prefetch=0,
            grid=(num_tiles, num_k),                  # reduction (K) axis last
            in_specs=[
                pl.BlockSpec((tile, c_dim), lambda i, kk: (i, 0)),
                ct_spec,
                hc_spec,
            ],
            # Lane-dense int32 assignment slab: full-width unmasked stores.
            out_specs=pl.BlockSpec((None, n_sub, _LANES), lambda i, kk: (i, 0, 0)),
            scratch_shapes=[pltpu.VMEM((tile, _LANES), jnp.float32),
                            pltpu.VMEM((tile, _LANES), jnp.int32)],
        ),
        compiler_params=pltpu.CompilerParams(
            dimension_semantics=("parallel", "arbitrary"),
            vmem_limit_bytes=vmem_limit),
    )(feats_flat, ct, hc2)


# ---------------------------------------------------------------------------
# Centroid prep (hoisted out of the per-call path)
# ---------------------------------------------------------------------------
def _make_assign_tables(centroids, use_bf16):
    """Pre-transposed/padded (C, K_pad) centroids + 0.5*||c||^2 half-norms."""
    budget, _, _ = _vmem_params()
    k, c_dim = centroids.shape
    mxu_dtype = jnp.bfloat16 if use_bf16 else jnp.float32
    c32 = centroids.astype(jnp.float32)

    k_pad0 = _round_up(k, _LANES)
    k_blk = _choose_k_block(k_pad0, c_dim, jnp.dtype(mxu_dtype).itemsize, budget)
    k_pad = _round_up(k_pad0, k_blk)

    ct = jnp.zeros((c_dim, k_pad), mxu_dtype).at[:, :k].set(c32.T.astype(mxu_dtype))
    hc2 = jnp.full((1, k_pad), jnp.finfo(jnp.float32).max, jnp.float32)
    hc2 = hc2.at[0, :k].set(0.5 * jnp.sum(c32 * c32, axis=-1))
    return ct, hc2, k_blk


def _make_gather_table(centroids):
    k, c_dim = centroids.shape
    k_pad = _round_up(k, _LANES)
    return jnp.zeros((k_pad, c_dim), centroids.dtype).at[:k].set(centroids)


# ---------------------------------------------------------------------------
# Wrappers
# ---------------------------------------------------------------------------
def _feat2cluster(feats, tables, norm, stream_bf16):
    ct, hc2, k_blk = tables
    budget, limit, multi_tc = _vmem_params()
    c_dim = feats.shape[-1]
    feats_flat = feats.reshape(-1, c_dim)
    n = feats_flat.shape[0]

    if stream_bf16 and ct.dtype == jnp.bfloat16 and feats_flat.dtype != jnp.bfloat16:
        # The assign kernel is HBM-read bound: halve the streamed bytes.  Under
        # jit this cast fuses with the upstream producer; for eager one-shot
        # calls on a pre-materialized f32 array set stream_bf16=False.
        feats_flat = feats_flat.astype(jnp.bfloat16)

    stream_itemsize = jnp.dtype(feats_flat.dtype).itemsize
    ct_itemsize = jnp.dtype(ct.dtype).itemsize

    bytes_per_row = (2 * c_dim * stream_itemsize   # double-buffered feature tile
                     + (c_dim * 4 if norm else 0)  # f32 copy for normalization
                     + 2 * _LANES * 4              # running (min, argmin) scratch
                     + 4 * _LANES * 4              # per-K-block dot/compare temps
                     + 2 * 4)                      # double-buffered int32 output
    fixed = 2 * k_blk * (c_dim * ct_itemsize + 4)  # centroid + half-norm buffers
    tile = _choose_tile_rows(n, bytes_per_row, fixed, budget, multi_tc)

    out = _assign_pallas(feats_flat, ct, hc2, norm=norm, tile=tile,
                         k_blk=k_blk, vmem_limit=limit)
    return out.reshape(-1)[:n].reshape(feats.shape[:-1])


def _cluster2feat(idx, cent_pad):
    budget, limit, multi_tc = _vmem_params()
    k_pad, c_dim = cent_pad.shape
    idx_flat = idx.reshape(-1, 1).astype(jnp.int32)
    n = idx_flat.shape[0]
    cent_itemsize = jnp.dtype(cent_pad.dtype).itemsize

    bytes_per_row = (2 * _LANES * 4                 # (T,1) idx block pads to 128 lanes
                     + 2 * c_dim * cent_itemsize    # double-buffered output tile
                     + k_pad * (4 + cent_itemsize)  # one-hot / compare intermediates
                     + c_dim * 4)                   # f32 matmul result row
    fixed = 2 * k_pad * c_dim * cent_itemsize
    tile = _choose_tile_rows(n, bytes_per_row, fixed, budget, multi_tc)
    num_tiles = pl.cdiv(n, tile)

    if _single_buffer_ok():
        cent_spec = pl.BlockSpec((k_pad, c_dim), lambda i: (0, 0),
                                 pipeline_mode=pl.Buffered(1))
    else:
        cent_spec = pl.BlockSpec((k_pad, c_dim), lambda i: (0, 0))

    out = pl.pallas_call(
        _gather_kernel,
        out_shape=jax.ShapeDtypeStruct((n, c_dim), cent_pad.dtype),
        grid_spec=pltpu.PrefetchScalarGridSpec(
            num_scalar_prefetch=0,
            grid=(num_tiles,),
            in_specs=[pl.BlockSpec((tile, 1), lambda i: (i, 0)), cent_spec],
            out_specs=pl.BlockSpec((tile, c_dim), lambda i: (i, 0)),
        ),
        compiler_params=pltpu.CompilerParams(
            dimension_semantics=("parallel",),
            vmem_limit_bytes=limit),
    )(idx_flat, cent_pad)

    return out.reshape(list(idx.shape) + [c_dim])


def feat2cluster(feats, centroids, norm=False, use_bf16=True, stream_bf16=True):
    tables = _make_assign_tables(centroids, use_bf16)
    return _feat2cluster(feats, tables, norm, use_bf16 and stream_bf16)


def cluster2feat(idx, centroids):
    return _cluster2feat(idx, _make_gather_table(centroids))


class KmeansAssigner:
    """JAX/Pallas port of the torch KmeansAssigner.

    Assignments are int32 (torch returns int64) -- fine for K < 2**31.
    use_bf16=True runs the argmin distances on the bf16 MXU path with f32
    accumulation (full MXU rate); set False for the exact f32 path.
    """

    def __init__(self, centroids, norm=False, use_bf16=True, stream_bf16=True):
        # TODO(synk): torch.load(centroids_fpath)['weight'] is host-side file
        # I/O; the (K, C) centroid array is passed in directly instead.
        self.centroids = centroids
        self.norm = norm
        self.use_bf16 = use_bf16
        self.stream_bf16 = stream_bf16
        # Centroid prep (transpose / pad / half-norms) hoisted out of the
        # per-call path -- computed once here.
        self._assign_tables = _make_assign_tables(centroids, use_bf16)
        self._cent_padded = _make_gather_table(centroids)

    @property
    def num_clusters(self):
        return self.centroids.shape[0]

    def __call__(self, inp):
        if jnp.issubdtype(inp.dtype, jnp.integer):
            return _cluster2feat(inp, self._cent_padded)
        return _feat2cluster(inp, self._assign_tables, self.norm,
                             self.use_bf16 and self.stream_bf16)


# ---------------------------------------------------------------------------
# Demo / self-check
# ---------------------------------------------------------------------------
if __name__ == "__main__":
    key = jax.random.PRNGKey(0)
    k_cent, k_x = jax.random.split(key)

    K, C = 16, 32                       # num clusters, feature dim
    B, H, W = 2, 16, 16                 # leading feature dims (*)

    centroids = jax.random.normal(k_cent, (K, C), dtype=jnp.float32)
    x = jax.random.normal(k_x, (B, H, W, C), dtype=jnp.float32)

    assigner = KmeansAssigner(centroids, norm=False)            # default bf16 path

    assgn = jax.block_until_ready(assigner(x))                  # float -> ids
    feats = jax.block_until_ready(assigner(assgn.astype(jnp.int32)))   # ids -> feats
    assgn_n = jax.block_until_ready(KmeansAssigner(centroids, norm=True)(x))
    assgn_f32 = jax.block_until_ready(
        feat2cluster(x, centroids, norm=False, use_bf16=False))  # exact f32 path

    # ---------------- pure-JAX reference checks ----------------
    xf = x.reshape(-1, C)
    c2 = jnp.sum(centroids * centroids, axis=-1)

    def sq_dists_exact(f):                         # exact elementwise f32 distances
        diff = f[:, None, :] - centroids[None, :, :]
        return jnp.sum(diff * diff, axis=-1)

    d2 = sq_dists_exact(xf)

    # exact f32 path: tight parity with torch argmin(cdist)
    a32 = assgn_f32.reshape(-1)
    assert assgn_f32.shape == (B, H, W) and assgn_f32.dtype == jnp.int32
    chosen32 = jnp.take_along_axis(d2, a32[:, None], axis=-1)[:, 0]
    assert bool(jnp.all(chosen32 <= jnp.min(d2, -1) + 1e-3))
    assert float(jnp.mean(a32 == jnp.argmin(d2, -1))) > 0.98

    # default bf16 path: matches the bf16-rounded reference, near-nearest in f32
    a = assgn.reshape(-1)
    assert assgn.shape == (B, H, W) and assgn.dtype == jnp.int32
    assert int(jnp.min(a)) >= 0 and int(jnp.max(a)) < K
    xb = xf.astype(jnp.bfloat16).astype(jnp.float32)
    cb = centroids.astype(jnp.bfloat16).astype(jnp.float32)
    d_bf = 0.5 * c2[None, :] - xb @ cb.T
    assert float(jnp.mean(a == jnp.argmin(d_bf, -1))) > 0.99
    chosen = jnp.take_along_axis(d2, a[:, None], axis=-1)[:, 0]
    assert bool(jnp.all(chosen <= jnp.min(d2, -1) + 1.0))
    assert float(jnp.mean(a == jnp.argmin(d2, -1))) > 0.9

    # normalized bf16 path
    an = assgn_n.reshape(-1)
    assert assgn_n.shape == (B, H, W)
    xn = xf / jnp.maximum(jnp.linalg.norm(xf, axis=-1, keepdims=True), 1e-12)
    d2n = sq_dists_exact(xn)
    chosen_n = jnp.take_along_axis(d2n, an[:, None], axis=-1)[:, 0]
    assert bool(jnp.all(chosen_n <= jnp.min(d2n, -1) + 2e-1))
    xnb = xb / jnp.maximum(jnp.linalg.norm(xb, axis=-1, keepdims=True), 1e-12)
    xnb = xnb.astype(jnp.bfloat16).astype(jnp.float32)
    d_nbf = 0.5 * c2[None, :] - xnb @ cb.T
    assert float(jnp.mean(an == jnp.argmin(d_nbf, -1))) > 0.99

    # gather path: exact centroid rows
    assert feats.shape == (B, H, W, C)
    assert bool(jnp.allclose(feats, centroids[a].reshape(B, H, W, C), atol=1e-5))

    print("KERNEL_OK")
</pallas_src>

<mosaic_0001>
module attributes {stable_mosaic.version = 11 : i64} {
  func.func @_k(%arg0: i32, %arg1: memref<8x128xf32, #tpu.memory_space<vmem>>, %arg2: memref<8x128xf32, #tpu.memory_space<vmem>>) attributes {dimension_semantics = [#tpu.dimension_semantics<arbitrary>], iteration_bounds = array<i64: 1>, scalar_prefetch = 0 : i64, scratch_operands = 0 : i64, tpu.core_type = #tpu.core_type<tc>, window_params = [{pipeline_mode = #tpu.pipeline_mode<synchronous>, transform_indices = @transform_0, window_bounds = array<i64: 8, 128>}, {pipeline_mode = #tpu.pipeline_mode<synchronous>, transform_indices = @transform_1, window_bounds = array<i64: 8, 128>}]} {
    %c0 = arith.constant 0 : index
    %c0_0 = arith.constant 0 : index
    %0 = vector.load %arg1[%c0, %c0_0] : memref<8x128xf32, #tpu.memory_space<vmem>>, vector<8x128xf32>
    %cst = arith.constant 1.000000e+00 : f32
    %1 = vector.broadcast %cst : f32 to vector<8x128xf32>
    %2 = arith.addf %0, %1 : vector<8x128xf32>
    %c0_1 = arith.constant 0 : index
    %c0_2 = arith.constant 0 : index
    %3 = vector.load %arg2[%c0_1, %c0_2] : memref<8x128xf32, #tpu.memory_space<vmem>>, vector<8x128xf32>
    tpu.vector_store %arg2[%c0_1, %c0_2], %2 {strides = array<i32>} : memref<8x128xf32, #tpu.memory_space<vmem>>, vector<8x128xf32>,
    return
  }
  func.func @transform_0(%arg0: i32) -> (i32, i32) {
    %c0_i32 = arith.constant 0 : i32
    %c0_i32_0 = arith.constant 0 : i32
    %c0_i32_1 = arith.constant 0 : i32
    return %c0_i32, %c0_i32_0 : i32, i32
  }
  func.func @transform_1(%arg0: i32) -> (i32, i32) {
    %c0_i32 = arith.constant 0 : i32
    %c0_i32_0 = arith.constant 0 : i32
    %c0_i32_1 = arith.constant 0 : i32
    return %c0_i32, %c0_i32_0 : i32, i32
  }
}

module attributes {stable_mosaic.version = 11 : i64} {
  func.func @_assign_kernel(%arg0: i32, %arg1: i32, %arg2: memref<512x32xbf16, #tpu.memory_space<vmem>>, %arg3: memref<32x128xbf16, #tpu.memory_space<vmem>>, %arg4: memref<1x128xf32, #tpu.memory_space<vmem>>, %arg5: memref<1x4x128xi32, #tpu.memory_space<vmem>>, %arg6: memref<512x128xf32, #tpu.memory_space<vmem>>, %arg7: memref<512x128xi32, #tpu.memory_space<vmem>>) attributes {dimension_semantics = [#tpu.dimension_semantics<parallel>, #tpu.dimension_semantics<arbitrary>], iteration_bounds = array<i64: 1, 1>, scalar_prefetch = 0 : i64, scratch_operands = 2 : i64, tpu.core_type = #tpu.core_type<tc>, window_params = [{transform_indices = @transform_0, window_bounds = array<i64: 512, 32>}, {transform_indices = @transform_1, window_bounds = array<i64: 32, 128>}, {transform_indices = @transform_2, window_bounds = array<i64: 1, 128>}, {transform_indices = @transform_3, window_bounds = array<i64: 1, 4, 128>}]} {
    %c0_i32 = arith.constant 0 : i32
    %0 = arith.cmpi eq, %arg1, %c0_i32 : i32
    %1 = arith.extui %0 : i1 to i32
    %c0_i32_0 = arith.constant 0 : i32
    %2 = arith.cmpi ne, %1, %c0_i32_0 : i32
    scf.if %2 {
      %cst_19 = arith.constant 3.40282347E+38 : f32
      %27 = vector.broadcast %cst_19 : f32 to vector<512x128xf32>
      %c0_20 = arith.constant 0 : index
      %c0_21 = arith.constant 0 : index
      %28 = vector.load %arg6[%c0_20, %c0_21] : memref<512x128xf32, #tpu.memory_space<vmem>>, vector<512x128xf32>
      tpu.vector_store %arg6[%c0_20, %c0_21], %27 {strides = array<i32>} : memref<512x128xf32, #tpu.memory_space<vmem>>, vector<512x128xf32>,
      %c0_i32_22 = arith.constant 0 : i32
      %29 = vector.broadcast %c0_i32_22 : i32 to vector<512x128xi32>
      %c0_23 = arith.constant 0 : index
      %c0_24 = arith.constant 0 : index
      %30 = vector.load %arg7[%c0_23, %c0_24] : memref<512x128xi32, #tpu.memory_space<vmem>>, vector<512x128xi32>
      tpu.vector_store %arg7[%c0_23, %c0_24], %29 {strides = array<i32>} : memref<512x128xi32, #tpu.memory_space<vmem>>, vector<512x128xi32>,
    } else {
    }
    %c0 = arith.constant 0 : index
    %c0_1 = arith.constant 0 : index
    %3 = vector.load %arg2[%c0, %c0_1] : memref<512x32xbf16, #tpu.memory_space<vmem>>, vector<512x32xbf16>
    %4 = tpu.iota {dimensions = array<i32: 1>} : vector<1x128xi32>
    %c128_i32 = arith.constant 128 : i32
    %5 = arith.muli %arg1, %c128_i32 : i32
    %c0_2 = arith.constant 0 : index
    %c0_3 = arith.constant 0 : index
    %6 = vector.load %arg3[%c0_2, %c0_3] : memref<32x128xbf16, #tpu.memory_space<vmem>>, vector<32x128xbf16>
    %cst = arith.constant dense<0.000000e+00> : vector<512x128xf32>
    %7 = tpu.matmul %3, %6, %cst {dimension_numbers = #tpu.dot_dimension_numbers<[1], [0], [0], [1], [0, 0, 1, 1], [], []>} : vector<512x32xbf16>, vector<32x128xbf16>, vector<512x128xf32> -> vector<512x128xf32>
    %c0_4 = arith.constant 0 : index
    %c0_5 = arith.constant 0 : index
    %8 = vector.load %arg4[%c0_4, %c0_5] : memref<1x128xf32, #tpu.memory_space<vmem>>, vector<1x128xf32>
    %9 = vector.broadcast %8 : vector<1x128xf32> to vector<512x128xf32>
    %10 = arith.subf %9, %7 : vector<512x128xf32>
    %c0_6 = arith.constant 0 : index
    %c0_7 = arith.constant 0 : index
    %11 = vector.load %arg6[%c0_6, %c0_7] : memref<512x128xf32, #tpu.memory_space<vmem>>, vector<512x128xf32>
    %12 = arith.cmpf olt, %10, %11 : vector<512x128xf32>
    %c0_i32_8 = arith.constant 0 : i32
    %13 = arith.addi %5, %c0_i32_8 : i32
    %14 = vector.broadcast %13 : i32 to vector<1x128xi32>
    %15 = arith.addi %4, %14 : vector<1x128xi32>
    %c0_9 = arith.constant 0 : index
    %c0_10 = arith.constant 0 : index
    %16 = vector.load %arg7[%c0_9, %c0_10] : memref<512x128xi32, #tpu.memory_space<vmem>>, vector<512x128xi32>
    %17 = vector.shape_cast %15 : vector<1x128xi32> to vector<1x128xi32>
    %18 = vector.broadcast %17 : vector<1x128xi32> to vector<512x128xi32>
    %19 = arith.select %12, %18, %16 : vector<512x128xi1>, vector<512x128xi32>
    %c0_11 = arith.constant 0 : index
    %c0_12 = arith.constant 0 : index
    %20 = vector.load %arg7[%c0_11, %c0_12] : memref<512x128xi32, #tpu.memory_space<vmem>>, vector<512x128xi32>
    tpu.vector_store %arg7[%c0_11, %c0_12], %19 {strides = array<i32>} : memref<512x128xi32, #tpu.memory_space<vmem>>, vector<512x128xi32>,
    %c0_13 = arith.constant 0 : index
    %c0_14 = arith.constant 0 : index
    %21 = vector.load %arg6[%c0_13, %c0_14] : memref<512x128xf32, #tpu.memory_space<vmem>>, vector<512x128xf32>
    %22 = arith.select %12, %10, %21 : vector<512x128xi1>, vector<512x128xf32>
    %c0_15 = arith.constant 0 : index
    %c0_16 = arith.constant 0 : index
    %23 = vector.load %arg6[%c0_15, %c0_16] : memref<512x128xf32, #tpu.memory_space<vmem>>, vector<512x128xf32>
    tpu.vector_store %arg6[%c0_15, %c0_16], %22 {strides = array<i32>} : memref<512x128xf32, #tpu.memory_space<vmem>>, vector<512x128xf32>,
    %c0_i32_17 = arith.constant 0 : i32
    %24 = arith.cmpi eq, %arg1, %c0_i32_17 : i32
    %25 = arith.extui %24 : i1 to i32
    %c0_i32_18 = arith.constant 0 : i32
    %26 = arith.cmpi ne, %25, %c0_i32_18 : i32
    scf.if %26 {
      %c0_19 = arith.constant 0 : index
      %c0_20 = arith.constant 0 : index
      %27 = vector.load %arg6[%c0_19, %c0_20] : memref<512x128xf32, #tpu.memory_space<vmem>>, vector<512x128xf32>
      %28 = vector.shape_cast %27 : vector<512x128xf32> to vector<4x128x128xf32>
      %c0_21 = arith.constant 0 : index
      %c0_22 = arith.constant 0 : index
      %29 = vector.load %arg7[%c0_21, %c0_22] : memref<512x128xi32, #tpu.memory_space<vmem>>, vector<512x128xi32>
      %30 = vector.shape_cast %29 : vector<512x128xi32> to vector<4x128x128xi32>
      %cst_23 = arith.constant dense<0x7F800000> : vector<4x128xf32>
      %31 = vector.multi_reduction <minimumf>, %28, %cst_23 [2] : vector<4x128x128xf32> to vector<4x128xf32>
      %32 = vector.shape_cast %31 : vector<4x128xf32> to vector<4x128x1xf32>
      %33 = vector.broadcast %32 : vector<4x128x1xf32> to vector<4x128x128xf32>
      %34 = arith.cmpf oeq, %28, %33 : vector<4x128x128xf32>
      %c2147483647_i32 = arith.constant 2147483647 : i32
      %35 = vector.broadcast %c2147483647_i32 : i32 to vector<4x128x128xi32>
      %36 = arith.select %34, %30, %35 : vector<4x128x128xi1>, vector<4x128x128xi32>
      %cst_24 = arith.constant dense<2147483647> : vector<4x128xi32>
      %37 = vector.multi_reduction <minsi>, %36, %cst_24 [2] : vector<4x128x128xi32> to vector<4x128xi32>
      %c0_25 = arith.constant 0 : index
      %c0_26 = arith.constant 0 : index
      %c0_27 = arith.constant 0 : index
      %38 = vector.load %arg5[%c0_25, %c0_26, %c0_27] : memref<1x4x128xi32, #tpu.memory_space<vmem>>, vector<1x4x128xi32>
      %39 = vector.shape_cast %38 : vector<1x4x128xi32> to vector<4x128xi32>
      %40 = vector.shape_cast %37 : vector<4x128xi32> to vector<1x4x128xi32>
      tpu.vector_store %arg5[%c0_25, %c0_26, %c0_27], %40 {strides = array<i32>} : memref<1x4x128xi32, #tpu.memory_space<vmem>>, vector<1x4x128xi32>,
    } else {
    }
    return
  }
  func.func @transform_0(%arg0: i32, %arg1: i32) -> (i32, i32) {
    %c0_i32 = arith.constant 0 : i32
    %c0_i32_0 = arith.constant 0 : i32
    return %arg0, %c0_i32 : i32, i32
  }
  func.func @transform_1(%arg0: i32, %arg1: i32) -> (i32, i32) {
    %c0_i32 = arith.constant 0 : i32
    %c0_i32_0 = arith.constant 0 : i32
    return %c0_i32, %arg1 : i32, i32
  }
  func.func @transform_2(%arg0: i32, %arg1: i32) -> (i32, i32) {
    %c0_i32 = arith.constant 0 : i32
    %c0_i32_0 = arith.constant 0 : i32
    return %c0_i32, %arg1 : i32, i32
  }
  func.func @transform_3(%arg0: i32, %arg1: i32) -> (i32, i32, i32) {
    %c0_i32 = arith.constant 0 : i32
    %c0_i32_0 = arith.constant 0 : i32
    %c0_i32_1 = arith.constant 0 : i32
    return %arg0, %c0_i32, %c0_i32_0 : i32, i32, i32
  }
}

</mosaic_0001>

<llo_original>
// kernel: tpu_custom_call.1
$region0: #{tpu_custom_call.1}
  #allocation0 [shape = 'u32[]', space=smem, size = 0x4, offset = 0x4, fixed_abs, tag = 'smem constant byte address 0x4 - core index']
  #allocation1 [shape = 'u32[144,128]{1,0:T(1,128)}', space=vmem, size = 0x12000, scoped, tag = 'internal scratch']
  %s0 = inlined_call_operand.hbm [shape: f32[8,128], index: 0, kind: input, shape index: {}]
  %s1 = inlined_call_operand.hbm [shape: f32[8,128], index: 1, kind: output, shape index: {}]
  %s2 = sld [smem:[#allocation0]]
  $region18: #{tpu_custom_call.1} parent=0
    _
  %s4 = ssub.s32 1, %s2
  %s5 = scalar_select 0, %s4, %s2
  $region1: #{tpu_custom_call.1} parent=0
    #allocation2 [shape = 'u8[4096]{0}', space=vmem, size = 0x1000, scoped, tag = 'input window, operand 0, single buffered']
    #allocation3 [shape = 's32[1]{0}', space=sflag, size = 0x4, scoped, tag = 'scoped memory for tpu_custom_call.1']
    #allocation4 [shape = 's32[1]{0}', space=sflag, size = 0x4, scoped, tag = 'scoped memory for tpu_custom_call.1']
    #allocation5 [shape = 'u8[4096]{0}', space=vmem, size = 0x1000, scoped, tag = 'output window, operand 0, single buffered']
    %6 = vsyncpa [#allocation3], 0
    %7 = vsyncpa [#allocation4], 0
    // Predicated region
    $region2: #{tpu_custom_call.1} parent=1 // pred_check
      _
    $region3: #{tpu_custom_call.1} parent=1 // pred_check_branch
      %9 = sbr.rel (0) target = $region5
    $region4: #{tpu_custom_call.1} parent=1 // pred_region
      %s11 = ssub.s32 128, 128
      %12 = vsyncadd [#allocation3], %s11
      %s14 = sshll.u32 [#allocation2], 4
      %s15 = int_to_ptr.vmem [resolvable:$true] %s14
      %17 = dma.hbm_to_vmem [thread:$0]  %s0, 128, %s15, [#allocation3]
    $region5: #{tpu_custom_call.1} parent=1 // pred_fallthru
      _
    // Predicated region
    $region6: #{tpu_custom_call.1} parent=1 // pred_check
      _
    $region7: #{tpu_custom_call.1} parent=1 // pred_check_branch
      %19 = sbr.rel (0) target = $region9
    $region8: #{tpu_custom_call.1} parent=1 // pred_region
      %20 = dma.done [#allocation3], 128
    $region9: #{tpu_custom_call.1} parent=1 // pred_fallthru
      _
    %v21 = vld [vmem:[#allocation2] sm:$0xff]
    %v22 = vadd.f32 %v21, 1.0
    %23 = vst [vmem:[#allocation5] sm:$0xff] %v22
    // Predicated region
    $region10: #{tpu_custom_call.1} parent=1 // pred_check
      _
    $region11: #{tpu_custom_call.1} parent=1 // pred_check_branch
      %25 = sbr.rel (0) target = $region13
    $region12: #{tpu_custom_call.1} parent=1 // pred_region
      %s27 = ssub.s32 128, 128
      %28 = vsyncadd [#allocation4], %s27
      %s30 = sshll.u32 [#allocation5], 4
      %s31 = int_to_ptr.vmem [resolvable:$true] %s30
      %33 = dma.vmem_to_hbm [thread:$0]  %s31, 128, %s1, [#allocation4]
    $region13: #{tpu_custom_call.1} parent=1 // pred_fallthru
      _
    // Predicated region
    $region14: #{tpu_custom_call.1} parent=1 // pred_check
      _
    $region15: #{tpu_custom_call.1} parent=1 // pred_check_branch
      %35 = sbr.rel (0) target = $region17
    $region16: #{tpu_custom_call.1} parent=1 // pred_region
      %36 = dma.done [#allocation4], 128
    $region17: #{tpu_custom_call.1} parent=1 // pred_fallthru
      _
    %37 = vsyncpa [#allocation3], 1
    %38 = vsyncpa [#allocation4], 1

// kernel: tpu_custom_call.1
$region0: #{tpu_custom_call.1}
  #allocation0 [shape = 'u32[]', space=smem, size = 0x4, offset = 0x4, fixed_abs, tag = 'smem constant byte address 0x4 - core index']
  #allocation1 [shape = 'u32[144,128]{1,0:T(1,128)}', space=vmem, size = 0x12000, scoped, tag = 'internal scratch']
  #allocation2 [shape = 'f32[512,128]{1,0:T(8,128)}', space=vmem, size = 0x40000, scoped, tag = 'scratch operand']
  #allocation3 [shape = 's32[512,128]{1,0:T(8,128)}', space=vmem, size = 0x40000, scoped, tag = 'scratch operand']
  %s0 = inlined_call_operand.vmem [shape: bf16[512,32], index: 0, kind: input, shape index: {}]
  %s1 = inlined_call_operand.vmem [shape: bf16[32,128], index: 1, kind: input, shape index: {}]
  %s2 = inlined_call_operand.vmem [shape: f32[1,128], index: 2, kind: input, shape index: {}]
  %s3 = inlined_call_operand.hbm [shape: s32[1,4,128], index: 3, kind: output, shape index: {}]
  %s4 = sld [smem:[#allocation0]]
  $region30: #{tpu_custom_call.1} parent=0
    _
  %s6 = ssub.s32 1, %s4
  %s7 = scalar_select 0, %s6, %s4
  $region1: #{tpu_custom_call.1} parent=0
    #allocation4 [shape = 'u8[2048]{0}', space=vmem, size = 0x800, scoped, tag = 'output window, operand 0, single buffered']
    #allocation5 [shape = 's32[1]{0}', space=sflag, size = 0x4, scoped, tag = 'scoped memory for tpu_custom_call.1']
    %8 = vsyncpa [#allocation5], 0
    // Predicated region
    $region2: #{tpu_custom_call.1} parent=1 // pred_check
      _
    $region3: #{tpu_custom_call.1} parent=1 // pred_check_branch
      %10 = sbr.rel (0) target = $region5
    $region4: #{tpu_custom_call.1} parent=1 // pred_region
      _
    $region5: #{tpu_custom_call.1} parent=1 // pred_fallthru
      _
    // Predicated region
    $region6: #{tpu_custom_call.1} parent=1 // pred_check
      _
    $region7: #{tpu_custom_call.1} parent=1 // pred_check_branch
      %12 = sbr.rel (0) target = $region9
    $region8: #{tpu_custom_call.1} parent=1 // pred_region
      _
    $region9: #{tpu_custom_call.1} parent=1 // pred_fallthru
      _
    // Predicated region
    $region10: #{tpu_custom_call.1} parent=1 // pred_check
      _
    $region11: #{tpu_custom_call.1} parent=1 // pred_check_branch
      %14 = sbr.rel (0) target = $region13
    $region12: #{tpu_custom_call.1} parent=1 // pred_region
      _
    $region13: #{tpu_custom_call.1} parent=1 // pred_fallthru
      _
    %p16 = scmp.eq.s32.totalorder 0, 0
    // Predicated region
    $region14: #{tpu_custom_call.1} parent=1 // pred_check
      %p17 = pneg %p16
    $region15: #{tpu_custom_call.1} parent=1 // pred_check_branch
      %19 = sbr.rel (%p17) target = $region17
    $region16: #{tpu_custom_call.1} parent=1 // pred_region
      %20 = vst [vmem:[#allocation2] sm:$0xff] 3.4028235e+38
      %21 = vst [vmem:[#allocation2 + $0x8] sm:$0xff] 3.4028235e+38
      %22 = vst [vmem:[#allocation2 + $0x10] sm:$0xff] 3.4028235e+38
      %23 = vst [vmem:[#allocation2 + $0x18] sm:$0xff] 3.4028235e+38
      %24 = vst [vmem:[#allocation2 + $0x20] sm:$0xff] 3.4028235e+38
      %25 = vst [vmem:[#allocation2 + $0x28] sm:$0xff] 3.4028235e+38
      %26 = vst [vmem:[#allocation2 + $0x30] sm:$0xff] 3.4028235e+38
      %27 = vst [vmem:[#allocation2 + $0x38] sm:$0xff] 3.4028235e+38
      %28 = vst [vmem:[#allocation2 + $0x40] sm:$0xff] 3.4028235e+38
      %29 = vst [vmem:[#allocation2 + $0x48] sm:$0xff] 3.4028235e+38
      %30 = vst [vmem:[#allocation2 + $0x50] sm:$0xff] 3.4028235e+38
      %31 = vst [vmem:[#allocation2 + $0x58] sm:$0xff] 3.4028235e+38
      %32 = vst [vmem:[#allocation2 + $0x60] sm:$0xff] 3.4028235e+38
      %33 = vst [vmem:[#allocation2 + $0x68] sm:$0xff] 3.4028235e+38
      %34 = vst [vmem:[#allocation2 + $0x70] sm:$0xff] 3.4028235e+38
      %35 = vst [vmem:[#allocation2 + $0x78] sm:$0xff] 3.4028235e+38
      %36 = vst [vmem:[#allocation2 + $0x80] sm:$0xff] 3.4028235e+38
      %37 = vst [vmem:[#allocation2 + $0x88] sm:$0xff] 3.4028235e+38
      %38 = vst [vmem:[#allocation2 + $0x90] sm:$0xff] 3.4028235e+38
      %39 = vst [vmem:[#allocation2 + $0x98] sm:$0xff] 3.4028235e+38
      %40 = vst [vmem:[#allocation2 + $0xa0] sm:$0xff] 3.4028235e+38
      %41 = vst [vmem:[#allocation2 + $0xa8] sm:$0xff] 3.4028235e+38
      %42 = vst [vmem:[#allocation2 + $0xb0] sm:$0xff] 3.4028235e+38
      %43 = vst [vmem:[#allocation2 + $0xb8] sm:$0xff] 3.4028235e+38
      %44 = vst [vmem:[#allocation2 + $0xc0] sm:$0xff] 3.4028235e+38
      %45 = vst [vmem:[#allocation2 + $0xc8] sm:$0xff] 3.4028235e+38
      %46 = vst [vmem:[#allocation2 + $0xd0] sm:$0xff] 3.4028235e+38
      %47 = vst [vmem:[#allocation2 + $0xd8] sm:$0xff] 3.4028235e+38
      %48 = vst [vmem:[#allocation2 + $0xe0] sm:$0xff] 3.4028235e+38
      %49 = vst [vmem:[#allocation2 + $0xe8] sm:$0xff] 3.4028235e+38
      %50 = vst [vmem:[#allocation2 + $0xf0] sm:$0xff] 3.4028235e+38
      %51 = vst [vmem:[#allocation2 + $0xf8] sm:$0xff] 3.4028235e+38
      %52 = vst [vmem:[#allocation2 + $0x100] sm:$0xff] 3.4028235e+38
      %53 = vst [vmem:[#allocation2 + $0x108] sm:$0xff] 3.4028235e+38
      %54 = vst [vmem:[#allocation2 + $0x110] sm:$0xff] 3.4028235e+38
      %55 = vst [vmem:[#allocation2 + $0x118] sm:$0xff] 3.4028235e+38
      %56 = vst [vmem:[#allocation2 + $0x120] sm:$0xff] 3.4028235e+38
      %57 = vst [vmem:[#allocation2 + $0x128] sm:$0xff] 3.4028235e+38
      %58 = vst [vmem:[#allocation2 + $0x130] sm:$0xff] 3.4028235e+38
      %59 = vst [vmem:[#allocation2 + $0x138] sm:$0xff] 3.4028235e+38
      %60 = vst [vmem:[#allocation2 + $0x140] sm:$0xff] 3.4028235e+38
      %61 = vst [vmem:[#allocation2 + $0x148] sm:$0xff] 3.4028235e+38
      %62 = vst [vmem:[#allocation2 + $0x150] sm:$0xff] 3.4028235e+38
      %63 = vst [vmem:[#allocation2 + $0x158] sm:$0xff] 3.4028235e+38
      %64 = vst [vmem:[#allocation2 + $0x160] sm:$0xff] 3.4028235e+38
      %65 = vst [vmem:[#allocation2 + $0x168] sm:$0xff] 3.4028235e+38
      %66 = vst [vmem:[#allocation2 + $0x170] sm:$0xff] 3.4028235e+38
      %67 = vst [vmem:[#allocation2 + $0x178] sm:$0xff] 3.4028235e+38
      %68 = vst [vmem:[#allocation2 + $0x180] sm:$0xff] 3.4028235e+38
      %69 = vst [vmem:[#allocation2 + $0x188] sm:$0xff] 3.4028235e+38
      %70 = vst [vmem:[#allocation2 + $0x190] sm:$0xff] 3.4028235e+38
      %71 = vst [vmem:[#allocation2 + $0x198] sm:$0xff] 3.4028235e+38
      %72 = vst [vmem:[#allocation2 + $0x1a0] sm:$0xff] 3.4028235e+38
      %73 = vst [vmem:[#allocation2 + $0x1a8] sm:$0xff] 3.4028235e+38
      %74 = vst [vmem:[#allocation2 + $0x1b0] sm:$0xff] 3.4028235e+38
      %75 = vst [vmem:[#allocation2 + $0x1b8] sm:$0xff] 3.4028235e+38
      %76 = vst [vmem:[#allocation2 + $0x1c0] sm:$0xff] 3.4028235e+38
      %77 = vst [vmem:[#allocation2 + $0x1c8] sm:$0xff] 3.4028235e+38
      %78 = vst [vmem:[#allocation2 + $0x1d0] sm:$0xff] 3.4028235e+38
      %79 = vst [vmem:[#allocation2 + $0x1d8] sm:$0xff] 3.4028235e+38
      %80 = vst [vmem:[#allocation2 + $0x1e0] sm:$0xff] 3.4028235e+38
      %81 = vst [vmem:[#allocation2 + $0x1e8] sm:$0xff] 3.4028235e+38
      %82 = vst [vmem:[#allocation2 + $0x1f0] sm:$0xff] 3.4028235e+38
      %83 = vst [vmem:[#allocation2 + $0x1f8] sm:$0xff] 3.4028235e+38
      %84 = vst [vmem:[#allocation3] sm:$0xff] 0
      %85 = vst [vmem:[#allocation3 + $0x8] sm:$0xff] 0
      %86 = vst [vmem:[#allocation3 + $0x10] sm:$0xff] 0
      %87 = vst [vmem:[#allocation3 + $0x18] sm:$0xff] 0
      %88 = vst [vmem:[#allocation3 + $0x20] sm:$0xff] 0
      %89 = vst [vmem:[#allocation3 + $0x28] sm:$0xff] 0
      %90 = vst [vmem:[#allocation3 + $0x30] sm:$0xff] 0
      %91 = vst [vmem:[#allocation3 + $0x38] sm:$0xff] 0
      %92 = vst [vmem:[#allocation3 + $0x40] sm:$0xff] 0
      %93 = vst [vmem:[#allocation3 + $0x48] sm:$0xff] 0
      %94 = vst [vmem:[#allocation3 + $0x50] sm:$0xff] 0
      %95 = vst [vmem:[#allocation3 + $0x58] sm:$0xff] 0
      %96 = vst [vmem:[#allocation3 + $0x60] sm:$0xff] 0
      %97 = vst [vmem:[#allocation3 + $0x68] sm:$0xff] 0
      %98 = vst [vmem:[#allocation3 + $0x70] sm:$0xff] 0
      %99 = vst [vmem:[#allocation3 + $0x78] sm:$0xff] 0
      %100 = vst [vmem:[#allocation3 + $0x80] sm:$0xff] 0
      %101 = vst [vmem:[#allocation3 + $0x88] sm:$0xff] 0
      %102 = vst [vmem:[#allocation3 + $0x90] sm:$0xff] 0
      %103 = vst [vmem:[#allocation3 + $0x98] sm:$0xff] 0
      %104 = vst [vmem:[#allocation3 + $0xa0] sm:$0xff] 0
      %105 = vst [vmem:[#allocation3 + $0xa8] sm:$0xff] 0
      %106 = vst [vmem:[#allocation3 + $0xb0] sm:$0xff] 0
      %107 = vst [vmem:[#allocation3 + $0xb8] sm:$0xff] 0
      %108 = vst [vmem:[#allocation3 + $0xc0] sm:$0xff] 0
      %109 = vst [vmem:[#allocation3 + $0xc8] sm:$0xff] 0
      %110 = vst [vmem:[#allocation3 + $0xd0] sm:$0xff] 0
      %111 = vst [vmem:[#allocation3 + $0xd8] sm:$0xff] 0
      %112 = vst [vmem:[#allocation3 + $0xe0] sm:$0xff] 0
      %113 = vst [vmem:[#allocation3 + $0xe8] sm:$0xff] 0
      %114 = vst [vmem:[#allocation3 + $0xf0] sm:$0xff] 0
      %115 = vst [vmem:[#allocation3 + $0xf8] sm:$0xff] 0
      %116 = vst [vmem:[#allocation3 + $0x100] sm:$0xff] 0
      %117 = vst [vmem:[#allocation3 + $0x108] sm:$0xff] 0
      %118 = vst [vmem:[#allocation3 + $0x110] sm:$0xff] 0
      %119 = vst [vmem:[#allocation3 + $0x118] sm:$0xff] 0
      %120 = vst [vmem:[#allocation3 + $0x120] sm:$0xff] 0
      %121 = vst [vmem:[#allocation3 + $0x128] sm:$0xff] 0
      %122 = vst [vmem:[#allocation3 + $0x130] sm:$0xff] 0
      %123 = vst [vmem:[#allocation3 + $0x138] sm:$0xff] 0
      %124 = vst [vmem:[#allocation3 + $0x140] sm:$0xff] 0
      %125 = vst [vmem:[#allocation3 + $0x148] sm:$0xff] 0
      %126 = vst [vmem:[#allocation3 + $0x150] sm:$0xff] 0
      %127 = vst [vmem:[#allocation3 + $0x158] sm:$0xff] 0
      %128 = vst [vmem:[#allocation3 + $0x160] sm:$0xff] 0
      %129 = vst [vmem:[#allocation3 + $0x168] sm:$0xff] 0
      %130 = vst [vmem:[#allocation3 + $0x170] sm:$0xff] 0
      %131 = vst [vmem:[#allocation3 + $0x178] sm:$0xff] 0
      %132 = vst [vmem:[#allocation3 + $0x180] sm:$0xff] 0
      %133 = vst [vmem:[#allocation3 + $0x188] sm:$0xff] 0
      %134 = vst [vmem:[#allocation3 + $0x190] sm:$0xff] 0
      %135 = vst [vmem:[#allocation3 + $0x198] sm:$0xff] 0
      %136 = vst [vmem:[#allocation3 + $0x1a0] sm:$0xff] 0
      %137 = vst [vmem:[#allocation3 + $0x1a8] sm:$0xff] 0
      %138 = vst [vmem:[#allocation3 + $0x1b0] sm:$0xff] 0
      %139 = vst [vmem:[#allocation3 + $0x1b8] sm:$0xff] 0
      %140 = vst [vmem:[#allocation3 + $0x1c0] sm:$0xff] 0
      %141 = vst [vmem:[#allocation3 + $0x1c8] sm:$0xff] 0
      %142 = vst [vmem:[#allocation3 + $0x1d0] sm:$0xff] 0
      %143 = vst [vmem:[#allocation3 + $0x1d8] sm:$0xff] 0
      %144 = vst [vmem:[#allocation3 + $0x1e0] sm:$0xff] 0
      %145 = vst [vmem:[#allocation3 + $0x1e8] sm:$0xff] 0
      %146 = vst [vmem:[#allocation3 + $0x1f0] sm:$0xff] 0
      %147 = vst [vmem:[#allocation3 + $0x1f8] sm:$0xff] 0
    $region17: #{tpu_custom_call.1} parent=1 // pred_fallthru
      _
    %v148 = vld [vmem:[%s0] sm:$0xf]
    %v149 = vld [vmem:[%s0 + $0x4] sm:$0xf]
    %v150 = vld [vmem:[%s0 + $0x8] sm:$0xf]
    %v151 = vld [vmem:[%s0 + $0xc] sm:$0xf]
    %v152 = vld [vmem:[%s0 + $0x10] sm:$0xf]
    %v153 = vld [vmem:[%s0 + $0x14] sm:$0xf]
    %v154 = vld [vmem:[%s0 + $0x18] sm:$0xf]
    %v155 = vld [vmem:[%s0 + $0x1c] sm:$0xf]
    %v156 = vld [vmem:[%s0 + $0x20] sm:$0xf]
    %v157 = vld [vmem:[%s0 + $0x24] sm:$0xf]
    %v158 = vld [vmem:[%s0 + $0x28] sm:$0xf]
    %v159 = vld [vmem:[%s0 + $0x2c] sm:$0xf]
    %v160 = vld [vmem:[%s0 + $0x30] sm:$0xf]
    %v161 = vld [vmem:[%s0 + $0x34] sm:$0xf]
    %v162 = vld [vmem:[%s0 + $0x38] sm:$0xf]
    %v163 = vld [vmem:[%s0 + $0x3c] sm:$0xf]
    %v164 = vld [vmem:[%s0 + $0x40] sm:$0xf]
    %v165 = vld [vmem:[%s0 + $0x44] sm:$0xf]
    %v166 = vld [vmem:[%s0 + $0x48] sm:$0xf]
    %v167 = vld [vmem:[%s0 + $0x4c] sm:$0xf]
    %v168 = vld [vmem:[%s0 + $0x50] sm:$0xf]
    %v169 = vld [vmem:[%s0 + $0x54] sm:$0xf]
    %v170 = vld [vmem:[%s0 + $0x58] sm:$0xf]
    %v171 = vld [vmem:[%s0 + $0x5c] sm:$0xf]
    %v172 = vld [vmem:[%s0 + $0x60] sm:$0xf]
    %v173 = vld [vmem:[%s0 + $0x64] sm:$0xf]
    %v174 = vld [vmem:[%s0 + $0x68] sm:$0xf]
    %v175 = vld [vmem:[%s0 + $0x6c] sm:$0xf]
    %v176 = vld [vmem:[%s0 + $0x70] sm:$0xf]
    %v177 = vld [vmem:[%s0 + $0x74] sm:$0xf]
    %v178 = vld [vmem:[%s0 + $0x78] sm:$0xf]
    %v179 = vld [vmem:[%s0 + $0x7c] sm:$0xf]
    %v180 = vld [vmem:[%s0 + $0x80] sm:$0xf]
    %v181 = vld [vmem:[%s0 + $0x84] sm:$0xf]
    %v182 = vld [vmem:[%s0 + $0x88] sm:$0xf]
    %v183 = vld [vmem:[%s0 + $0x8c] sm:$0xf]
    %v184 = vld [vmem:[%s0 + $0x90] sm:$0xf]
    %v185 = vld [vmem:[%s0 + $0x94] sm:$0xf]
    %v186 = vld [vmem:[%s0 + $0x98] sm:$0xf]
    %v187 = vld [vmem:[%s0 + $0x9c] sm:$0xf]
    %v188 = vld [vmem:[%s0 + $0xa0] sm:$0xf]
    %v189 = vld [vmem:[%s0 + $0xa4] sm:$0xf]
    %v190 = vld [vmem:[%s0 + $0xa8] sm:$0xf]
    %v191 = vld [vmem:[%s0 + $0xac] sm:$0xf]
    %v192 = vld [vmem:[%s0 + $0xb0] sm:$0xf]
    %v193 = vld [vmem:[%s0 + $0xb4] sm:$0xf]
    %v194 = vld [vmem:[%s0 + $0xb8] sm:$0xf]
    %v195 = vld [vmem:[%s0 + $0xbc] sm:$0xf]
    %v196 = vld [vmem:[%s0 + $0xc0] sm:$0xf]
    %v197 = vld [vmem:[%s0 + $0xc4] sm:$0xf]
    %v198 = vld [vmem:[%s0 + $0xc8] sm:$0xf]
    %v199 = vld [vmem:[%s0 + $0xcc] sm:$0xf]
    %v200 = vld [vmem:[%s0 + $0xd0] sm:$0xf]
    %v201 = vld [vmem:[%s0 + $0xd4] sm:$0xf]
    %v202 = vld [vmem:[%s0 + $0xd8] sm:$0xf]
    %v203 = vld [vmem:[%s0 + $0xdc] sm:$0xf]
    %v204 = vld [vmem:[%s0 + $0xe0] sm:$0xf]
    %v205 = vld [vmem:[%s0 + $0xe4] sm:$0xf]
    %v206 = vld [vmem:[%s0 + $0xe8] sm:$0xf]
    %v207 = vld [vmem:[%s0 + $0xec] sm:$0xf]
    %v208 = vld [vmem:[%s0 + $0xf0] sm:$0xf]
    %v209 = vld [vmem:[%s0 + $0xf4] sm:$0xf]
    %v210 = vld [vmem:[%s0 + $0xf8] sm:$0xf]
    %v211 = vld [vmem:[%s0 + $0xfc] sm:$0xf]
    %v212 = vlaneseq
    %v213 = vand.u32 %v212, 127
    %s214 = smul.u32 0, 128
    %v215 = vld [vmem:[%s1] sm:$0xf]
    %v216 = vld [vmem:[%s1 + $0x4] sm:$0xf]
    %v217 = vld [vmem:[%s1 + $0x8] sm:$0xf]
    %v218 = vld [vmem:[%s1 + $0xc] sm:$0xf]
    %v283 = vunpack.c.l.b16 %v148
    %v284 = vunpack.c.l.b16 %v149
    %v285 = vunpack.c.l.b16 %v150
    %v286 = vunpack.c.l.b16 %v151
    %v287 = vunpack.c.l.b16 %v152
    %v288 = vunpack.c.l.b16 %v153
    %v289 = vunpack.c.l.b16 %v154
    %v290 = vunpack.c.l.b16 %v155
    %v291 = vunpack.c.l.b16 %v156
    %v292 = vunpack.c.l.b16 %v157
    %v293 = vunpack.c.l.b16 %v158
    %v294 = vunpack.c.l.b16 %v159
    %v295 = vunpack.c.l.b16 %v160
    %v296 = vunpack.c.l.b16 %v161
    %v297 = vunpack.c.l.b16 %v162
    %v298 = vunpack.c.l.b16 %v163
    %v299 = vunpack.c.l.b16 %v164
    %v300 = vunpack.c.l.b16 %v165
    %v301 = vunpack.c.l.b16 %v166
    %v302 = vunpack.c.l.b16 %v167
    %v303 = vunpack.c.l.b16 %v168
    %v304 = vunpack.c.l.b16 %v169
    %v305 = vunpack.c.l.b16 %v170
    %v306 = vunpack.c.l.b16 %v171
    %v307 = vunpack.c.l.b16 %v172
    %v308 = vunpack.c.l.b16 %v173
    %v309 = vunpack.c.l.b16 %v174
    %v310 = vunpack.c.l.b16 %v175
    %v311 = vunpack.c.l.b16 %v176
    %v312 = vunpack.c.l.b16 %v177
    %v313 = vunpack.c.l.b16 %v178
    %v314 = vunpack.c.l.b16 %v179
    %v315 = vunpack.c.l.b16 %v180
    %v316 = vunpack.c.l.b16 %v181
    %v317 = vunpack.c.l.b16 %v182
    %v318 = vunpack.c.l.b16 %v183
    %v319 = vunpack.c.l.b16 %v184
    %v320 = vunpack.c.l.b16 %v185
    %v321 = vunpack.c.l.b16 %v186
    %v322 = vunpack.c.l.b16 %v187
    %v323 = vunpack.c.l.b16 %v188
    %v324 = vunpack.c.l.b16 %v189
    %v325 = vunpack.c.l.b16 %v190
    %v326 = vunpack.c.l.b16 %v191
    %v327 = vunpack.c.l.b16 %v192
    %v328 = vunpack.c.l.b16 %v193
    %v329 = vunpack.c.l.b16 %v194
    %v330 = vunpack.c.l.b16 %v195
    %v331 = vunpack.c.l.b16 %v196
    %v332 = vunpack.c.l.b16 %v197
    %v333 = vunpack.c.l.b16 %v198
    %v334 = vunpack.c.l.b16 %v199
    %v335 = vunpack.c.l.b16 %v200
    %v336 = vunpack.c.l.b16 %v201
    %v337 = vunpack.c.l.b16 %v202
    %v338 = vunpack.c.l.b16 %v203
    %v339 = vunpack.c.l.b16 %v204
    %v340 = vunpack.c.l.b16 %v205
    %v341 = vunpack.c.l.b16 %v206
    %v342 = vunpack.c.l.b16 %v207
    %v343 = vunpack.c.l.b16 %v208
    %v344 = vunpack.c.l.b16 %v209
    %v345 = vunpack.c.l.b16 %v210
    %v346 = vunpack.c.l.b16 %v211
    %v347 = vpack.c.b16 %v284, %v283
    %v348 = vpack.c.b16 %v286, %v285
    %v349 = vpack.c.b16 %v288, %v287
    %v350 = vpack.c.b16 %v290, %v289
    %v351 = vpack.c.b16 %v292, %v291
    %v352 = vpack.c.b16 %v294, %v293
    %v353 = vpack.c.b16 %v296, %v295
    %v354 = vpack.c.b16 %v298, %v297
    %v355 = vpack.c.b16 %v300, %v299
    %v356 = vpack.c.b16 %v302, %v301
    %v357 = vpack.c.b16 %v304, %v303
    %v358 = vpack.c.b16 %v306, %v305
    %v359 = vpack.c.b16 %v308, %v307
    %v360 = vpack.c.b16 %v310, %v309
    %v361 = vpack.c.b16 %v312, %v311
    %v362 = vpack.c.b16 %v314, %v313
    %v363 = vpack.c.b16 %v316, %v315
    %v364 = vpack.c.b16 %v318, %v317
    %v365 = vpack.c.b16 %v320, %v319
    %v366 = vpack.c.b16 %v322, %v321
    %v367 = vpack.c.b16 %v324, %v323
    %v368 = vpack.c.b16 %v326, %v325
    %v369 = vpack.c.b16 %v328, %v327
    %v370 = vpack.c.b16 %v330, %v329
    %v371 = vpack.c.b16 %v332, %v331
    %v372 = vpack.c.b16 %v334, %v333
    %v373 = vpack.c.b16 %v336, %v335
    %v374 = vpack.c.b16 %v338, %v337
    %v375 = vpack.c.b16 %v340, %v339
    %v376 = vpack.c.b16 %v342, %v341
    %v377 = vpack.c.b16 %v344, %v343
    %v378 = vpack.c.b16 %v346, %v345
    %v383 = vunpack.c.l.b16 %v215
    %v384 = vunpack.c.l.b16 %v216
    %v385 = vunpack.c.l.b16 %v217
    %v386 = vunpack.c.l.b16 %v218
    %v387 = vpack.c.b16 %v384, %v383
    %v388 = vpack.c.b16 %v386, %v385
    %vm391 = vcmask 261120
    %v393 = vsel %vm391, %v347, 0
    %v396 = vsel %vm391, %v348, 0
    %v399 = vsel %vm391, %v349, 0
    %v402 = vsel %vm391, %v350, 0
    %v405 = vsel %vm391, %v351, 0
    %v408 = vsel %vm391, %v352, 0
    %v411 = vsel %vm391, %v353, 0
    %v414 = vsel %vm391, %v354, 0
    %v417 = vsel %vm391, %v355, 0
    %v420 = vsel %vm391, %v356, 0
    %v423 = vsel %vm391, %v357, 0
    %v426 = vsel %vm391, %v358, 0
    %v429 = vsel %vm391, %v359, 0
    %v432 = vsel %vm391, %v360, 0
    %v435 = vsel %vm391, %v361, 0
    %v438 = vsel %vm391, %v362, 0
    %v441 = vsel %vm391, %v363, 0
    %v444 = vsel %vm391, %v364, 0
    %v447 = vsel %vm391, %v365, 0
    %v450 = vsel %vm391, %v366, 0
    %v453 = vsel %vm391, %v367, 0
    %v456 = vsel %vm391, %v368, 0
    %v459 = vsel %vm391, %v369, 0
    %v462 = vsel %vm391, %v370, 0
    %v465 = vsel %vm391, %v371, 0
    %v468 = vsel %vm391, %v372, 0
    %v471 = vsel %vm391, %v373, 0
    %v474 = vsel %vm391, %v374, 0
    %v477 = vsel %vm391, %v375, 0
    %v480 = vsel %vm391, %v376, 0
    %v483 = vsel %vm391, %v377, 0
    %v486 = vsel %vm391, %v378, 0
    %488 = vmatprep.subr.bf16.mxu0 0
    %489 = vmatpush1.bf16.msra.mxu0 %v387
    %490 = vmatprep.subr.bf16.mxu0 0
    %491 = vmatpush1.bf16.msra.mxu0 %v388
    %492 = vmatprep.subr.bf16.mxu0 0
    %493 = vmatpush1.bf16.msra.mxu0 0
    %494 = vmatprep.subr.bf16.mxu0 0
    %495 = vmatpush1.bf16.msra.mxu0 0
    %496 = vmatprep.subr.bf16.mxu0 0
    %497 = vmatpush1.bf16.msra.mxu0 0
    %498 = vmatprep.subr.bf16.mxu0 0
    %499 = vmatpush1.bf16.msra.mxu0 0
    %500 = vmatprep.subr.bf16.mxu0 0
    %501 = vmatpush1.bf16.msra.mxu0 0
    %502 = vmatprep.subr.bf16.mxu0 0
    %503 = vmatpush1.bf16.msra.mxu0 0
    %504 = vmatprep.subr.bf16.mxu0 0
    %505 = vmatpush1.bf16.msra.mxu0 0
    %506 = vmatprep.subr.bf16.mxu0 0
    %507 = vmatpush1.bf16.msra.mxu0 0
    %508 = vmatprep.subr.bf16.mxu0 0
    %509 = vmatpush1.bf16.msra.mxu0 0
    %510 = vmatprep.subr.bf16.mxu0 0
    %511 = vmatpush1.bf16.msra.mxu0 0
    %512 = vmatprep.subr.bf16.mxu0 0
    %513 = vmatpush1.bf16.msra.mxu0 0
    %514 = vmatprep.subr.bf16.mxu0 0
    %515 = vmatpush1.bf16.msra.mxu0 0
    %516 = vmatprep.subr.bf16.mxu0 0
    %517 = vmatpush1.bf16.msra.mxu0 0
    %518 = vmatprep.subr.bf16.mxu0 0
    %519 = vmatpush1.bf16.msra.mxu0 0
    %520 = vmatprep.mubr.bf16.mxu0 0
    %521 = vmatmul.mubr.bf16.gmra.mrb[0].mxu0 %v393
    %v522 = vpop.f32.mrb[0].mxu0
    %v523 = vadd.f32 0.0, %v522
    %v524 = vpop.f32.mrb[0].mxu0
    %v525 = vpop.f32.mrb[0].mxu0
    %v526 = vadd.f32 0.0, %v525
    %v527 = vpop.f32.mrb[0].mxu0
    %528 = vmatprep.mubr.bf16.mxu0 0
    %529 = vmatmul.mubr.bf16.gmra.mrb[0].mxu0 %v396
    %v530 = vpop.f32.mrb[0].mxu0
    %v531 = vadd.f32 0.0, %v530
    %v532 = vpop.f32.mrb[0].mxu0
    %v533 = vpop.f32.mrb[0].mxu0
    %v534 = vadd.f32 0.0, %v533
    %v535 = vpop.f32.mrb[0].mxu0
    %536 = vmatprep.mubr.bf16.mxu0 0
    %537 = vmatmul.mubr.bf16.gmra.mrb[0].mxu0 %v399
    %v538 = vpop.f32.mrb[0].mxu0
    %v539 = vadd.f32 0.0, %v538
    %v540 = vpop.f32.mrb[0].mxu0
    %v541 = vpop.f32.mrb[0].mxu0
    %v542 = vadd.f32 0.0, %v541
    %v543 = vpop.f32.mrb[0].mxu0
    %544 = vmatprep.mubr.bf16.mxu0 0
    %545 = vmatmul.mubr.bf16.gmra.mrb[0].mxu0 %v402
    %v546 = vpop.f32.mrb[0].mxu0
    %v547 = vadd.f32 0.0, %v546
    %v548 = vpop.f32.mrb[0].mxu0
    %v549 = vpop.f32.mrb[0].mxu0
    %v550 = vadd.f32 0.0, %v549
    %v551 = vpop.f32.mrb[0].mxu0
    %552 = vmatprep.mubr.bf16.mxu0 0
    %553 = vmatmul.mubr.bf16.gmra.mrb[0].mxu0 %v405
    %v554 = vpop.f32.mrb[0].mxu0
    %v555 = vadd.f32 0.0, %v554
    %v556 = vpop.f32.mrb[0].mxu0
    %v557 = vpop.f32.mrb[0].mxu0
    %v558 = vadd.f32 0.0, %v557
    %v559 = vpop.f32.mrb[0].mxu0
    %560 = vmatprep.mubr.bf16.mxu0 0
    %561 = vmatmul.mubr.bf16.gmra.mrb[0].mxu0 %v408
    %v562 = vpop.f32.mrb[0].mxu0
    %v563 = vadd.f32 0.0, %v562
    %v564 = vpop.f32.mrb[0].mxu0
    %v565 = vpop.f32.mrb[0].mxu0
    %v566 = vadd.f32 0.0, %v565
    %v567 = vpop.f32.mrb[0].mxu0
    %568 = vmatprep.mubr.bf16.mxu0 0
    %569 = vmatmul.mubr.bf16.gmra.mrb[0].mxu0 %v411
    %v570 = vpop.f32.mrb[0].mxu0
    %v571 = vadd.f32 0.0, %v570
    %v572 = vpop.f32.mrb[0].mxu0
    %v573 = vpop.f32.mrb[0].mxu0
    %v574 = vadd.f32 0.0, %v573
    %v575 = vpop.f32.mrb[0].mxu0
    %576 = vmatprep.mubr.bf16.mxu0 0
    %577 = vmatmul.mubr.bf16.gmra.mrb[0].mxu0 %v414
    %v578 = vpop.f32.mrb[0].mxu0
    %v579 = vadd.f32 0.0, %v578
    %v580 = vpop.f32.mrb[0].mxu0
    %v581 = vpop.f32.mrb[0].mxu0
    %v582 = vadd.f32 0.0, %v581
    %v583 = vpop.f32.mrb[0].mxu0
    %584 = vmatprep.mubr.bf16.mxu0 0
    %585 = vmatmul.mubr.bf16.gmra.mrb[0].mxu0 %v417
    %v586 = vpop.f32.mrb[0].mxu0
    %v587 = vadd.f32 0.0, %v586
    %v588 = vpop.f32.mrb[0].mxu0
    %v589 = vpop.f32.mrb[0].mxu0
    %v590 = vadd.f32 0.0, %v589
    %v591 = vpop.f32.mrb[0].mxu0
    %592 = vmatprep.mubr.bf16.mxu0 0
    %593 = vmatmul.mubr.bf16.gmra.mrb[0].mxu0 %v420
    %v594 = vpop.f32.mrb[0].mxu0
    %v595 = vadd.f32 0.0, %v594
    %v596 = vpop.f32.mrb[0].mxu0
    %v597 = vpop.f32.mrb[0].mxu0
    %v598 = vadd.f32 0.0, %v597
    %v599 = vpop.f32.mrb[0].mxu0
    %600 = vmatprep.mubr.bf16.mxu0 0
    %601 = vmatmul.mubr.bf16.gmra.mrb[0].mxu0 %v423
    %v602 = vpop.f32.mrb[0].mxu0
    %v603 = vadd.f32 0.0, %v602
    %v604 = vpop.f32.mrb[0].mxu0
    %v605 = vpop.f32.mrb[0].mxu0
    %v606 = vadd.f32 0.0, %v605
    %v607 = vpop.f32.mrb[0].mxu0
    %608 = vmatprep.mubr.bf16.mxu0 0
    %609 = vmatmul.mubr.bf16.gmra.mrb[0].mxu0 %v426
    %v610 = vpop.f32.mrb[0].mxu0
    %v611 = vadd.f32 0.0, %v610
    %v612 = vpop.f32.mrb[0].mxu0
    %v613 = vpop.f32.mrb[0].mxu0
    %v614 = vadd.f32 0.0, %v613
    %v615 = vpop.f32.mrb[0].mxu0
    %616 = vmatprep.mubr.bf16.mxu0 0
    %617 = vmatmul.mubr.bf16.gmra.mrb[0].mxu0 %v429
    %v618 = vpop.f32.mrb[0].mxu0
    %v619 = vadd.f32 0.0, %v618
    %v620 = vpop.f32.mrb[0].mxu0
    %v621 = vpop.f32.mrb[0].mxu0
    %v622 = vadd.f32 0.0, %v621
    %v623 = vpop.f32.mrb[0].mxu0
    %624 = vmatprep.mubr.bf16.mxu0 0
    %625 = vmatmul.mubr.bf16.gmra.mrb[0].mxu0 %v432
    %v626 = vpop.f32.mrb[0].mxu0
    %v627 = vadd.f32 0.0, %v626
    %v628 = vpop.f32.mrb[0].mxu0
    %v629 = vpop.f32.mrb[0].mxu0
    %v630 = vadd.f32 0.0, %v629
    %v631 = vpop.f32.mrb[0].mxu0
    %632 = vmatprep.mubr.bf16.mxu0 0
    %633 = vmatmul.mubr.bf16.gmra.mrb[0].mxu0 %v435
    %v634 = vpop.f32.mrb[0].mxu0
    %v635 = vadd.f32 0.0, %v634
    %v636 = vpop.f32.mrb[0].mxu0
    %v637 = vpop.f32.mrb[0].mxu0
    %v638 = vadd.f32 0.0, %v637
    %v639 = vpop.f32.mrb[0].mxu0
    %640 = vmatprep.mubr.bf16.mxu0 0
    %641 = vmatmul.mubr.bf16.gmra.mrb[0].mxu0 %v438
    %v642 = vpop.f32.mrb[0].mxu0
    %v643 = vadd.f32 0.0, %v642
    %v644 = vpop.f32.mrb[0].mxu0
    %v645 = vpop.f32.mrb[0].mxu0
    %v646 = vadd.f32 0.0, %v645
    %v647 = vpop.f32.mrb[0].mxu0
    %648 = vmatprep.mubr.bf16.mxu0 0
    %649 = vmatmul.mubr.bf16.gmra.mrb[0].mxu0 %v441
    %v650 = vpop.f32.mrb[0].mxu0
    %v651 = vadd.f32 0.0, %v650
    %v652 = vpop.f32.mrb[0].mxu0
    %v653 = vpop.f32.mrb[0].mxu0
    %v654 = vadd.f32 0.0, %v653
    %v655 = vpop.f32.mrb[0].mxu0
    %656 = vmatprep.mubr.bf16.mxu0 0
    %657 = vmatmul.mubr.bf16.gmra.mrb[0].mxu0 %v444
    %v658 = vpop.f32.mrb[0].mxu0
    %v659 = vadd.f32 0.0, %v658
    %v660 = vpop.f32.mrb[0].mxu0
    %v661 = vpop.f32.mrb[0].mxu0
    %v662 = vadd.f32 0.0, %v661
    %v663 = vpop.f32.mrb[0].mxu0
    %664 = vmatprep.mubr.bf16.mxu0 0
    %665 = vmatmul.mubr.bf16.gmra.mrb[0].mxu0 %v447
    %v666 = vpop.f32.mrb[0].mxu0
    %v667 = vadd.f32 0.0, %v666
    %v668 = vpop.f32.mrb[0].mxu0
    %v669 = vpop.f32.mrb[0].mxu0
    %v670 = vadd.f32 0.0, %v669
    %v671 = vpop.f32.mrb[0].mxu0
    %672 = vmatprep.mubr.bf16.mxu0 0
    %673 = vmatmul.mubr.bf16.gmra.mrb[0].mxu0 %v450
    %v674 = vpop.f32.mrb[0].mxu0
    %v675 = vadd.f32 0.0, %v674
    %v676 = vpop.f32.mrb[0].mxu0
    %v677 = vpop.f32.mrb[0].mxu0
    %v678 = vadd.f32 0.0, %v677
    %v679 = vpop.f32.mrb[0].mxu0
    %680 = vmatprep.mubr.bf16.mxu0 0
    %681 = vmatmul.mubr.bf16.gmra.mrb[0].mxu0 %v453
    %v682 = vpop.f32.mrb[0].mxu0
    %v683 = vadd.f32 0.0, %v682
    %v684 = vpop.f32.mrb[0].mxu0
    %v685 = vpop.f32.mrb[0].mxu0
    %v686 = vadd.f32 0.0, %v685
    %v687 = vpop.f32.mrb[0].mxu0
    %688 = vmatprep.mubr.bf16.mxu0 0
    %689 = vmatmul.mubr.bf16.gmra.mrb[0].mxu0 %v456
    %v690 = vpop.f32.mrb[0].mxu0
    %v691 = vadd.f32 0.0, %v690
    %v692 = vpop.f32.mrb[0].mxu0
    %v693 = vpop.f32.mrb[0].mxu0
    %v694 = vadd.f32 0.0, %v693
    %v695 = vpop.f32.mrb[0].mxu0
    %696 = vmatprep.mubr.bf16.mxu0 0
    %697 = vmatmul.mubr.bf16.gmra.mrb[0].mxu0 %v459
    %v698 = vpop.f32.mrb[0].mxu0
    %v699 = vadd.f32 0.0, %v698
    %v700 = vpop.f32.mrb[0].mxu0
    %v701 = vpop.f32.mrb[0].mxu0
    %v702 = vadd.f32 0.0, %v701
    %v703 = vpop.f32.mrb[0].mxu0
    %704 = vmatprep.mubr.bf16.mxu0 0
    %705 = vmatmul.mubr.bf16.gmra.mrb[0].mxu0 %v462
    %v706 = vpop.f32.mrb[0].mxu0
    %v707 = vadd.f32 0.0, %v706
    %v708 = vpop.f32.mrb[0].mxu0
    %v709 = vpop.f32.mrb[0].mxu0
    %v710 = vadd.f32 0.0, %v709
    %v711 = vpop.f32.mrb[0].mxu0
    %712 = vmatprep.mubr.bf16.mxu0 0
    %713 = vmatmul.mubr.bf16.gmra.mrb[0].mxu0 %v465
    %v714 = vpop.f32.mrb[0].mxu0
    %v715 = vadd.f32 0.0, %v714
    %v716 = vpop.f32.mrb[0].mxu0
    %v717 = vpop.f32.mrb[0].mxu0
    %v718 = vadd.f32 0.0, %v717
    %v719 = vpop.f32.mrb[0].mxu0
    %720 = vmatprep.mubr.bf16.mxu0 0
    %721 = vmatmul.mubr.bf16.gmra.mrb[0].mxu0 %v468
    %v722 = vpop.f32.mrb[0].mxu0
    %v723 = vadd.f32 0.0, %v722
    %v724 = vpop.f32.mrb[0].mxu0
    %v725 = vpop.f32.mrb[0].mxu0
    %v726 = vadd.f32 0.0, %v725
    %v727 = vpop.f32.mrb[0].mxu0
    %728 = vmatprep.mubr.bf16.mxu0 0
    %729 = vmatmul.mubr.bf16.gmra.mrb[0].mxu0 %v471
    %v730 = vpop.f32.mrb[0].mxu0
    %v731 = vadd.f32 0.0, %v730
    %v732 = vpop.f32.mrb[0].mxu0
    %v733 = vpop.f32.mrb[0].mxu0
    %v734 = vadd.f32 0.0, %v733
    %v735 = vpop.f32.mrb[0].mxu0
    %736 = vmatprep.mubr.bf16.mxu0 0
    %737 = vmatmul.mubr.bf16.gmra.mrb[0].mxu0 %v474
    %v738 = vpop.f32.mrb[0].mxu0
    %v739 = vadd.f32 0.0, %v738
    %v740 = vpop.f32.mrb[0].mxu0
    %v741 = vpop.f32.mrb[0].mxu0
    %v742 = vadd.f32 0.0, %v741
    %v743 = vpop.f32.mrb[0].mxu0
    %744 = vmatprep.mubr.bf16.mxu0 0
    %745 = vmatmul.mubr.bf16.gmra.mrb[0].mxu0 %v477
    %v746 = vpop.f32.mrb[0].mxu0
    %v747 = vadd.f32 0.0, %v746
    %v748 = vpop.f32.mrb[0].mxu0
    %v749 = vpop.f32.mrb[0].mxu0
    %v750 = vadd.f32 0.0, %v749
    %v751 = vpop.f32.mrb[0].mxu0
    %752 = vmatprep.mubr.bf16.mxu0 0
    %753 = vmatmul.mubr.bf16.gmra.mrb[0].mxu0 %v480
    %v754 = vpop.f32.mrb[0].mxu0
    %v755 = vadd.f32 0.0, %v754
    %v756 = vpop.f32.mrb[0].mxu0
    %v757 = vpop.f32.mrb[0].mxu0
    %v758 = vadd.f32 0.0, %v757
    %v759 = vpop.f32.mrb[0].mxu0
    %760 = vmatprep.mubr.bf16.mxu0 0
    %761 = vmatmul.mubr.bf16.gmra.mrb[0].mxu0 %v483
    %v762 = vpop.f32.mrb[0].mxu0
    %v763 = vadd.f32 0.0, %v762
    %v764 = vpop.f32.mrb[0].mxu0
    %v765 = vpop.f32.mrb[0].mxu0
    %v766 = vadd.f32 0.0, %v765
    %v767 = vpop.f32.mrb[0].mxu0
    %768 = vmatprep.mubr.bf16.mxu0 0
    %769 = vmatmul.mubr.bf16.gmra.mrb[0].mxu0 %v486
    %v770 = vpop.f32.mrb[0].mxu0
    %v771 = vadd.f32 0.0, %v770
    %v772 = vpop.f32.mrb[0].mxu0
    %v773 = vpop.f32.mrb[0].mxu0
    %v774 = vadd.f32 0.0, %v773
    %v775 = vpop.f32.mrb[0].mxu0
    %776 = vdwg.mxu0
    %v777 = vld [vmem:[%s2] sm:$0x1]
    %v779 = vlaneseq
    %v780 = vshrl.u32 %v779, 7
    %v781 = vsub.s32 0, %v780
    %v782 = vrot.slane %v777, %v781
    %v784 = vsub.f32 %v782, %v523
    %v785 = vsub.f32 %v782, %v526
    %v786 = vsub.f32 %v782, %v531
    %v787 = vsub.f32 %v782, %v534
    %v788 = vsub.f32 %v782, %v539
    %v789 = vsub.f32 %v782, %v542
    %v790 = vsub.f32 %v782, %v547
    %v791 = vsub.f32 %v782, %v550
    %v792 = vsub.f32 %v782, %v555
    %v793 = vsub.f32 %v782, %v558
    %v794 = vsub.f32 %v782, %v563
    %v795 = vsub.f32 %v782, %v566
    %v796 = vsub.f32 %v782, %v571
    %v797 = vsub.f32 %v782, %v574
    %v798 = vsub.f32 %v782, %v579
    %v799 = vsub.f32 %v782, %v582
    %v800 = vsub.f32 %v782, %v587
    %v801 = vsub.f32 %v782, %v590
    %v802 = vsub.f32 %v782, %v595
    %v803 = vsub.f32 %v782, %v598
    %v804 = vsub.f32 %v782, %v603
    %v805 = vsub.f32 %v782, %v606
    %v806 = vsub.f32 %v782, %v611
    %v807 = vsub.f32 %v782, %v614
    %v808 = vsub.f32 %v782, %v619
    %v809 = vsub.f32 %v782, %v622
    %v810 = vsub.f32 %v782, %v627
    %v811 = vsub.f32 %v782, %v630
    %v812 = vsub.f32 %v782, %v635
    %v813 = vsub.f32 %v782, %v638
    %v814 = vsub.f32 %v782, %v643
    %v815 = vsub.f32 %v782, %v646
    %v816 = vsub.f32 %v782, %v651
    %v817 = vsub.f32 %v782, %v654
    %v818 = vsub.f32 %v782, %v659
    %v819 = vsub.f32 %v782, %v662
    %v820 = vsub.f32 %v782, %v667
    %v821 = vsub.f32 %v782, %v670
    %v822 = vsub.f32 %v782, %v675
    %v823 = vsub.f32 %v782, %v678
    %v824 = vsub.f32 %v782, %v683
    %v825 = vsub.f32 %v782, %v686
    %v826 = vsub.f32 %v782, %v691
    %v827 = vsub.f32 %v782, %v694
    %v828 = vsub.f32 %v782, %v699
    %v829 = vsub.f32 %v782, %v702
    %v830 = vsub.f32 %v782, %v707
    %v831 = vsub.f32 %v782, %v710
    %v832 = vsub.f32 %v782, %v715
    %v833 = vsub.f32 %v782, %v718
    %v834 = vsub.f32 %v782, %v723
    %v835 = vsub.f32 %v782, %v726
    %v836 = vsub.f32 %v782, %v731
    %v837 = vsub.f32 %v782, %v734
    %v838 = vsub.f32 %v782, %v739
    %v839 = vsub.f32 %v782, %v742
    %v840 = vsub.f32 %v782, %v747
    %v841 = vsub.f32 %v782, %v750
    %v842 = vsub.f32 %v782, %v755
    %v843 = vsub.f32 %v782, %v758
    %v844 = vsub.f32 %v782, %v763
    %v845 = vsub.f32 %v782, %v766
    %v846 = vsub.f32 %v782, %v771
    %v847 = vsub.f32 %v782, %v774
    %v848 = vld [vmem:[#allocation2] sm:$0xff]
    %v849 = vld [vmem:[#allocation2 + $0x8] sm:$0xff]
    %v850 = vld [vmem:[#allocation2 + $0x10] sm:$0xff]
    %v851 = vld [vmem:[#allocation2 + $0x18] sm:$0xff]
    %v852 = vld [vmem:[#allocation2 + $0x20] sm:$0xff]
    %v853 = vld [vmem:[#allocation2 + $0x28] sm:$0xff]
    %v854 = vld [vmem:[#allocation2 + $0x30] sm:$0xff]
    %v855 = vld [vmem:[#allocation2 + $0x38] sm:$0xff]
    %v856 = vld [vmem:[#allocation2 + $0x40] sm:$0xff]
    %v857 = vld [vmem:[#allocation2 + $0x48] sm:$0xff]
    %v858 = vld [vmem:[#allocation2 + $0x50] sm:$0xff]
    %v859 = vld [vmem:[#allocation2 + $0x58] sm:$0xff]
    %v860 = vld [vmem:[#allocation2 + $0x60] sm:$0xff]
    %v861 = vld [vmem:[#allocation2 + $0x68] sm:$0xff]
    %v862 = vld [vmem:[#allocation2 + $0x70] sm:$0xff]
    %v863 = vld [vmem:[#allocation2 + $0x78] sm:$0xff]
    %v864 = vld [vmem:[#allocation2 + $0x80] sm:$0xff]
    %v865 = vld [vmem:[#allocation2 + $0x88] sm:$0xff]
    %v866 = vld [vmem:[#allocation2 + $0x90] sm:$0xff]
    %v867 = vld [vmem:[#allocation2 + $0x98] sm:$0xff]
    %v868 = vld [vmem:[#allocation2 + $0xa0] sm:$0xff]
    %v869 = vld [vmem:[#allocation2 + $0xa8] sm:$0xff]
    %v870 = vld [vmem:[#allocation2 + $0xb0] sm:$0xff]
    %v871 = vld [vmem:[#allocation2 + $0xb8] sm:$0xff]
    %v872 = vld [vmem:[#allocation2 + $0xc0] sm:$0xff]
    %v873 = vld [vmem:[#allocation2 + $0xc8] sm:$0xff]
    %v874 = vld [vmem:[#allocation2 + $0xd0] sm:$0xff]
    %v875 = vld [vmem:[#allocation2 + $0xd8] sm:$0xff]
    %v876 = vld [vmem:[#allocation2 + $0xe0] sm:$0xff]
    %v877 = vld [vmem:[#allocation2 + $0xe8] sm:$0xff]
    %v878 = vld [vmem:[#allocation2 + $0xf0] sm:$0xff]
    %v879 = vld [vmem:[#allocation2 + $0xf8] sm:$0xff]
    %v880 = vld [vmem:[#allocation2 + $0x100] sm:$0xff]
    %v881 = vld [vmem:[#allocation2 + $0x108] sm:$0xff]
    %v882 = vld [vmem:[#allocation2 + $0x110] sm:$0xff]
    %v883 = vld [vmem:[#allocation2 + $0x118] sm:$0xff]
    %v884 = vld [vmem:[#allocation2 + $0x120] sm:$0xff]
    %v885 = vld [vmem:[#allocation2 + $0x128] sm:$0xff]
    %v886 = vld [vmem:[#allocation2 + $0x130] sm:$0xff]
    %v887 = vld [vmem:[#allocation2 + $0x138] sm:$0xff]
    %v888 = vld [vmem:[#allocation2 + $0x140] sm:$0xff]
    %v889 = vld [vmem:[#allocation2 + $0x148] sm:$0xff]
    %v890 = vld [vmem:[#allocation2 + $0x150] sm:$0xff]
    %v891 = vld [vmem:[#allocation2 + $0x158] sm:$0xff]
    %v892 = vld [vmem:[#allocation2 + $0x160] sm:$0xff]
    %v893 = vld [vmem:[#allocation2 + $0x168] sm:$0xff]
    %v894 = vld [vmem:[#allocation2 + $0x170] sm:$0xff]
    %v895 = vld [vmem:[#allocation2 + $0x178] sm:$0xff]
    %v896 = vld [vmem:[#allocation2 + $0x180] sm:$0xff]
    %v897 = vld [vmem:[#allocation2 + $0x188] sm:$0xff]
    %v898 = vld [vmem:[#allocation2 + $0x190] sm:$0xff]
    %v899 = vld [vmem:[#allocation2 + $0x198] sm:$0xff]
    %v900 = vld [vmem:[#allocation2 + $0x1a0] sm:$0xff]
    %v901 = vld [vmem:[#allocation2 + $0x1a8] sm:$0xff]
    %v902 = vld [vmem:[#allocation2 + $0x1b0] sm:$0xff]
    %v903 = vld [vmem:[#allocation2 + $0x1b8] sm:$0xff]
    %v904 = vld [vmem:[#allocation2 + $0x1c0] sm:$0xff]
    %v905 = vld [vmem:[#allocation2 + $0x1c8] sm:$0xff]
    %v906 = vld [vmem:[#allocation2 + $0x1d0] sm:$0xff]
    %v907 = vld [vmem:[#allocation2 + $0x1d8] sm:$0xff]
    %v908 = vld [vmem:[#allocation2 + $0x1e0] sm:$0xff]
    %v909 = vld [vmem:[#allocation2 + $0x1e8] sm:$0xff]
    %v910 = vld [vmem:[#allocation2 + $0x1f0] sm:$0xff]
    %v911 = vld [vmem:[#allocation2 + $0x1f8] sm:$0xff]
    %vm912 = vcmp.lt.f32.partialorder %v784, %v848
    %vm913 = vcmp.lt.f32.partialorder %v785, %v849
    %vm914 = vcmp.lt.f32.partialorder %v786, %v850
    %vm915 = vcmp.lt.f32.partialorder %v787, %v851
    %vm916 = vcmp.lt.f32.partialorder %v788, %v852
    %vm917 = vcmp.lt.f32.partialorder %v789, %v853
    %vm918 = vcmp.lt.f32.partialorder %v790, %v854
    %vm919 = vcmp.lt.f32.partialorder %v791, %v855
    %vm920 = vcmp.lt.f32.partialorder %v792, %v856
    %vm921 = vcmp.lt.f32.partialorder %v793, %v857
    %vm922 = vcmp.lt.f32.partialorder %v794, %v858
    %vm923 = vcmp.lt.f32.partialorder %v795, %v859
    %vm924 = vcmp.lt.f32.partialorder %v796, %v860
    %vm925 = vcmp.lt.f32.partialorder %v797, %v861
    %vm926 = vcmp.lt.f32.partialorder %v798, %v862
    %vm927 = vcmp.lt.f32.partialorder %v799, %v863
    %vm928 = vcmp.lt.f32.partialorder %v800, %v864
    %vm929 = vcmp.lt.f32.partialorder %v801, %v865
    %vm930 = vcmp.lt.f32.partialorder %v802, %v866
    %vm931 = vcmp.lt.f32.partialorder %v803, %v867
    %vm932 = vcmp.lt.f32.partialorder %v804, %v868
    %vm933 = vcmp.lt.f32.partialorder %v805, %v869
    %vm934 = vcmp.lt.f32.partialorder %v806, %v870
    %vm935 = vcmp.lt.f32.partialorder %v807, %v871
    %vm936 = vcmp.lt.f32.partialorder %v808, %v872
    %vm937 = vcmp.lt.f32.partialorder %v809, %v873
    %vm938 = vcmp.lt.f32.partialorder %v810, %v874
    %vm939 = vcmp.lt.f32.partialorder %v811, %v875
    %vm940 = vcmp.lt.f32.partialorder %v812, %v876
    %vm941 = vcmp.lt.f32.partialorder %v813, %v877
    %vm942 = vcmp.lt.f32.partialorder %v814, %v878
    %vm943 = vcmp.lt.f32.partialorder %v815, %v879
    %vm944 = vcmp.lt.f32.partialorder %v816, %v880
    %vm945 = vcmp.lt.f32.partialorder %v817, %v881
    %vm946 = vcmp.lt.f32.partialorder %v818, %v882
    %vm947 = vcmp.lt.f32.partialorder %v819, %v883
    %vm948 = vcmp.lt.f32.partialorder %v820, %v884
    %vm949 = vcmp.lt.f32.partialorder %v821, %v885
    %vm950 = vcmp.lt.f32.partialorder %v822, %v886
    %vm951 = vcmp.lt.f32.partialorder %v823, %v887
    %vm952 = vcmp.lt.f32.partialorder %v824, %v888
    %vm953 = vcmp.lt.f32.partialorder %v825, %v889
    %vm954 = vcmp.lt.f32.partialorder %v826, %v890
    %vm955 = vcmp.lt.f32.partialorder %v827, %v891
    %vm956 = vcmp.lt.f32.partialorder %v828, %v892
    %vm957 = vcmp.lt.f32.partialorder %v829, %v893
    %vm958 = vcmp.lt.f32.partialorder %v830, %v894
    %vm959 = vcmp.lt.f32.partialorder %v831, %v895
    %vm960 = vcmp.lt.f32.partialorder %v832, %v896
    %vm961 = vcmp.lt.f32.partialorder %v833, %v897
    %vm962 = vcmp.lt.f32.partialorder %v834, %v898
    %vm963 = vcmp.lt.f32.partialorder %v835, %v899
    %vm964 = vcmp.lt.f32.partialorder %v836, %v900
    %vm965 = vcmp.lt.f32.partialorder %v837, %v901
    %vm966 = vcmp.lt.f32.partialorder %v838, %v902
    %vm967 = vcmp.lt.f32.partialorder %v839, %v903
    %vm968 = vcmp.lt.f32.partialorder %v840, %v904
    %vm969 = vcmp.lt.f32.partialorder %v841, %v905
    %vm970 = vcmp.lt.f32.partialorder %v842, %v906
    %vm971 = vcmp.lt.f32.partialorder %v843, %v907
    %vm972 = vcmp.lt.f32.partialorder %v844, %v908
    %vm973 = vcmp.lt.f32.partialorder %v845, %v909
    %vm974 = vcmp.lt.f32.partialorder %v846, %v910
    %vm975 = vcmp.lt.f32.partialorder %v847, %v911
    %v976 = vstv %s214
    %v977 = vadd.s32 %v213, %v976
    %v978 = vld [vmem:[#allocation3] sm:$0xff]
    %v979 = vld [vmem:[#allocation3 + $0x8] sm:$0xff]
    %v980 = vld [vmem:[#allocation3 + $0x10] sm:$0xff]
    %v981 = vld [vmem:[#allocation3 + $0x18] sm:$0xff]
    %v982 = vld [vmem:[#allocation3 + $0x20] sm:$0xff]
    %v983 = vld [vmem:[#allocation3 + $0x28] sm:$0xff]
    %v984 = vld [vmem:[#allocation3 + $0x30] sm:$0xff]
    %v985 = vld [vmem:[#allocation3 + $0x38] sm:$0xff]
    %v986 = vld [vmem:[#allocation3 + $0x40] sm:$0xff]
    %v987 = vld [vmem:[#allocation3 + $0x48] sm:$0xff]
    %v988 = vld [vmem:[#allocation3 + $0x50] sm:$0xff]
    %v989 = vld [vmem:[#allocation3 + $0x58] sm:$0xff]
    %v990 = vld [vmem:[#allocation3 + $0x60] sm:$0xff]
    %v991 = vld [vmem:[#allocation3 + $0x68] sm:$0xff]
    %v992 = vld [vmem:[#allocation3 + $0x70] sm:$0xff]
    %v993 = vld [vmem:[#allocation3 + $0x78] sm:$0xff]
    %v994 = vld [vmem:[#allocation3 + $0x80] sm:$0xff]
    %v995 = vld [vmem:[#allocation3 + $0x88] sm:$0xff]
    %v996 = vld [vmem:[#allocation3 + $0x90] sm:$0xff]
    %v997 = vld [vmem:[#allocation3 + $0x98] sm:$0xff]
    %v998 = vld [vmem:[#allocation3 + $0xa0] sm:$0xff]
    %v999 = vld [vmem:[#allocation3 + $0xa8] sm:$0xff]
    %v1000 = vld [vmem:[#allocation3 + $0xb0] sm:$0xff]
    %v1001 = vld [vmem:[#allocation3 + $0xb8] sm:$0xff]
    %v1002 = vld [vmem:[#allocation3 + $0xc0] sm:$0xff]
    %v1003 = vld [vmem:[#allocation3 + $0xc8] sm:$0xff]
    %v1004 = vld [vmem:[#allocation3 + $0xd0] sm:$0xff]
    %v1005 = vld [vmem:[#allocation3 + $0xd8] sm:$0xff]
    %v1006 = vld [vmem:[#allocation3 + $0xe0] sm:$0xff]
    %v1007 = vld [vmem:[#allocation3 + $0xe8] sm:$0xff]
    %v1008 = vld [vmem:[#allocation3 + $0xf0] sm:$0xff]
    %v1009 = vld [vmem:[#allocation3 + $0xf8] sm:$0xff]
    %v1010 = vld [vmem:[#allocation3 + $0x100] sm:$0xff]
    %v1011 = vld [vmem:[#allocation3 + $0x108] sm:$0xff]
    %v1012 = vld [vmem:[#allocation3 + $0x110] sm:$0xff]
    %v1013 = vld [vmem:[#allocation3 + $0x118] sm:$0xff]
    %v1014 = vld [vmem:[#allocation3 + $0x120] sm:$0xff]
    %v1015 = vld [vmem:[#allocation3 + $0x128] sm:$0xff]
    %v1016 = vld [vmem:[#allocation3 + $0x130] sm:$0xff]
    %v1017 = vld [vmem:[#allocation3 + $0x138] sm:$0xff]
    %v1018 = vld [vmem:[#allocation3 + $0x140] sm:$0xff]
    %v1019 = vld [vmem:[#allocation3 + $0x148] sm:$0xff]
    %v1020 = vld [vmem:[#allocation3 + $0x150] sm:$0xff]
    %v1021 = vld [vmem:[#allocation3 + $0x158] sm:$0xff]
    %v1022 = vld [vmem:[#allocation3 + $0x160] sm:$0xff]
    %v1023 = vld [vmem:[#allocation3 + $0x168] sm:$0xff]
    %v1024 = vld [vmem:[#allocation3 + $0x170] sm:$0xff]
    %v1025 = vld [vmem:[#allocation3 + $0x178] sm:$0xff]
    %v1026 = vld [vmem:[#allocation3 + $0x180] sm:$0xff]
    %v1027 = vld [vmem:[#allocation3 + $0x188] sm:$0xff]
    %v1028 = vld [vmem:[#allocation3 + $0x190] sm:$0xff]
    %v1029 = vld [vmem:[#allocation3 + $0x198] sm:$0xff]
    %v1030 = vld [vmem:[#allocation3 + $0x1a0] sm:$0xff]
    %v1031 = vld [vmem:[#allocation3 + $0x1a8] sm:$0xff]
    %v1032 = vld [vmem:[#allocation3 + $0x1b0] sm:$0xff]
    %v1033 = vld [vmem:[#allocation3 + $0x1b8] sm:$0xff]
    %v1034 = vld [vmem:[#allocation3 + $0x1c0] sm:$0xff]
    %v1035 = vld [vmem:[#allocation3 + $0x1c8] sm:$0xff]
    %v1036 = vld [vmem:[#allocation3 + $0x1d0] sm:$0xff]
    %v1037 = vld [vmem:[#allocation3 + $0x1d8] sm:$0xff]
    %v1038 = vld [vmem:[#allocation3 + $0x1e0] sm:$0xff]
    %v1039 = vld [vmem:[#allocation3 + $0x1e8] sm:$0xff]
    %v1040 = vld [vmem:[#allocation3 + $0x1f0] sm:$0xff]
    %v1041 = vld [vmem:[#allocation3 + $0x1f8] sm:$0xff]
    %v1042 = vsel %vm912, %v977, %v978
    %v1043 = vsel %vm913, %v977, %v979
    %v1044 = vsel %vm914, %v977, %v980
    %v1045 = vsel %vm915, %v977, %v981
    %v1046 = vsel %vm916, %v977, %v982
    %v1047 = vsel %vm917, %v977, %v983
    %v1048 = vsel %vm918, %v977, %v984
    %v1049 = vsel %vm919, %v977, %v985
    %v1050 = vsel %vm920, %v977, %v986
    %v1051 = vsel %vm921, %v977, %v987
    %v1052 = vsel %vm922, %v977, %v988
    %v1053 = vsel %vm923, %v977, %v989
    %v1054 = vsel %vm924, %v977, %v990
    %v1055 = vsel %vm925, %v977, %v991
    %v1056 = vsel %vm926, %v977, %v992
    %v1057 = vsel %vm927, %v977, %v993
    %v1058 = vsel %vm928, %v977, %v994
    %v1059 = vsel %vm929, %v977, %v995
    %v1060 = vsel %vm930, %v977, %v996
    %v1061 = vsel %vm931, %v977, %v997
    %v1062 = vsel %vm932, %v977, %v998
    %v1063 = vsel %vm933, %v977, %v999
    %v1064 = vsel %vm934, %v977, %v1000
    %v1065 = vsel %vm935, %v977, %v1001
    %v1066 = vsel %vm936, %v977, %v1002
    %v1067 = vsel %vm937, %v977, %v1003
    %v1068 = vsel %vm938, %v977, %v1004
    %v1069 = vsel %vm939, %v977, %v1005
    %v1070 = vsel %vm940, %v977, %v1006
    %v1071 = vsel %vm941, %v977, %v1007
    %v1072 = vsel %vm942, %v977, %v1008
    %v1073 = vsel %vm943, %v977, %v1009
    %v1074 = vsel %vm944, %v977, %v1010
    %v1075 = vsel %vm945, %v977, %v1011
    %v1076 = vsel %vm946, %v977, %v1012
    %v1077 = vsel %vm947, %v977, %v1013
    %v1078 = vsel %vm948, %v977, %v1014
    %v1079 = vsel %vm949, %v977, %v1015
    %v1080 = vsel %vm950, %v977, %v1016
    %v1081 = vsel %vm951, %v977, %v1017
    %v1082 = vsel %vm952, %v977, %v1018
    %v1083 = vsel %vm953, %v977, %v1019
    %v1084 = vsel %vm954, %v977, %v1020
    %v1085 = vsel %vm955, %v977, %v1021
    %v1086 = vsel %vm956, %v977, %v1022
    %v1087 = vsel %vm957, %v977, %v1023
    %v1088 = vsel %vm958, %v977, %v1024
    %v1089 = vsel %vm959, %v977, %v1025
    %v1090 = vsel %vm960, %v977, %v1026
    %v1091 = vsel %vm961, %v977, %v1027
    %v1092 = vsel %vm962, %v977, %v1028
    %v1093 = vsel %vm963, %v977, %v1029
    %v1094 = vsel %vm964, %v977, %v1030
    %v1095 = vsel %vm965, %v977, %v1031
    %v1096 = vsel %vm966, %v977, %v1032
    %v1097 = vsel %vm967, %v977, %v1033
    %v1098 = vsel %vm968, %v977, %v1034
    %v1099 = vsel %vm969, %v977, %v1035
    %v1100 = vsel %vm970, %v977, %v1036
    %v1101 = vsel %vm971, %v977, %v1037
    %v1102 = vsel %vm972, %v977, %v1038
    %v1103 = vsel %vm973, %v977, %v1039
    %v1104 = vsel %vm974, %v977, %v1040
    %v1105 = vsel %vm975, %v977, %v1041
    %1106 = vst [vmem:[#allocation3] sm:$0xff] %v1042
    %1107 = vst [vmem:[#allocation3 + $0x8] sm:$0xff] %v1043
    %1108 = vst [vmem:[#allocation3 + $0x10] sm:$0xff] %v1044
    %1109 = vst [vmem:[#allocation3 + $0x18] sm:$0xff] %v1045
    %1110 = vst [vmem:[#allocation3 + $0x20] sm:$0xff] %v1046
    %1111 = vst [vmem:[#allocation3 + $0x28] sm:$0xff] %v1047
    %1112 = vst [vmem:[#allocation3 + $0x30] sm:$0xff] %v1048
    %1113 = vst [vmem:[#allocation3 + $0x38] sm:$0xff] %v1049
    %1114 = vst [vmem:[#allocation3 + $0x40] sm:$0xff] %v1050
    %1115 = vst [vmem:[#allocation3 + $0x48] sm:$0xff] %v1051
    %1116 = vst [vmem:[#allocation3 + $0x50] sm:$0xff] %v1052
    %1117 = vst [vmem:[#allocation3 + $0x58] sm:$0xff] %v1053
    %1118 = vst [vmem:[#allocation3 + $0x60] sm:$0xff] %v1054
    %1119 = vst [vmem:[#allocation3 + $0x68] sm:$0xff] %v1055
    %1120 = vst [vmem:[#allocation3 + $0x70] sm:$0xff] %v1056
    %1121 = vst [vmem:[#allocation3 + $0x78] sm:$0xff] %v1057
    %1122 = vst [vmem:[#allocation3 + $0x80] sm:$0xff] %v1058
    %1123 = vst [vmem:[#allocation3 + $0x88] sm:$0xff] %v1059
    %1124 = vst [vmem:[#allocation3 + $0x90] sm:$0xff] %v1060
    %1125 = vst [vmem:[#allocation3 + $0x98] sm:$0xff] %v1061
    %1126 = vst [vmem:[#allocation3 + $0xa0] sm:$0xff] %v1062
    %1127 = vst [vmem:[#allocation3 + $0xa8] sm:$0xff] %v1063
    %1128 = vst [vmem:[#allocation3 + $0xb0] sm:$0xff] %v1064
    %1129 = vst [vmem:[#allocation3 + $0xb8] sm:$0xff] %v1065
    %1130 = vst [vmem:[#allocation3 + $0xc0] sm:$0xff] %v1066
    %1131 = vst [vmem:[#allocation3 + $0xc8] sm:$0xff] %v1067
    %1132 = vst [vmem:[#allocation3 + $0xd0] sm:$0xff] %v1068
    %1133 = vst [vmem:[#allocation3 + $0xd8] sm:$0xff] %v1069
    %1134 = vst [vmem:[#allocation3 + $0xe0] sm:$0xff] %v1070
    %1135 = vst [vmem:[#allocation3 + $0xe8] sm:$0xff] %v1071
    %1136 = vst [vmem:[#allocation3 + $0xf0] sm:$0xff] %v1072
    %1137 = vst [vmem:[#allocation3 + $0xf8] sm:$0xff] %v1073
    %1138 = vst [vmem:[#allocation3 + $0x100] sm:$0xff] %v1074
    %1139 = vst [vmem:[#allocation3 + $0x108] sm:$0xff] %v1075
    %1140 = vst [vmem:[#allocation3 + $0x110] sm:$0xff] %v1076
    %1141 = vst [vmem:[#allocation3 + $0x118] sm:$0xff] %v1077
    %1142 = vst [vmem:[#allocation3 + $0x120] sm:$0xff] %v1078
    %1143 = vst [vmem:[#allocation3 + $0x128] sm:$0xff] %v1079
    %1144 = vst [vmem:[#allocation3 + $0x130] sm:$0xff] %v1080
    %1145 = vst [vmem:[#allocation3 + $0x138] sm:$0xff] %v1081
    %1146 = vst [vmem:[#allocation3 + $0x140] sm:$0xff] %v1082
    %1147 = vst [vmem:[#allocation3 + $0x148] sm:$0xff] %v1083
    %1148 = vst [vmem:[#allocation3 + $0x150] sm:$0xff] %v1084
    %1149 = vst [vmem:[#allocation3 + $0x158] sm:$0xff] %v1085
    %1150 = vst [vmem:[#allocation3 + $0x160] sm:$0xff] %v1086
    %1151 = vst [vmem:[#allocation3 + $0x168] sm:$0xff] %v1087
    %1152 = vst [vmem:[#allocation3 + $0x170] sm:$0xff] %v1088
    %1153 = vst [vmem:[#allocation3 + $0x178] sm:$0xff] %v1089
    %1154 = vst [vmem:[#allocation3 + $0x180] sm:$0xff] %v1090
    %1155 = vst [vmem:[#allocation3 + $0x188] sm:$0xff] %v1091
    %1156 = vst [vmem:[#allocation3 + $0x190] sm:$0xff] %v1092
    %1157 = vst [vmem:[#allocation3 + $0x198] sm:$0xff] %v1093
    %1158 = vst [vmem:[#allocation3 + $0x1a0] sm:$0xff] %v1094
    %1159 = vst [vmem:[#allocation3 + $0x1a8] sm:$0xff] %v1095
    %1160 = vst [vmem:[#allocation3 + $0x1b0] sm:$0xff] %v1096
    %1161 = vst [vmem:[#allocation3 + $0x1b8] sm:$0xff] %v1097
    %1162 = vst [vmem:[#allocation3 + $0x1c0] sm:$0xff] %v1098
    %1163 = vst [vmem:[#allocation3 + $0x1c8] sm:$0xff] %v1099
    %1164 = vst [vmem:[#allocation3 + $0x1d0] sm:$0xff] %v1100
    %1165 = vst [vmem:[#allocation3 + $0x1d8] sm:$0xff] %v1101
    %1166 = vst [vmem:[#allocation3 + $0x1e0] sm:$0xff] %v1102
    %1167 = vst [vmem:[#allocation3 + $0x1e8] sm:$0xff] %v1103
    %1168 = vst [vmem:[#allocation3 + $0x1f0] sm:$0xff] %v1104
    %1169 = vst [vmem:[#allocation3 + $0x1f8] sm:$0xff] %v1105
    %v1170 = vld [vmem:[#allocation2] sm:$0xff]
    %v1171 = vld [vmem:[#allocation2 + $0x8] sm:$0xff]
    %v1172 = vld [vmem:[#allocation2 + $0x10] sm:$0xff]
    %v1173 = vld [vmem:[#allocation2 + $0x18] sm:$0xff]
    %v1174 = vld [vmem:[#allocation2 + $0x20] sm:$0xff]
    %v1175 = vld [vmem:[#allocation2 + $0x28] sm:$0xff]
    %v1176 = vld [vmem:[#allocation2 + $0x30] sm:$0xff]
    %v1177 = vld [vmem:[#allocation2 + $0x38] sm:$0xff]
    %v1178 = vld [vmem:[#allocation2 + $0x40] sm:$0xff]
    %v1179 = vld [vmem:[#allocation2 + $0x48] sm:$0xff]
    %v1180 = vld [vmem:[#allocation2 + $0x50] sm:$0xff]
    %v1181 = vld [vmem:[#allocation2 + $0x58] sm:$0xff]
    %v1182 = vld [vmem:[#allocation2 + $0x60] sm:$0xff]
    %v1183 = vld [vmem:[#allocation2 + $0x68] sm:$0xff]
    %v1184 = vld [vmem:[#allocation2 + $0x70] sm:$0xff]
    %v1185 = vld [vmem:[#allocation2 + $0x78] sm:$0xff]
    %v1186 = vld [vmem:[#allocation2 + $0x80] sm:$0xff]
    %v1187 = vld [vmem:[#allocation2 + $0x88] sm:$0xff]
    %v1188 = vld [vmem:[#allocation2 + $0x90] sm:$0xff]
    %v1189 = vld [vmem:[#allocation2 + $0x98] sm:$0xff]
    %v1190 = vld [vmem:[#allocation2 + $0xa0] sm:$0xff]
    %v1191 = vld [vmem:[#allocation2 + $0xa8] sm:$0xff]
    %v1192 = vld [vmem:[#allocation2 + $0xb0] sm:$0xff]
    %v1193 = vld [vmem:[#allocation2 + $0xb8] sm:$0xff]
    %v1194 = vld [vmem:[#allocation2 + $0xc0] sm:$0xff]
    %v1195 = vld [vmem:[#allocation2 + $0xc8] sm:$0xff]
    %v1196 = vld [vmem:[#allocation2 + $0xd0] sm:$0xff]
    %v1197 = vld [vmem:[#allocation2 + $0xd8] sm:$0xff]
    %v1198 = vld [vmem:[#allocation2 + $0xe0] sm:$0xff]
    %v1199 = vld [vmem:[#allocation2 + $0xe8] sm:$0xff]
    %v1200 = vld [vmem:[#allocation2 + $0xf0] sm:$0xff]
    %v1201 = vld [vmem:[#allocation2 + $0xf8] sm:$0xff]
    %v1202 = vld [vmem:[#allocation2 + $0x100] sm:$0xff]
    %v1203 = vld [vmem:[#allocation2 + $0x108] sm:$0xff]
    %v1204 = vld [vmem:[#allocation2 + $0x110] sm:$0xff]
    %v1205 = vld [vmem:[#allocation2 + $0x118] sm:$0xff]
    %v1206 = vld [vmem:[#allocation2 + $0x120] sm:$0xff]
    %v1207 = vld [vmem:[#allocation2 + $0x128] sm:$0xff]
    %v1208 = vld [vmem:[#allocation2 + $0x130] sm:$0xff]
    %v1209 = vld [vmem:[#allocation2 + $0x138] sm:$0xff]
    %v1210 = vld [vmem:[#allocation2 + $0x140] sm:$0xff]
    %v1211 = vld [vmem:[#allocation2 + $0x148] sm:$0xff]
    %v1212 = vld [vmem:[#allocation2 + $0x150] sm:$0xff]
    %v1213 = vld [vmem:[#allocation2 + $0x158] sm:$0xff]
    %v1214 = vld [vmem:[#allocation2 + $0x160] sm:$0xff]
    %v1215 = vld [vmem:[#allocation2 + $0x168] sm:$0xff]
    %v1216 = vld [vmem:[#allocation2 + $0x170] sm:$0xff]
    %v1217 = vld [vmem:[#allocation2 + $0x178] sm:$0xff]
    %v1218 = vld [vmem:[#allocation2 + $0x180] sm:$0xff]
    %v1219 = vld [vmem:[#allocation2 + $0x188] sm:$0xff]
    %v1220 = vld [vmem:[#allocation2 + $0x190] sm:$0xff]
    %v1221 = vld [vmem:[#allocation2 + $0x198] sm:$0xff]
    %v1222 = vld [vmem:[#allocation2 + $0x1a0] sm:$0xff]
    %v1223 = vld [vmem:[#allocation2 + $0x1a8] sm:$0xff]
    %v1224 = vld [vmem:[#allocation2 + $0x1b0] sm:$0xff]
    %v1225 = vld [vmem:[#allocation2 + $0x1b8] sm:$0xff]
    %v1226 = vld [vmem:[#allocation2 + $0x1c0] sm:$0xff]
    %v1227 = vld [vmem:[#allocation2 + $0x1c8] sm:$0xff]
    %v1228 = vld [vmem:[#allocation2 + $0x1d0] sm:$0xff]
    %v1229 = vld [vmem:[#allocation2 + $0x1d8] sm:$0xff]
    %v1230 = vld [vmem:[#allocation2 + $0x1e0] sm:$0xff]
    %v1231 = vld [vmem:[#allocation2 + $0x1e8] sm:$0xff]
    %v1232 = vld [vmem:[#allocation2 + $0x1f0] sm:$0xff]
    %v1233 = vld [vmem:[#allocation2 + $0x1f8] sm:$0xff]
    %v1234 = vsel %vm912, %v784, %v1170
    %v1235 = vsel %vm913, %v785, %v1171
    %v1236 = vsel %vm914, %v786, %v1172
    %v1237 = vsel %vm915, %v787, %v1173
    %v1238 = vsel %vm916, %v788, %v1174
    %v1239 = vsel %vm917, %v789, %v1175
    %v1240 = vsel %vm918, %v790, %v1176
    %v1241 = vsel %vm919, %v791, %v1177
    %v1242 = vsel %vm920, %v792, %v1178
    %v1243 = vsel %vm921, %v793, %v1179
    %v1244 = vsel %vm922, %v794, %v1180
    %v1245 = vsel %vm923, %v795, %v1181
    %v1246 = vsel %vm924, %v796, %v1182
    %v1247 = vsel %vm925, %v797, %v1183
    %v1248 = vsel %vm926, %v798, %v1184
    %v1249 = vsel %vm927, %v799, %v1185
    %v1250 = vsel %vm928, %v800, %v1186
    %v1251 = vsel %vm929, %v801, %v1187
    %v1252 = vsel %vm930, %v802, %v1188
    %v1253 = vsel %vm931, %v803, %v1189
    %v1254 = vsel %vm932, %v804, %v1190
    %v1255 = vsel %vm933, %v805, %v1191
    %v1256 = vsel %vm934, %v806, %v1192
    %v1257 = vsel %vm935, %v807, %v1193
    %v1258 = vsel %vm936, %v808, %v1194
    %v1259 = vsel %vm937, %v809, %v1195
    %v1260 = vsel %vm938, %v810, %v1196
    %v1261 = vsel %vm939, %v811, %v1197
    %v1262 = vsel %vm940, %v812, %v1198
    %v1263 = vsel %vm941, %v813, %v1199
    %v1264 = vsel %vm942, %v814, %v1200
    %v1265 = vsel %vm943, %v815, %v1201
    %v1266 = vsel %vm944, %v816, %v1202
    %v1267 = vsel %vm945, %v817, %v1203
    %v1268 = vsel %vm946, %v818, %v1204
    %v1269 = vsel %vm947, %v819, %v1205
    %v1270 = vsel %vm948, %v820, %v1206
    %v1271 = vsel %vm949, %v821, %v1207
    %v1272 = vsel %vm950, %v822, %v1208
    %v1273 = vsel %vm951, %v823, %v1209
    %v1274 = vsel %vm952, %v824, %v1210
    %v1275 = vsel %vm953, %v825, %v1211
    %v1276 = vsel %vm954, %v826, %v1212
    %v1277 = vsel %vm955, %v827, %v1213
    %v1278 = vsel %vm956, %v828, %v1214
    %v1279 = vsel %vm957, %v829, %v1215
    %v1280 = vsel %vm958, %v830, %v1216
    %v1281 = vsel %vm959, %v831, %v1217
    %v1282 = vsel %vm960, %v832, %v1218
    %v1283 = vsel %vm961, %v833, %v1219
    %v1284 = vsel %vm962, %v834, %v1220
    %v1285 = vsel %vm963, %v835, %v1221
    %v1286 = vsel %vm964, %v836, %v1222
    %v1287 = vsel %vm965, %v837, %v1223
    %v1288 = vsel %vm966, %v838, %v1224
    %v1289 = vsel %vm967, %v839, %v1225
    %v1290 = vsel %vm968, %v840, %v1226
    %v1291 = vsel %vm969, %v841, %v1227
    %v1292 = vsel %vm970, %v842, %v1228
    %v1293 = vsel %vm971, %v843, %v1229
    %v1294 = vsel %vm972, %v844, %v1230
    %v1295 = vsel %vm973, %v845, %v1231
    %v1296 = vsel %vm974, %v846, %v1232
    %v1297 = vsel %vm975, %v847, %v1233
    %1298 = vst [vmem:[#allocation2] sm:$0xff] %v1234
    %1299 = vst [vmem:[#allocation2 + $0x8] sm:$0xff] %v1235
    %1300 = vst [vmem:[#allocation2 + $0x10] sm:$0xff] %v1236
    %1301 = vst [vmem:[#allocation2 + $0x18] sm:$0xff] %v1237
    %1302 = vst [vmem:[#allocation2 + $0x20] sm:$0xff] %v1238
    %1303 = vst [vmem:[#allocation2 + $0x28] sm:$0xff] %v1239
    %1304 = vst [vmem:[#allocation2 + $0x30] sm:$0xff] %v1240
    %1305 = vst [vmem:[#allocation2 + $0x38] sm:$0xff] %v1241
    %1306 = vst [vmem:[#allocation2 + $0x40] sm:$0xff] %v1242
    %1307 = vst [vmem:[#allocation2 + $0x48] sm:$0xff] %v1243
    %1308 = vst [vmem:[#allocation2 + $0x50] sm:$0xff] %v1244
    %1309 = vst [vmem:[#allocation2 + $0x58] sm:$0xff] %v1245
    %1310 = vst [vmem:[#allocation2 + $0x60] sm:$0xff] %v1246
    %1311 = vst [vmem:[#allocation2 + $0x68] sm:$0xff] %v1247
    %1312 = vst [vmem:[#allocation2 + $0x70] sm:$0xff] %v1248
    %1313 = vst [vmem:[#allocation2 + $0x78] sm:$0xff] %v1249
    %1314 = vst [vmem:[#allocation2 + $0x80] sm:$0xff] %v1250
    %1315 = vst [vmem:[#allocation2 + $0x88] sm:$0xff] %v1251
    %1316 = vst [vmem:[#allocation2 + $0x90] sm:$0xff] %v1252
    %1317 = vst [vmem:[#allocation2 + $0x98] sm:$0xff] %v1253
    %1318 = vst [vmem:[#allocation2 + $0xa0] sm:$0xff] %v1254
    %1319 = vst [vmem:[#allocation2 + $0xa8] sm:$0xff] %v1255
    %1320 = vst [vmem:[#allocation2 + $0xb0] sm:$0xff] %v1256
    %1321 = vst [vmem:[#allocation2 + $0xb8] sm:$0xff] %v1257
    %1322 = vst [vmem:[#allocation2 + $0xc0] sm:$0xff] %v1258
    %1323 = vst [vmem:[#allocation2 + $0xc8] sm:$0xff] %v1259
    %1324 = vst [vmem:[#allocation2 + $0xd0] sm:$0xff] %v1260
    %1325 = vst [vmem:[#allocation2 + $0xd8] sm:$0xff] %v1261
    %1326 = vst [vmem:[#allocation2 + $0xe0] sm:$0xff] %v1262
    %1327 = vst [vmem:[#allocation2 + $0xe8] sm:$0xff] %v1263
    %1328 = vst [vmem:[#allocation2 + $0xf0] sm:$0xff] %v1264
    %1329 = vst [vmem:[#allocation2 + $0xf8] sm:$0xff] %v1265
    %1330 = vst [vmem:[#allocation2 + $0x100] sm:$0xff] %v1266
    %1331 = vst [vmem:[#allocation2 + $0x108] sm:$0xff] %v1267
    %1332 = vst [vmem:[#allocation2 + $0x110] sm:$0xff] %v1268
    %1333 = vst [vmem:[#allocation2 + $0x118] sm:$0xff] %v1269
    %1334 = vst [vmem:[#allocation2 + $0x120] sm:$0xff] %v1270
    %1335 = vst [vmem:[#allocation2 + $0x128] sm:$0xff] %v1271
    %1336 = vst [vmem:[#allocation2 + $0x130] sm:$0xff] %v1272
    %1337 = vst [vmem:[#allocation2 + $0x138] sm:$0xff] %v1273
    %1338 = vst [vmem:[#allocation2 + $0x140] sm:$0xff] %v1274
    %1339 = vst [vmem:[#allocation2 + $0x148] sm:$0xff] %v1275
    %1340 = vst [vmem:[#allocation2 + $0x150] sm:$0xff] %v1276
    %1341 = vst [vmem:[#allocation2 + $0x158] sm:$0xff] %v1277
    %1342 = vst [vmem:[#allocation2 + $0x160] sm:$0xff] %v1278
    %1343 = vst [vmem:[#allocation2 + $0x168] sm:$0xff] %v1279
    %1344 = vst [vmem:[#allocation2 + $0x170] sm:$0xff] %v1280
    %1345 = vst [vmem:[#allocation2 + $0x178] sm:$0xff] %v1281
    %1346 = vst [vmem:[#allocation2 + $0x180] sm:$0xff] %v1282
    %1347 = vst [vmem:[#allocation2 + $0x188] sm:$0xff] %v1283
    %1348 = vst [vmem:[#allocation2 + $0x190] sm:$0xff] %v1284
    %1349 = vst [vmem:[#allocation2 + $0x198] sm:$0xff] %v1285
    %1350 = vst [vmem:[#allocation2 + $0x1a0] sm:$0xff] %v1286
    %1351 = vst [vmem:[#allocation2 + $0x1a8] sm:$0xff] %v1287
    %1352 = vst [vmem:[#allocation2 + $0x1b0] sm:$0xff] %v1288
    %1353 = vst [vmem:[#allocation2 + $0x1b8] sm:$0xff] %v1289
    %1354 = vst [vmem:[#allocation2 + $0x1c0] sm:$0xff] %v1290
    %1355 = vst [vmem:[#allocation2 + $0x1c8] sm:$0xff] %v1291
    %1356 = vst [vmem:[#allocation2 + $0x1d0] sm:$0xff] %v1292
    %1357 = vst [vmem:[#allocation2 + $0x1d8] sm:$0xff] %v1293
    %1358 = vst [vmem:[#allocation2 + $0x1e0] sm:$0xff] %v1294
    %1359 = vst [vmem:[#allocation2 + $0x1e8] sm:$0xff] %v1295
    %1360 = vst [vmem:[#allocation2 + $0x1f0] sm:$0xff] %v1296
    %1361 = vst [vmem:[#allocation2 + $0x1f8] sm:$0xff] %v1297
    // Predicated region
    $region18: #{tpu_custom_call.1} parent=1 // pred_check
      %p1362 = pneg %p16
    $region19: #{tpu_custom_call.1} parent=1 // pred_check_branch
      %1364 = sbr.rel (%p1362) target = $region21
    $region20: #{tpu_custom_call.1} parent=1 // pred_region
      %v1365 = vld [vmem:[#allocation2] sm:$0xff]
      %v1366 = vld [vmem:[#allocation2 + $0x8] sm:$0xff]
      %v1367 = vld [vmem:[#allocation2 + $0x10] sm:$0xff]
      %v1368 = vld [vmem:[#allocation2 + $0x18] sm:$0xff]
      %v1369 = vld [vmem:[#allocation2 + $0x20] sm:$0xff]
      %v1370 = vld [vmem:[#allocation2 + $0x28] sm:$0xff]
      %v1371 = vld [vmem:[#allocation2 + $0x30] sm:$0xff]
      %v1372 = vld [vmem:[#allocation2 + $0x38] sm:$0xff]
      %v1373 = vld [vmem:[#allocation2 + $0x40] sm:$0xff]
      %v1374 = vld [vmem:[#allocation2 + $0x48] sm:$0xff]
      %v1375 = vld [vmem:[#allocation2 + $0x50] sm:$0xff]
      %v1376 = vld [vmem:[#allocation2 + $0x58] sm:$0xff]
      %v1377 = vld [vmem:[#allocation2 + $0x60] sm:$0xff]
      %v1378 = vld [vmem:[#allocation2 + $0x68] sm:$0xff]
      %v1379 = vld [vmem:[#allocation2 + $0x70] sm:$0xff]
      %v1380 = vld [vmem:[#allocation2 + $0x78] sm:$0xff]
      %v1381 = vld [vmem:[#allocation2 + $0x80] sm:$0xff]
      %v1382 = vld [vmem:[#allocation2 + $0x88] sm:$0xff]
      %v1383 = vld [vmem:[#allocation2 + $0x90] sm:$0xff]
      %v1384 = vld [vmem:[#allocation2 + $0x98] sm:$0xff]
      %v1385 = vld [vmem:[#allocation2 + $0xa0] sm:$0xff]
      %v1386 = vld [vmem:[#allocation2 + $0xa8] sm:$0xff]
      %v1387 = vld [vmem:[#allocation2 + $0xb0] sm:$0xff]
      %v1388 = vld [vmem:[#allocation2 + $0xb8] sm:$0xff]
      %v1389 = vld [vmem:[#allocation2 + $0xc0] sm:$0xff]
      %v1390 = vld [vmem:[#allocation2 + $0xc8] sm:$0xff]
      %v1391 = vld [vmem:[#allocation2 + $0xd0] sm:$0xff]
      %v1392 = vld [vmem:[#allocation2 + $0xd8] sm:$0xff]
      %v1393 = vld [vmem:[#allocation2 + $0xe0] sm:$0xff]
      %v1394 = vld [vmem:[#allocation2 + $0xe8] sm:$0xff]
      %v1395 = vld [vmem:[#allocation2 + $0xf0] sm:$0xff]
      %v1396 = vld [vmem:[#allocation2 + $0xf8] sm:$0xff]
      %v1397 = vld [vmem:[#allocation2 + $0x100] sm:$0xff]
      %v1398 = vld [vmem:[#allocation2 + $0x108] sm:$0xff]
      %v1399 = vld [vmem:[#allocation2 + $0x110] sm:$0xff]
      %v1400 = vld [vmem:[#allocation2 + $0x118] sm:$0xff]
      %v1401 = vld [vmem:[#allocation2 + $0x120] sm:$0xff]
      %v1402 = vld [vmem:[#allocation2 + $0x128] sm:$0xff]
      %v1403 = vld [vmem:[#allocation2 + $0x130] sm:$0xff]
      %v1404 = vld [vmem:[#allocation2 + $0x138] sm:$0xff]
      %v1405 = vld [vmem:[#allocation2 + $0x140] sm:$0xff]
      %v1406 = vld [vmem:[#allocation2 + $0x148] sm:$0xff]
      %v1407 = vld [vmem:[#allocation2 + $0x150] sm:$0xff]
      %v1408 = vld [vmem:[#allocation2 + $0x158] sm:$0xff]
      %v1409 = vld [vmem:[#allocation2 + $0x160] sm:$0xff]
      %v1410 = vld [vmem:[#allocation2 + $0x168] sm:$0xff]
      %v1411 = vld [vmem:[#allocation2 + $0x170] sm:$0xff]
      %v1412 = vld [vmem:[#allocation2 + $0x178] sm:$0xff]
      %v1413 = vld [vmem:[#allocation2 + $0x180] sm:$0xff]
      %v1414 = vld [vmem:[#allocation2 + $0x188] sm:$0xff]
      %v1415 = vld [vmem:[#allocation2 + $0x190] sm:$0xff]
      %v1416 = vld [vmem:[#allocation2 + $0x198] sm:$0xff]
      %v1417 = vld [vmem:[#allocation2 + $0x1a0] sm:$0xff]
      %v1418 = vld [vmem:[#allocation2 + $0x1a8] sm:$0xff]
      %v1419 = vld [vmem:[#allocation2 + $0x1b0] sm:$0xff]
      %v1420 = vld [vmem:[#allocation2 + $0x1b8] sm:$0xff]
      %v1421 = vld [vmem:[#allocation2 + $0x1c0] sm:$0xff]
      %v1422 = vld [vmem:[#allocation2 + $0x1c8] sm:$0xff]
      %v1423 = vld [vmem:[#allocation2 + $0x1d0] sm:$0xff]
      %v1424 = vld [vmem:[#allocation2 + $0x1d8] sm:$0xff]
      %v1425 = vld [vmem:[#allocation2 + $0x1e0] sm:$0xff]
      %v1426 = vld [vmem:[#allocation2 + $0x1e8] sm:$0xff]
      %v1427 = vld [vmem:[#allocation2 + $0x1f0] sm:$0xff]
      %v1428 = vld [vmem:[#allocation2 + $0x1f8] sm:$0xff]
      %v1429 = vld [vmem:[#allocation3] sm:$0xff]
      %v1430 = vld [vmem:[#allocation3 + $0x8] sm:$0xff]
      %v1431 = vld [vmem:[#allocation3 + $0x10] sm:$0xff]
      %v1432 = vld [vmem:[#allocation3 + $0x18] sm:$0xff]
      %v1433 = vld [vmem:[#allocation3 + $0x20] sm:$0xff]
      %v1434 = vld [vmem:[#allocation3 + $0x28] sm:$0xff]
      %v1435 = vld [vmem:[#allocation3 + $0x30] sm:$0xff]
      %v1436 = vld [vmem:[#allocation3 + $0x38] sm:$0xff]
      %v1437 = vld [vmem:[#allocation3 + $0x40] sm:$0xff]
      %v1438 = vld [vmem:[#allocation3 + $0x48] sm:$0xff]
      %v1439 = vld [vmem:[#allocation3 + $0x50] sm:$0xff]
      %v1440 = vld [vmem:[#allocation3 + $0x58] sm:$0xff]
      %v1441 = vld [vmem:[#allocation3 + $0x60] sm:$0xff]
      %v1442 = vld [vmem:[#allocation3 + $0x68] sm:$0xff]
      %v1443 = vld [vmem:[#allocation3 + $0x70] sm:$0xff]
      %v1444 = vld [vmem:[#allocation3 + $0x78] sm:$0xff]
      %v1445 = vld [vmem:[#allocation3 + $0x80] sm:$0xff]
      %v1446 = vld [vmem:[#allocation3 + $0x88] sm:$0xff]
      %v1447 = vld [vmem:[#allocation3 + $0x90] sm:$0xff]
      %v1448 = vld [vmem:[#allocation3 + $0x98] sm:$0xff]
      %v1449 = vld [vmem:[#allocation3 + $0xa0] sm:$0xff]
      %v1450 = vld [vmem:[#allocation3 + $0xa8] sm:$0xff]
      %v1451 = vld [vmem:[#allocation3 + $0xb0] sm:$0xff]
      %v1452 = vld [vmem:[#allocation3 + $0xb8] sm:$0xff]
      %v1453 = vld [vmem:[#allocation3 + $0xc0] sm:$0xff]
      %v1454 = vld [vmem:[#allocation3 + $0xc8] sm:$0xff]
      %v1455 = vld [vmem:[#allocation3 + $0xd0] sm:$0xff]
      %v1456 = vld [vmem:[#allocation3 + $0xd8] sm:$0xff]
      %v1457 = vld [vmem:[#allocation3 + $0xe0] sm:$0xff]
      %v1458 = vld [vmem:[#allocation3 + $0xe8] sm:$0xff]
      %v1459 = vld [vmem:[#allocation3 + $0xf0] sm:$0xff]
      %v1460 = vld [vmem:[#allocation3 + $0xf8] sm:$0xff]
      %v1461 = vld [vmem:[#allocation3 + $0x100] sm:$0xff]
      %v1462 = vld [vmem:[#allocation3 + $0x108] sm:$0xff]
      %v1463 = vld [vmem:[#allocation3 + $0x110] sm:$0xff]
      %v1464 = vld [vmem:[#allocation3 + $0x118] sm:$0xff]
      %v1465 = vld [vmem:[#allocation3 + $0x120] sm:$0xff]
      %v1466 = vld [vmem:[#allocation3 + $0x128] sm:$0xff]
      %v1467 = vld [vmem:[#allocation3 + $0x130] sm:$0xff]
      %v1468 = vld [vmem:[#allocation3 + $0x138] sm:$0xff]
      %v1469 = vld [vmem:[#allocation3 + $0x140] sm:$0xff]
      %v1470 = vld [vmem:[#allocation3 + $0x148] sm:$0xff]
      %v1471 = vld [vmem:[#allocation3 + $0x150] sm:$0xff]
      %v1472 = vld [vmem:[#allocation3 + $0x158] sm:$0xff]
      %v1473 = vld [vmem:[#allocation3 + $0x160] sm:$0xff]
      %v1474 = vld [vmem:[#allocation3 + $0x168] sm:$0xff]
      %v1475 = vld [vmem:[#allocation3 + $0x170] sm:$0xff]
      %v1476 = vld [vmem:[#allocation3 + $0x178] sm:$0xff]
      %v1477 = vld [vmem:[#allocation3 + $0x180] sm:$0xff]
      %v1478 = vld [vmem:[#allocation3 + $0x188] sm:$0xff]
      %v1479 = vld [vmem:[#allocation3 + $0x190] sm:$0xff]
      %v1480 = vld [vmem:[#allocation3 + $0x198] sm:$0xff]
      %v1481 = vld [vmem:[#allocation3 + $0x1a0] sm:$0xff]
      %v1482 = vld [vmem:[#allocation3 + $0x1a8] sm:$0xff]
      %v1483 = vld [vmem:[#allocation3 + $0x1b0] sm:$0xff]
      %v1484 = vld [vmem:[#allocation3 + $0x1b8] sm:$0xff]
      %v1485 = vld [vmem:[#allocation3 + $0x1c0] sm:$0xff]
      %v1486 = vld [vmem:[#allocation3 + $0x1c8] sm:$0xff]
      %v1487 = vld [vmem:[#allocation3 + $0x1d0] sm:$0xff]
      %v1488 = vld [vmem:[#allocation3 + $0x1d8] sm:$0xff]
      %v1489 = vld [vmem:[#allocation3 + $0x1e0] sm:$0xff]
      %v1490 = vld [vmem:[#allocation3 + $0x1e8] sm:$0xff]
      %v1491 = vld [vmem:[#allocation3 + $0x1f0] sm:$0xff]
      %v1492 = vld [vmem:[#allocation3 + $0x1f8] sm:$0xff]
      %1493 = vmin.xlane.f32.xlu0 %v1365
      %v1494 = vpop.xlane.xlu0 %1493
      %1495 = vmin.xlane.f32.xlu0 %v1366
      %v1496 = vpop.xlane.xlu0 %1495
      %1497 = vmin.xlane.f32.xlu0 %v1367
      %v1498 = vpop.xlane.xlu0 %1497
      %1499 = vmin.xlane.f32.xlu0 %v1368
      %v1500 = vpop.xlane.xlu0 %1499
      %1501 = vmin.xlane.f32.xlu0 %v1369
      %v1502 = vpop.xlane.xlu0 %1501
      %1503 = vmin.xlane.f32.xlu0 %v1370
      %v1504 = vpop.xlane.xlu0 %1503
      %1505 = vmin.xlane.f32.xlu0 %v1371
      %v1506 = vpop.xlane.xlu0 %1505
      %1507 = vmin.xlane.f32.xlu0 %v1372
      %v1508 = vpop.xlane.xlu0 %1507
      %1509 = vmin.xlane.f32.xlu0 %v1373
      %v1510 = vpop.xlane.xlu0 %1509
      %1511 = vmin.xlane.f32.xlu0 %v1374
      %v1512 = vpop.xlane.xlu0 %1511
      %1513 = vmin.xlane.f32.xlu0 %v1375
      %v1514 = vpop.xlane.xlu0 %1513
      %1515 = vmin.xlane.f32.xlu0 %v1376
      %v1516 = vpop.xlane.xlu0 %1515
      %1517 = vmin.xlane.f32.xlu0 %v1377
      %v1518 = vpop.xlane.xlu0 %1517
      %1519 = vmin.xlane.f32.xlu0 %v1378
      %v1520 = vpop.xlane.xlu0 %1519
      %1521 = vmin.xlane.f32.xlu0 %v1379
      %v1522 = vpop.xlane.xlu0 %1521
      %1523 = vmin.xlane.f32.xlu0 %v1380
      %v1524 = vpop.xlane.xlu0 %1523
      %1525 = vmin.xlane.f32.xlu0 %v1381
      %v1526 = vpop.xlane.xlu0 %1525
      %1527 = vmin.xlane.f32.xlu0 %v1382
      %v1528 = vpop.xlane.xlu0 %1527
      %1529 = vmin.xlane.f32.xlu0 %v1383
      %v1530 = vpop.xlane.xlu0 %1529
      %1531 = vmin.xlane.f32.xlu0 %v1384
      %v1532 = vpop.xlane.xlu0 %1531
      %1533 = vmin.xlane.f32.xlu0 %v1385
      %v1534 = vpop.xlane.xlu0 %1533
      %1535 = vmin.xlane.f32.xlu0 %v1386
      %v1536 = vpop.xlane.xlu0 %1535
      %1537 = vmin.xlane.f32.xlu0 %v1387
      %v1538 = vpop.xlane.xlu0 %1537
      %1539 = vmin.xlane.f32.xlu0 %v1388
      %v1540 = vpop.xlane.xlu0 %1539
      %1541 = vmin.xlane.f32.xlu0 %v1389
      %v1542 = vpop.xlane.xlu0 %1541
      %1543 = vmin.xlane.f32.xlu0 %v1390
      %v1544 = vpop.xlane.xlu0 %1543
      %1545 = vmin.xlane.f32.xlu0 %v1391
      %v1546 = vpop.xlane.xlu0 %1545
      %1547 = vmin.xlane.f32.xlu0 %v1392
      %v1548 = vpop.xlane.xlu0 %1547
      %1549 = vmin.xlane.f32.xlu0 %v1393
      %v1550 = vpop.xlane.xlu0 %1549
      %1551 = vmin.xlane.f32.xlu0 %v1394
      %v1552 = vpop.xlane.xlu0 %1551
      %1553 = vmin.xlane.f32.xlu0 %v1395
      %v1554 = vpop.xlane.xlu0 %1553
      %1555 = vmin.xlane.f32.xlu0 %v1396
      %v1556 = vpop.xlane.xlu0 %1555
      %1557 = vmin.xlane.f32.xlu0 %v1397
      %v1558 = vpop.xlane.xlu0 %1557
      %1559 = vmin.xlane.f32.xlu0 %v1398
      %v1560 = vpop.xlane.xlu0 %1559
      %1561 = vmin.xlane.f32.xlu0 %v1399
      %v1562 = vpop.xlane.xlu0 %1561
      %1563 = vmin.xlane.f32.xlu0 %v1400
      %v1564 = vpop.xlane.xlu0 %1563
      %1565 = vmin.xlane.f32.xlu0 %v1401
      %v1566 = vpop.xlane.xlu0 %1565
      %1567 = vmin.xlane.f32.xlu0 %v1402
      %v1568 = vpop.xlane.xlu0 %1567
      %1569 = vmin.xlane.f32.xlu0 %v1403
      %v1570 = vpop.xlane.xlu0 %1569
      %1571 = vmin.xlane.f32.xlu0 %v1404
      %v1572 = vpop.xlane.xlu0 %1571
      %1573 = vmin.xlane.f32.xlu0 %v1405
      %v1574 = vpop.xlane.xlu0 %1573
      %1575 = vmin.xlane.f32.xlu0 %v1406
      %v1576 = vpop.xlane.xlu0 %1575
      %1577 = vmin.xlane.f32.xlu0 %v1407
      %v1578 = vpop.xlane.xlu0 %1577
      %1579 = vmin.xlane.f32.xlu0 %v1408
      %v1580 = vpop.xlane.xlu0 %1579
      %1581 = vmin.xlane.f32.xlu0 %v1409
      %v1582 = vpop.xlane.xlu0 %1581
      %1583 = vmin.xlane.f32.xlu0 %v1410
      %v1584 = vpop.xlane.xlu0 %1583
      %1585 = vmin.xlane.f32.xlu0 %v1411
      %v1586 = vpop.xlane.xlu0 %1585
      %1587 = vmin.xlane.f32.xlu0 %v1412
      %v1588 = vpop.xlane.xlu0 %1587
      %1589 = vmin.xlane.f32.xlu0 %v1413
      %v1590 = vpop.xlane.xlu0 %1589
      %1591 = vmin.xlane.f32.xlu0 %v1414
      %v1592 = vpop.xlane.xlu0 %1591
      %1593 = vmin.xlane.f32.xlu0 %v1415
      %v1594 = vpop.xlane.xlu0 %1593
      %1595 = vmin.xlane.f32.xlu0 %v1416
      %v1596 = vpop.xlane.xlu0 %1595
      %1597 = vmin.xlane.f32.xlu0 %v1417
      %v1598 = vpop.xlane.xlu0 %1597
      %1599 = vmin.xlane.f32.xlu0 %v1418
      %v1600 = vpop.xlane.xlu0 %1599
      %1601 = vmin.xlane.f32.xlu0 %v1419
      %v1602 = vpop.xlane.xlu0 %1601
      %1603 = vmin.xlane.f32.xlu0 %v1420
      %v1604 = vpop.xlane.xlu0 %1603
      %1605 = vmin.xlane.f32.xlu0 %v1421
      %v1606 = vpop.xlane.xlu0 %1605
      %1607 = vmin.xlane.f32.xlu0 %v1422
      %v1608 = vpop.xlane.xlu0 %1607
      %1609 = vmin.xlane.f32.xlu0 %v1423
      %v1610 = vpop.xlane.xlu0 %1609
      %1611 = vmin.xlane.f32.xlu0 %v1424
      %v1612 = vpop.xlane.xlu0 %1611
      %1613 = vmin.xlane.f32.xlu0 %v1425
      %v1614 = vpop.xlane.xlu0 %1613
      %1615 = vmin.xlane.f32.xlu0 %v1426
      %v1616 = vpop.xlane.xlu0 %1615
      %1617 = vmin.xlane.f32.xlu0 %v1427
      %v1618 = vpop.xlane.xlu0 %1617
      %1619 = vmin.xlane.f32.xlu0 %v1428
      %v1620 = vpop.xlane.xlu0 %1619
      %vm1621 = vcmp.eq.f32.partialorder %v1365, %v1494
      %vm1622 = vcmp.eq.f32.partialorder %v1366, %v1496
      %vm1623 = vcmp.eq.f32.partialorder %v1367, %v1498
      %vm1624 = vcmp.eq.f32.partialorder %v1368, %v1500
      %vm1625 = vcmp.eq.f32.partialorder %v1369, %v1502
      %vm1626 = vcmp.eq.f32.partialorder %v1370, %v1504
      %vm1627 = vcmp.eq.f32.partialorder %v1371, %v1506
      %vm1628 = vcmp.eq.f32.partialorder %v1372, %v1508
      %vm1629 = vcmp.eq.f32.partialorder %v1373, %v1510
      %vm1630 = vcmp.eq.f32.partialorder %v1374, %v1512
      %vm1631 = vcmp.eq.f32.partialorder %v1375, %v1514
      %vm1632 = vcmp.eq.f32.partialorder %v1376, %v1516
      %vm1633 = vcmp.eq.f32.partialorder %v1377, %v1518
      %vm1634 = vcmp.eq.f32.partialorder %v1378, %v1520
      %vm1635 = vcmp.eq.f32.partialorder %v1379, %v1522
      %vm1636 = vcmp.eq.f32.partialorder %v1380, %v1524
      %vm1637 = vcmp.eq.f32.partialorder %v1381, %v1526
      %vm1638 = vcmp.eq.f32.partialorder %v1382, %v1528
      %vm1639 = vcmp.eq.f32.partialorder %v1383, %v1530
      %vm1640 = vcmp.eq.f32.partialorder %v1384, %v1532
      %vm1641 = vcmp.eq.f32.partialorder %v1385, %v1534
      %vm1642 = vcmp.eq.f32.partialorder %v1386, %v1536
      %vm1643 = vcmp.eq.f32.partialorder %v1387, %v1538
      %vm1644 = vcmp.eq.f32.partialorder %v1388, %v1540
      %vm1645 = vcmp.eq.f32.partialorder %v1389, %v1542
      %vm1646 = vcmp.eq.f32.partialorder %v1390, %v1544
      %vm1647 = vcmp.eq.f32.partialorder %v1391, %v1546
      %vm1648 = vcmp.eq.f32.partialorder %v1392, %v1548
      %vm1649 = vcmp.eq.f32.partialorder %v1393, %v1550
      %vm1650 = vcmp.eq.f32.partialorder %v1394, %v1552
      %vm1651 = vcmp.eq.f32.partialorder %v1395, %v1554
      %vm1652 = vcmp.eq.f32.partialorder %v1396, %v1556
      %vm1653 = vcmp.eq.f32.partialorder %v1397, %v1558
      %vm1654 = vcmp.eq.f32.partialorder %v1398, %v1560
      %vm1655 = vcmp.eq.f32.partialorder %v1399, %v1562
      %vm1656 = vcmp.eq.f32.partialorder %v1400, %v1564
      %vm1657 = vcmp.eq.f32.partialorder %v1401, %v1566
      %vm1658 = vcmp.eq.f32.partialorder %v1402, %v1568
      %vm1659 = vcmp.eq.f32.partialorder %v1403, %v1570
      %vm1660 = vcmp.eq.f32.partialorder %v1404, %v1572
      %vm1661 = vcmp.eq.f32.partialorder %v1405, %v1574
      %vm1662 = vcmp.eq.f32.partialorder %v1406, %v1576
      %vm1663 = vcmp.eq.f32.partialorder %v1407, %v1578
      %vm1664 = vcmp.eq.f32.partialorder %v1408, %v1580
      %vm1665 = vcmp.eq.f32.partialorder %v1409, %v1582
      %vm1666 = vcmp.eq.f32.partialorder %v1410, %v1584
      %vm1667 = vcmp.eq.f32.partialorder %v1411, %v1586
      %vm1668 = vcmp.eq.f32.partialorder %v1412, %v1588
      %vm1669 = vcmp.eq.f32.partialorder %v1413, %v1590
      %vm1670 = vcmp.eq.f32.partialorder %v1414, %v1592
      %vm1671 = vcmp.eq.f32.partialorder %v1415, %v1594
      %vm1672 = vcmp.eq.f32.partialorder %v1416, %v1596
      %vm1673 = vcmp.eq.f32.partialorder %v1417, %v1598
      %vm1674 = vcmp.eq.f32.partialorder %v1418, %v1600
      %vm1675 = vcmp.eq.f32.partialorder %v1419, %v1602
      %vm1676 = vcmp.eq.f32.partialorder %v1420, %v1604
      %vm1677 = vcmp.eq.f32.partialorder %v1421, %v1606
      %vm1678 = vcmp.eq.f32.partialorder %v1422, %v1608
      %vm1679 = vcmp.eq.f32.partialorder %v1423, %v1610
      %vm1680 = vcmp.eq.f32.partialorder %v1424, %v1612
      %vm1681 = vcmp.eq.f32.partialorder %v1425, %v1614
      %vm1682 = vcmp.eq.f32.partialorder %v1426, %v1616
      %vm1683 = vcmp.eq.f32.partialorder %v1427, %v1618
      %vm1684 = vcmp.eq.f32.partialorder %v1428, %v1620
      %v1685 = vsel %vm1621, %v1429, 2147483647
      %v1686 = vsel %vm1622, %v1430, 2147483647
      %v1687 = vsel %vm1623, %v1431, 2147483647
      %v1688 = vsel %vm1624, %v1432, 2147483647
      %v1689 = vsel %vm1625, %v1433, 2147483647
      %v1690 = vsel %vm1626, %v1434, 2147483647
      %v1691 = vsel %vm1627, %v1435, 2147483647
      %v1692 = vsel %vm1628, %v1436, 2147483647
      %v1693 = vsel %vm1629, %v1437, 2147483647
      %v1694 = vsel %vm1630, %v1438, 2147483647
      %v1695 = vsel %vm1631, %v1439, 2147483647
      %v1696 = vsel %vm1632, %v1440, 2147483647
      %v1697 = vsel %vm1633, %v1441, 2147483647
      %v1698 = vsel %vm1634, %v1442, 2147483647
      %v1699 = vsel %vm1635, %v1443, 2147483647
      %v1700 = vsel %vm1636, %v1444, 2147483647
      %v1701 = vsel %vm1637, %v1445, 2147483647
      %v1702 = vsel %vm1638, %v1446, 2147483647
      %v1703 = vsel %vm1639, %v1447, 2147483647
      %v1704 = vsel %vm1640, %v1448, 2147483647
      %v1705 = vsel %vm1641, %v1449, 2147483647
      %v1706 = vsel %vm1642, %v1450, 2147483647
      %v1707 = vsel %vm1643, %v1451, 2147483647
      %v1708 = vsel %vm1644, %v1452, 2147483647
      %v1709 = vsel %vm1645, %v1453, 2147483647
      %v1710 = vsel %vm1646, %v1454, 2147483647
      %v1711 = vsel %vm1647, %v1455, 2147483647
      %v1712 = vsel %vm1648, %v1456, 2147483647
      %v1713 = vsel %vm1649, %v1457, 2147483647
      %v1714 = vsel %vm1650, %v1458, 2147483647
      %v1715 = vsel %vm1651, %v1459, 2147483647
      %v1716 = vsel %vm1652, %v1460, 2147483647
      %v1717 = vsel %vm1653, %v1461, 2147483647
      %v1718 = vsel %vm1654, %v1462, 2147483647
      %v1719 = vsel %vm1655, %v1463, 2147483647
      %v1720 = vsel %vm1656, %v1464, 2147483647
      %v1721 = vsel %vm1657, %v1465, 2147483647
      %v1722 = vsel %vm1658, %v1466, 2147483647
      %v1723 = vsel %vm1659, %v1467, 2147483647
      %v1724 = vsel %vm1660, %v1468, 2147483647
      %v1725 = vsel %vm1661, %v1469, 2147483647
      %v1726 = vsel %vm1662, %v1470, 2147483647
      %v1727 = vsel %vm1663, %v1471, 2147483647
      %v1728 = vsel %vm1664, %v1472, 2147483647
      %v1729 = vsel %vm1665, %v1473, 2147483647
      %v1730 = vsel %vm1666, %v1474, 2147483647
      %v1731 = vsel %vm1667, %v1475, 2147483647
      %v1732 = vsel %vm1668, %v1476, 2147483647
      %v1733 = vsel %vm1669, %v1477, 2147483647
      %v1734 = vsel %vm1670, %v1478, 2147483647
      %v1735 = vsel %vm1671, %v1479, 2147483647
      %v1736 = vsel %vm1672, %v1480, 2147483647
      %v1737 = vsel %vm1673, %v1481, 2147483647
      %v1738 = vsel %vm1674, %v1482, 2147483647
      %v1739 = vsel %vm1675, %v1483, 2147483647
      %v1740 = vsel %vm1676, %v1484, 2147483647
      %v1741 = vsel %vm1677, %v1485, 2147483647
      %v1742 = vsel %vm1678, %v1486, 2147483647
      %v1743 = vsel %vm1679, %v1487, 2147483647
      %v1744 = vsel %vm1680, %v1488, 2147483647
      %v1745 = vsel %vm1681, %v1489, 2147483647
      %v1746 = vsel %vm1682, %v1490, 2147483647
      %v1747 = vsel %vm1683, %v1491, 2147483647
      %v1748 = vsel %vm1684, %v1492, 2147483647
      %v1749 = vand.u32 %v1685, 65535
      %v1750 = vshra.s32 %v1685, 16
      %v1751 = vcvt.s32.f32 %v1749
      %v1752 = vcvt.s32.f32 %v1750
      %1753 = vmin.xlane.f32.xlu0 %v1752
      %v1754 = vpop.xlane.xlu0 %1753
      %vm1755 = vcmp.eq.f32.partialorder %v1752, %v1754
      %v1756 = vsel %vm1755, %v1751, inf
      %1757 = vmin.xlane.f32.xlu0 %v1756
      %v1758 = vpop.xlane.xlu0 %1757
      %v1759 = vcvt.f32.s32 %v1758
      %v1760 = vcvt.f32.s32 %v1754
      %v1761 = vshll.u32 %v1760, 16
      %v1762 = vadd.s32 %v1761, %v1759
      %v1763 = vand.u32 %v1686, 65535
      %v1764 = vshra.s32 %v1686, 16
      %v1765 = vcvt.s32.f32 %v1763
      %v1766 = vcvt.s32.f32 %v1764
      %1767 = vmin.xlane.f32.xlu0 %v1766
      %v1768 = vpop.xlane.xlu0 %1767
      %vm1769 = vcmp.eq.f32.partialorder %v1766, %v1768
      %v1770 = vsel %vm1769, %v1765, inf
      %1771 = vmin.xlane.f32.xlu0 %v1770
      %v1772 = vpop.xlane.xlu0 %1771
      %v1773 = vcvt.f32.s32 %v1772
      %v1774 = vcvt.f32.s32 %v1768
      %v1775 = vshll.u32 %v1774, 16
      %v1776 = vadd.s32 %v1775, %v1773
      %v1777 = vand.u32 %v1687, 65535
      %v1778 = vshra.s32 %v1687, 16
      %v1779 = vcvt.s32.f32 %v1777
      %v1780 = vcvt.s32.f32 %v1778
      %1781 = vmin.xlane.f32.xlu0 %v1780
      %v1782 = vpop.xlane.xlu0 %1781
      %vm1783 = vcmp.eq.f32.partialorder %v1780, %v1782
      %v1784 = vsel %vm1783, %v1779, inf
      %1785 = vmin.xlane.f32.xlu0 %v1784
      %v1786 = vpop.xlane.xlu0 %1785
      %v1787 = vcvt.f32.s32 %v1786
      %v1788 = vcvt.f32.s32 %v1782
      %v1789 = vshll.u32 %v1788, 16
      %v1790 = vadd.s32 %v1789, %v1787
      %v1791 = vand.u32 %v1688, 65535
      %v1792 = vshra.s32 %v1688, 16
      %v1793 = vcvt.s32.f32 %v1791
      %v1794 = vcvt.s32.f32 %v1792
      %1795 = vmin.xlane.f32.xlu0 %v1794
      %v1796 = vpop.xlane.xlu0 %1795
      %vm1797 = vcmp.eq.f32.partialorder %v1794, %v1796
      %v1798 = vsel %vm1797, %v1793, inf
      %1799 = vmin.xlane.f32.xlu0 %v1798
      %v1800 = vpop.xlane.xlu0 %1799
      %v1801 = vcvt.f32.s32 %v1800
      %v1802 = vcvt.f32.s32 %v1796
      %v1803 = vshll.u32 %v1802, 16
      %v1804 = vadd.s32 %v1803, %v1801
      %v1805 = vand.u32 %v1689, 65535
      %v1806 = vshra.s32 %v1689, 16
      %v1807 = vcvt.s32.f32 %v1805
      %v1808 = vcvt.s32.f32 %v1806
      %1809 = vmin.xlane.f32.xlu0 %v1808
      %v1810 = vpop.xlane.xlu0 %1809
      %vm1811 = vcmp.eq.f32.partialorder %v1808, %v1810
      %v1812 = vsel %vm1811, %v1807, inf
      %1813 = vmin.xlane.f32.xlu0 %v1812
      %v1814 = vpop.xlane.xlu0 %1813
      %v1815 = vcvt.f32.s32 %v1814
      %v1816 = vcvt.f32.s32 %v1810
      %v1817 = vshll.u32 %v1816, 16
      %v1818 = vadd.s32 %v1817, %v1815
      %v1819 = vand.u32 %v1690, 65535
      %v1820 = vshra.s32 %v1690, 16
      %v1821 = vcvt.s32.f32 %v1819
      %v1822 = vcvt.s32.f32 %v1820
      %1823 = vmin.xlane.f32.xlu0 %v1822
      %v1824 = vpop.xlane.xlu0 %1823
      %vm1825 = vcmp.eq.f32.partialorder %v1822, %v1824
      %v1826 = vsel %vm1825, %v1821, inf
      %1827 = vmin.xlane.f32.xlu0 %v1826
      %v1828 = vpop.xlane.xlu0 %1827
      %v1829 = vcvt.f32.s32 %v1828
      %v1830 = vcvt.f32.s32 %v1824
      %v1831 = vshll.u32 %v1830, 16
      %v1832 = vadd.s32 %v1831, %v1829
      %v1833 = vand.u32 %v1691, 65535
      %v1834 = vshra.s32 %v1691, 16
      %v1835 = vcvt.s32.f32 %v1833
      %v1836 = vcvt.s32.f32 %v1834
      %1837 = vmin.xlane.f32.xlu0 %v1836
      %v1838 = vpop.xlane.xlu0 %1837
      %vm1839 = vcmp.eq.f32.partialorder %v1836, %v1838
      %v1840 = vsel %vm1839, %v1835, inf
      %1841 = vmin.xlane.f32.xlu0 %v1840
      %v1842 = vpop.xlane.xlu0 %1841
      %v1843 = vcvt.f32.s32 %v1842
      %v1844 = vcvt.f32.s32 %v1838
      %v1845 = vshll.u32 %v1844, 16
      %v1846 = vadd.s32 %v1845, %v1843
      %v1847 = vand.u32 %v1692, 65535
      %v1848 = vshra.s32 %v1692, 16
      %v1849 = vcvt.s32.f32 %v1847
      %v1850 = vcvt.s32.f32 %v1848
      %1851 = vmin.xlane.f32.xlu0 %v1850
      %v1852 = vpop.xlane.xlu0 %1851
      %vm1853 = vcmp.eq.f32.partialorder %v1850, %v1852
      %v1854 = vsel %vm1853, %v1849, inf
      %1855 = vmin.xlane.f32.xlu0 %v1854
      %v1856 = vpop.xlane.xlu0 %1855
      %v1857 = vcvt.f32.s32 %v1856
      %v1858 = vcvt.f32.s32 %v1852
      %v1859 = vshll.u32 %v1858, 16
      %v1860 = vadd.s32 %v1859, %v1857
      %v1861 = vand.u32 %v1693, 65535
      %v1862 = vshra.s32 %v1693, 16
      %v1863 = vcvt.s32.f32 %v1861
      %v1864 = vcvt.s32.f32 %v1862
      %1865 = vmin.xlane.f32.xlu0 %v1864
      %v1866 = vpop.xlane.xlu0 %1865
      %vm1867 = vcmp.eq.f32.partialorder %v1864, %v1866
      %v1868 = vsel %vm1867, %v1863, inf
      %1869 = vmin.xlane.f32.xlu0 %v1868
      %v1870 = vpop.xlane.xlu0 %1869
      %v1871 = vcvt.f32.s32 %v1870
      %v1872 = vcvt.f32.s32 %v1866
      %v1873 = vshll.u32 %v1872, 16
      %v1874 = vadd.s32 %v1873, %v1871
      %v1875 = vand.u32 %v1694, 65535
      %v1876 = vshra.s32 %v1694, 16
      %v1877 = vcvt.s32.f32 %v1875
      %v1878 = vcvt.s32.f32 %v1876
      %1879 = vmin.xlane.f32.xlu0 %v1878
      %v1880 = vpop.xlane.xlu0 %1879
      %vm1881 = vcmp.eq.f32.partialorder %v1878, %v1880
      %v1882 = vsel %vm1881, %v1877, inf
      %1883 = vmin.xlane.f32.xlu0 %v1882
      %v1884 = vpop.xlane.xlu0 %1883
      %v1885 = vcvt.f32.s32 %v1884
      %v1886 = vcvt.f32.s32 %v1880
      %v1887 = vshll.u32 %v1886, 16
      %v1888 = vadd.s32 %v1887, %v1885
      %v1889 = vand.u32 %v1695, 65535
      %v1890 = vshra.s32 %v1695, 16
      %v1891 = vcvt.s32.f32 %v1889
      %v1892 = vcvt.s32.f32 %v1890
      %1893 = vmin.xlane.f32.xlu0 %v1892
      %v1894 = vpop.xlane.xlu0 %1893
      %vm1895 = vcmp.eq.f32.partialorder %v1892, %v1894
      %v1896 = vsel %vm1895, %v1891, inf
      %1897 = vmin.xlane.f32.xlu0 %v1896
      %v1898 = vpop.xlane.xlu0 %1897
      %v1899 = vcvt.f32.s32 %v1898
      %v1900 = vcvt.f32.s32 %v1894
      %v1901 = vshll.u32 %v1900, 16
      %v1902 = vadd.s32 %v1901, %v1899
      %v1903 = vand.u32 %v1696, 65535
      %v1904 = vshra.s32 %v1696, 16
      %v1905 = vcvt.s32.f32 %v1903
      %v1906 = vcvt.s32.f32 %v1904
      %1907 = vmin.xlane.f32.xlu0 %v1906
      %v1908 = vpop.xlane.xlu0 %1907
      %vm1909 = vcmp.eq.f32.partialorder %v1906, %v1908
      %v1910 = vsel %vm1909, %v1905, inf
      %1911 = vmin.xlane.f32.xlu0 %v1910
      %v1912 = vpop.xlane.xlu0 %1911
      %v1913 = vcvt.f32.s32 %v1912
      %v1914 = vcvt.f32.s32 %v1908
      %v1915 = vshll.u32 %v1914, 16
      %v1916 = vadd.s32 %v1915, %v1913
      %v1917 = vand.u32 %v1697, 65535
      %v1918 = vshra.s32 %v1697, 16
      %v1919 = vcvt.s32.f32 %v1917
      %v1920 = vcvt.s32.f32 %v1918
      %1921 = vmin.xlane.f32.xlu0 %v1920
      %v1922 = vpop.xlane.xlu0 %1921
      %vm1923 = vcmp.eq.f32.partialorder %v1920, %v1922
      %v1924 = vsel %vm1923, %v1919, inf
      %1925 = vmin.xlane.f32.xlu0 %v1924
      %v1926 = vpop.xlane.xlu0 %1925
      %v1927 = vcvt.f32.s32 %v1926
      %v1928 = vcvt.f32.s32 %v1922
      %v1929 = vshll.u32 %v1928, 16
      %v1930 = vadd.s32 %v1929, %v1927
      %v1931 = vand.u32 %v1698, 65535
      %v1932 = vshra.s32 %v1698, 16
      %v1933 = vcvt.s32.f32 %v1931
      %v1934 = vcvt.s32.f32 %v1932
      %1935 = vmin.xlane.f32.xlu0 %v1934
      %v1936 = vpop.xlane.xlu0 %1935
      %vm1937 = vcmp.eq.f32.partialorder %v1934, %v1936
      %v1938 = vsel %vm1937, %v1933, inf
      %1939 = vmin.xlane.f32.xlu0 %v1938
      %v1940 = vpop.xlane.xlu0 %1939
      %v1941 = vcvt.f32.s32 %v1940
      %v1942 = vcvt.f32.s32 %v1936
      %v1943 = vshll.u32 %v1942, 16
      %v1944 = vadd.s32 %v1943, %v1941
      %v1945 = vand.u32 %v1699, 65535
      %v1946 = vshra.s32 %v1699, 16
      %v1947 = vcvt.s32.f32 %v1945
      %v1948 = vcvt.s32.f32 %v1946
      %1949 = vmin.xlane.f32.xlu0 %v1948
      %v1950 = vpop.xlane.xlu0 %1949
      %vm1951 = vcmp.eq.f32.partialorder %v1948, %v1950
      %v1952 = vsel %vm1951, %v1947, inf
      %1953 = vmin.xlane.f32.xlu0 %v1952
      %v1954 = vpop.xlane.xlu0 %1953
      %v1955 = vcvt.f32.s32 %v1954
      %v1956 = vcvt.f32.s32 %v1950
      %v1957 = vshll.u32 %v1956, 16
      %v1958 = vadd.s32 %v1957, %v1955
      %v1959 = vand.u32 %v1700, 65535
      %v1960 = vshra.s32 %v1700, 16
      %v1961 = vcvt.s32.f32 %v1959
      %v1962 = vcvt.s32.f32 %v1960
      %1963 = vmin.xlane.f32.xlu0 %v1962
      %v1964 = vpop.xlane.xlu0 %1963
      %vm1965 = vcmp.eq.f32.partialorder %v1962, %v1964
      %v1966 = vsel %vm1965, %v1961, inf
      %1967 = vmin.xlane.f32.xlu0 %v1966
      %v1968 = vpop.xlane.xlu0 %1967
      %v1969 = vcvt.f32.s32 %v1968
      %v1970 = vcvt.f32.s32 %v1964
      %v1971 = vshll.u32 %v1970, 16
      %v1972 = vadd.s32 %v1971, %v1969
      %v1973 = vand.u32 %v1701, 65535
      %v1974 = vshra.s32 %v1701, 16
      %v1975 = vcvt.s32.f32 %v1973
      %v1976 = vcvt.s32.f32 %v1974
      %1977 = vmin.xlane.f32.xlu0 %v1976
      %v1978 = vpop.xlane.xlu0 %1977
      %vm1979 = vcmp.eq.f32.partialorder %v1976, %v1978
      %v1980 = vsel %vm1979, %v1975, inf
      %1981 = vmin.xlane.f32.xlu0 %v1980
      %v1982 = vpop.xlane.xlu0 %1981
      %v1983 = vcvt.f32.s32 %v1982
      %v1984 = vcvt.f32.s32 %v1978
      %v1985 = vshll.u32 %v1984, 16
      %v1986 = vadd.s32 %v1985, %v1983
      %v1987 = vand.u32 %v1702, 65535
      %v1988 = vshra.s32 %v1702, 16
      %v1989 = vcvt.s32.f32 %v1987
      %v1990 = vcvt.s32.f32 %v1988
      %1991 = vmin.xlane.f32.xlu0 %v1990
      %v1992 = vpop.xlane.xlu0 %1991
      %vm1993 = vcmp.eq.f32.partialorder %v1990, %v1992
      %v1994 = vsel %vm1993, %v1989, inf
      %1995 = vmin.xlane.f32.xlu0 %v1994
      %v1996 = vpop.xlane.xlu0 %1995
      %v1997 = vcvt.f32.s32 %v1996
      %v1998 = vcvt.f32.s32 %v1992
      %v1999 = vshll.u32 %v1998, 16
      %v2000 = vadd.s32 %v1999, %v1997
      %v2001 = vand.u32 %v1703, 65535
      %v2002 = vshra.s32 %v1703, 16
      %v2003 = vcvt.s32.f32 %v2001
      %v2004 = vcvt.s32.f32 %v2002
      %2005 = vmin.xlane.f32.xlu0 %v2004
      %v2006 = vpop.xlane.xlu0 %2005
      %vm2007 = vcmp.eq.f32.partialorder %v2004, %v2006
      %v2008 = vsel %vm2007, %v2003, inf
      %2009 = vmin.xlane.f32.xlu0 %v2008
      %v2010 = vpop.xlane.xlu0 %2009
      %v2011 = vcvt.f32.s32 %v2010
      %v2012 = vcvt.f32.s32 %v2006
      %v2013 = vshll.u32 %v2012, 16
      %v2014 = vadd.s32 %v2013, %v2011
      %v2015 = vand.u32 %v1704, 65535
      %v2016 = vshra.s32 %v1704, 16
      %v2017 = vcvt.s32.f32 %v2015
      %v2018 = vcvt.s32.f32 %v2016
      %2019 = vmin.xlane.f32.xlu0 %v2018
      %v2020 = vpop.xlane.xlu0 %2019
      %vm2021 = vcmp.eq.f32.partialorder %v2018, %v2020
      %v2022 = vsel %vm2021, %v2017, inf
      %2023 = vmin.xlane.f32.xlu0 %v2022
      %v2024 = vpop.xlane.xlu0 %2023
      %v2025 = vcvt.f32.s32 %v2024
      %v2026 = vcvt.f32.s32 %v2020
      %v2027 = vshll.u32 %v2026, 16
      %v2028 = vadd.s32 %v2027, %v2025
      %v2029 = vand.u32 %v1705, 65535
      %v2030 = vshra.s32 %v1705, 16
      %v2031 = vcvt.s32.f32 %v2029
      %v2032 = vcvt.s32.f32 %v2030
      %2033 = vmin.xlane.f32.xlu0 %v2032
      %v2034 = vpop.xlane.xlu0 %2033
      %vm2035 = vcmp.eq.f32.partialorder %v2032, %v2034
      %v2036 = vsel %vm2035, %v2031, inf
      %2037 = vmin.xlane.f32.xlu0 %v2036
      %v2038 = vpop.xlane.xlu0 %2037
      %v2039 = vcvt.f32.s32 %v2038
      %v2040 = vcvt.f32.s32 %v2034
      %v2041 = vshll.u32 %v2040, 16
      %v2042 = vadd.s32 %v2041, %v2039
      %v2043 = vand.u32 %v1706, 65535
      %v2044 = vshra.s32 %v1706, 16
      %v2045 = vcvt.s32.f32 %v2043
      %v2046 = vcvt.s32.f32 %v2044
      %2047 = vmin.xlane.f32.xlu0 %v2046
      %v2048 = vpop.xlane.xlu0 %2047
      %vm2049 = vcmp.eq.f32.partialorder %v2046, %v2048
      %v2050 = vsel %vm2049, %v2045, inf
      %2051 = vmin.xlane.f32.xlu0 %v2050
      %v2052 = vpop.xlane.xlu0 %2051
      %v2053 = vcvt.f32.s32 %v2052
      %v2054 = vcvt.f32.s32 %v2048
      %v2055 = vshll.u32 %v2054, 16
      %v2056 = vadd.s32 %v2055, %v2053
      %v2057 = vand.u32 %v1707, 65535
      %v2058 = vshra.s32 %v1707, 16
      %v2059 = vcvt.s32.f32 %v2057
      %v2060 = vcvt.s32.f32 %v2058
      %2061 = vmin.xlane.f32.xlu0 %v2060
      %v2062 = vpop.xlane.xlu0 %2061
      %vm2063 = vcmp.eq.f32.partialorder %v2060, %v2062
      %v2064 = vsel %vm2063, %v2059, inf
      %2065 = vmin.xlane.f32.xlu0 %v2064
      %v2066 = vpop.xlane.xlu0 %2065
      %v2067 = vcvt.f32.s32 %v2066
      %v2068 = vcvt.f32.s32 %v2062
      %v2069 = vshll.u32 %v2068, 16
      %v2070 = vadd.s32 %v2069, %v2067
      %v2071 = vand.u32 %v1708, 65535
      %v2072 = vshra.s32 %v1708, 16
      %v2073 = vcvt.s32.f32 %v2071
      %v2074 = vcvt.s32.f32 %v2072
      %2075 = vmin.xlane.f32.xlu0 %v2074
      %v2076 = vpop.xlane.xlu0 %2075
      %vm2077 = vcmp.eq.f32.partialorder %v2074, %v2076
      %v2078 = vsel %vm2077, %v2073, inf
      %2079 = vmin.xlane.f32.xlu0 %v2078
      %v2080 = vpop.xlane.xlu0 %2079
      %v2081 = vcvt.f32.s32 %v2080
      %v2082 = vcvt.f32.s32 %v2076
      %v2083 = vshll.u32 %v2082, 16
      %v2084 = vadd.s32 %v2083, %v2081
      %v2085 = vand.u32 %v1709, 65535
      %v2086 = vshra.s32 %v1709, 16
      %v2087 = vcvt.s32.f32 %v2085
      %v2088 = vcvt.s32.f32 %v2086
      %2089 = vmin.xlane.f32.xlu0 %v2088
      %v2090 = vpop.xlane.xlu0 %2089
      %vm2091 = vcmp.eq.f32.partialorder %v2088, %v2090
      %v2092 = vsel %vm2091, %v2087, inf
      %2093 = vmin.xlane.f32.xlu0 %v2092
      %v2094 = vpop.xlane.xlu0 %2093
      %v2095 = vcvt.f32.s32 %v2094
      %v2096 = vcvt.f32.s32 %v2090
      %v2097 = vshll.u32 %v2096, 16
      %v2098 = vadd.s32 %v2097, %v2095
      %v2099 = vand.u32 %v1710, 65535
      %v2100 = vshra.s32 %v1710, 16
      %v2101 = vcvt.s32.f32 %v2099
      %v2102 = vcvt.s32.f32 %v2100
      %2103 = vmin.xlane.f32.xlu0 %v2102
      %v2104 = vpop.xlane.xlu0 %2103
      %vm2105 = vcmp.eq.f32.partialorder %v2102, %v2104
      %v2106 = vsel %vm2105, %v2101, inf
      %2107 = vmin.xlane.f32.xlu0 %v2106
      %v2108 = vpop.xlane.xlu0 %2107
      %v2109 = vcvt.f32.s32 %v2108
      %v2110 = vcvt.f32.s32 %v2104
      %v2111 = vshll.u32 %v2110, 16
      %v2112 = vadd.s32 %v2111, %v2109
      %v2113 = vand.u32 %v1711, 65535
      %v2114 = vshra.s32 %v1711, 16
      %v2115 = vcvt.s32.f32 %v2113
      %v2116 = vcvt.s32.f32 %v2114
      %2117 = vmin.xlane.f32.xlu0 %v2116
      %v2118 = vpop.xlane.xlu0 %2117
      %vm2119 = vcmp.eq.f32.partialorder %v2116, %v2118
      %v2120 = vsel %vm2119, %v2115, inf
      %2121 = vmin.xlane.f32.xlu0 %v2120
      %v2122 = vpop.xlane.xlu0 %2121
      %v2123 = vcvt.f32.s32 %v2122
      %v2124 = vcvt.f32.s32 %v2118
      %v2125 = vshll.u32 %v2124, 16
      %v2126 = vadd.s32 %v2125, %v2123
      %v2127 = vand.u32 %v1712, 65535
      %v2128 = vshra.s32 %v1712, 16
      %v2129 = vcvt.s32.f32 %v2127
      %v2130 = vcvt.s32.f32 %v2128
      %2131 = vmin.xlane.f32.xlu0 %v2130
      %v2132 = vpop.xlane.xlu0 %2131
      %vm2133 = vcmp.eq.f32.partialorder %v2130, %v2132
      %v2134 = vsel %vm2133, %v2129, inf
      %2135 = vmin.xlane.f32.xlu0 %v2134
      %v2136 = vpop.xlane.xlu0 %2135
      %v2137 = vcvt.f32.s32 %v2136
      %v2138 = vcvt.f32.s32 %v2132
      %v2139 = vshll.u32 %v2138, 16
      %v2140 = vadd.s32 %v2139, %v2137
      %v2141 = vand.u32 %v1713, 65535
      %v2142 = vshra.s32 %v1713, 16
      %v2143 = vcvt.s32.f32 %v2141
      %v2144 = vcvt.s32.f32 %v2142
      %2145 = vmin.xlane.f32.xlu0 %v2144
      %v2146 = vpop.xlane.xlu0 %2145
      %vm2147 = vcmp.eq.f32.partialorder %v2144, %v2146
      %v2148 = vsel %vm2147, %v2143, inf
      %2149 = vmin.xlane.f32.xlu0 %v2148
      %v2150 = vpop.xlane.xlu0 %2149
      %v2151 = vcvt.f32.s32 %v2150
      %v2152 = vcvt.f32.s32 %v2146
      %v2153 = vshll.u32 %v2152, 16
      %v2154 = vadd.s32 %v2153, %v2151
      %v2155 = vand.u32 %v1714, 65535
      %v2156 = vshra.s32 %v1714, 16
      %v2157 = vcvt.s32.f32 %v2155
      %v2158 = vcvt.s32.f32 %v2156
      %2159 = vmin.xlane.f32.xlu0 %v2158
      %v2160 = vpop.xlane.xlu0 %2159
      %vm2161 = vcmp.eq.f32.partialorder %v2158, %v2160
      %v2162 = vsel %vm2161, %v2157, inf
      %2163 = vmin.xlane.f32.xlu0 %v2162
      %v2164 = vpop.xlane.xlu0 %2163
      %v2165 = vcvt.f32.s32 %v2164
      %v2166 = vcvt.f32.s32 %v2160
      %v2167 = vshll.u32 %v2166, 16
      %v2168 = vadd.s32 %v2167, %v2165
      %v2169 = vand.u32 %v1715, 65535
      %v2170 = vshra.s32 %v1715, 16
      %v2171 = vcvt.s32.f32 %v2169
      %v2172 = vcvt.s32.f32 %v2170
      %2173 = vmin.xlane.f32.xlu0 %v2172
      %v2174 = vpop.xlane.xlu0 %2173
      %vm2175 = vcmp.eq.f32.partialorder %v2172, %v2174
      %v2176 = vsel %vm2175, %v2171, inf
      %2177 = vmin.xlane.f32.xlu0 %v2176
      %v2178 = vpop.xlane.xlu0 %2177
      %v2179 = vcvt.f32.s32 %v2178
      %v2180 = vcvt.f32.s32 %v2174
      %v2181 = vshll.u32 %v2180, 16
      %v2182 = vadd.s32 %v2181, %v2179
      %v2183 = vand.u32 %v1716, 65535
      %v2184 = vshra.s32 %v1716, 16
      %v2185 = vcvt.s32.f32 %v2183
      %v2186 = vcvt.s32.f32 %v2184
      %2187 = vmin.xlane.f32.xlu0 %v2186
      %v2188 = vpop.xlane.xlu0 %2187
      %vm2189 = vcmp.eq.f32.partialorder %v2186, %v2188
      %v2190 = vsel %vm2189, %v2185, inf
      %2191 = vmin.xlane.f32.xlu0 %v2190
      %v2192 = vpop.xlane.xlu0 %2191
      %v2193 = vcvt.f32.s32 %v2192
      %v2194 = vcvt.f32.s32 %v2188
      %v2195 = vshll.u32 %v2194, 16
      %v2196 = vadd.s32 %v2195, %v2193
      %v2197 = vand.u32 %v1717, 65535
      %v2198 = vshra.s32 %v1717, 16
      %v2199 = vcvt.s32.f32 %v2197
      %v2200 = vcvt.s32.f32 %v2198
      %2201 = vmin.xlane.f32.xlu0 %v2200
      %v2202 = vpop.xlane.xlu0 %2201
      %vm2203 = vcmp.eq.f32.partialorder %v2200, %v2202
      %v2204 = vsel %vm2203, %v2199, inf
      %2205 = vmin.xlane.f32.xlu0 %v2204
      %v2206 = vpop.xlane.xlu0 %2205
      %v2207 = vcvt.f32.s32 %v2206
      %v2208 = vcvt.f32.s32 %v2202
      %v2209 = vshll.u32 %v2208, 16
      %v2210 = vadd.s32 %v2209, %v2207
      %v2211 = vand.u32 %v1718, 65535
      %v2212 = vshra.s32 %v1718, 16
      %v2213 = vcvt.s32.f32 %v2211
      %v2214 = vcvt.s32.f32 %v2212
      %2215 = vmin.xlane.f32.xlu0 %v2214
      %v2216 = vpop.xlane.xlu0 %2215
      %vm2217 = vcmp.eq.f32.partialorder %v2214, %v2216
      %v2218 = vsel %vm2217, %v2213, inf
      %2219 = vmin.xlane.f32.xlu0 %v2218
      %v2220 = vpop.xlane.xlu0 %2219
      %v2221 = vcvt.f32.s32 %v2220
      %v2222 = vcvt.f32.s32 %v2216
      %v2223 = vshll.u32 %v2222, 16
      %v2224 = vadd.s32 %v2223, %v2221
      %v2225 = vand.u32 %v1719, 65535
      %v2226 = vshra.s32 %v1719, 16
      %v2227 = vcvt.s32.f32 %v2225
      %v2228 = vcvt.s32.f32 %v2226
      %2229 = vmin.xlane.f32.xlu0 %v2228
      %v2230 = vpop.xlane.xlu0 %2229
      %vm2231 = vcmp.eq.f32.partialorder %v2228, %v2230
      %v2232 = vsel %vm2231, %v2227, inf
      %2233 = vmin.xlane.f32.xlu0 %v2232
      %v2234 = vpop.xlane.xlu0 %2233
      %v2235 = vcvt.f32.s32 %v2234
      %v2236 = vcvt.f32.s32 %v2230
      %v2237 = vshll.u32 %v2236, 16
      %v2238 = vadd.s32 %v2237, %v2235
      %v2239 = vand.u32 %v1720, 65535
      %v2240 = vshra.s32 %v1720, 16
      %v2241 = vcvt.s32.f32 %v2239
      %v2242 = vcvt.s32.f32 %v2240
      %2243 = vmin.xlane.f32.xlu0 %v2242
      %v2244 = vpop.xlane.xlu0 %2243
      %vm2245 = vcmp.eq.f32.partialorder %v2242, %v2244
      %v2246 = vsel %vm2245, %v2241, inf
      %2247 = vmin.xlane.f32.xlu0 %v2246
      %v2248 = vpop.xlane.xlu0 %2247
      %v2249 = vcvt.f32.s32 %v2248
      %v2250 = vcvt.f32.s32 %v2244
      %v2251 = vshll.u32 %v2250, 16
      %v2252 = vadd.s32 %v2251, %v2249
      %v2253 = vand.u32 %v1721, 65535
      %v2254 = vshra.s32 %v1721, 16
      %v2255 = vcvt.s32.f32 %v2253
      %v2256 = vcvt.s32.f32 %v2254
      %2257 = vmin.xlane.f32.xlu0 %v2256
      %v2258 = vpop.xlane.xlu0 %2257
      %vm2259 = vcmp.eq.f32.partialorder %v2256, %v2258
      %v2260 = vsel %vm2259, %v2255, inf
      %2261 = vmin.xlane.f32.xlu0 %v2260
      %v2262 = vpop.xlane.xlu0 %2261
      %v2263 = vcvt.f32.s32 %v2262
      %v2264 = vcvt.f32.s32 %v2258
      %v2265 = vshll.u32 %v2264, 16
      %v2266 = vadd.s32 %v2265, %v2263
      %v2267 = vand.u32 %v1722, 65535
      %v2268 = vshra.s32 %v1722, 16
      %v2269 = vcvt.s32.f32 %v2267
      %v2270 = vcvt.s32.f32 %v2268
      %2271 = vmin.xlane.f32.xlu0 %v2270
      %v2272 = vpop.xlane.xlu0 %2271
      %vm2273 = vcmp.eq.f32.partialorder %v2270, %v2272
      %v2274 = vsel %vm2273, %v2269, inf
      %2275 = vmin.xlane.f32.xlu0 %v2274
      %v2276 = vpop.xlane.xlu0 %2275
      %v2277 = vcvt.f32.s32 %v2276
      %v2278 = vcvt.f32.s32 %v2272
      %v2279 = vshll.u32 %v2278, 16
      %v2280 = vadd.s32 %v2279, %v2277
      %v2281 = vand.u32 %v1723, 65535
      %v2282 = vshra.s32 %v1723, 16
      %v2283 = vcvt.s32.f32 %v2281
      %v2284 = vcvt.s32.f32 %v2282
      %2285 = vmin.xlane.f32.xlu0 %v2284
      %v2286 = vpop.xlane.xlu0 %2285
      %vm2287 = vcmp.eq.f32.partialorder %v2284, %v2286
      %v2288 = vsel %vm2287, %v2283, inf
      %2289 = vmin.xlane.f32.xlu0 %v2288
      %v2290 = vpop.xlane.xlu0 %2289
      %v2291 = vcvt.f32.s32 %v2290
      %v2292 = vcvt.f32.s32 %v2286
      %v2293 = vshll.u32 %v2292, 16
      %v2294 = vadd.s32 %v2293, %v2291
      %v2295 = vand.u32 %v1724, 65535
      %v2296 = vshra.s32 %v1724, 16
      %v2297 = vcvt.s32.f32 %v2295
      %v2298 = vcvt.s32.f32 %v2296
      %2299 = vmin.xlane.f32.xlu0 %v2298
      %v2300 = vpop.xlane.xlu0 %2299
      %vm2301 = vcmp.eq.f32.partialorder %v2298, %v2300
      %v2302 = vsel %vm2301, %v2297, inf
      %2303 = vmin.xlane.f32.xlu0 %v2302
      %v2304 = vpop.xlane.xlu0 %2303
      %v2305 = vcvt.f32.s32 %v2304
      %v2306 = vcvt.f32.s32 %v2300
      %v2307 = vshll.u32 %v2306, 16
      %v2308 = vadd.s32 %v2307, %v2305
      %v2309 = vand.u32 %v1725, 65535
      %v2310 = vshra.s32 %v1725, 16
      %v2311 = vcvt.s32.f32 %v2309
      %v2312 = vcvt.s32.f32 %v2310
      %2313 = vmin.xlane.f32.xlu0 %v2312
      %v2314 = vpop.xlane.xlu0 %2313
      %vm2315 = vcmp.eq.f32.partialorder %v2312, %v2314
      %v2316 = vsel %vm2315, %v2311, inf
      %2317 = vmin.xlane.f32.xlu0 %v2316
      %v2318 = vpop.xlane.xlu0 %2317
      %v2319 = vcvt.f32.s32 %v2318
      %v2320 = vcvt.f32.s32 %v2314
      %v2321 = vshll.u32 %v2320, 16
      %v2322 = vadd.s32 %v2321, %v2319
      %v2323 = vand.u32 %v1726, 65535
      %v2324 = vshra.s32 %v1726, 16
      %v2325 = vcvt.s32.f32 %v2323
      %v2326 = vcvt.s32.f32 %v2324
      %2327 = vmin.xlane.f32.xlu0 %v2326
      %v2328 = vpop.xlane.xlu0 %2327
      %vm2329 = vcmp.eq.f32.partialorder %v2326, %v2328
      %v2330 = vsel %vm2329, %v2325, inf
      %2331 = vmin.xlane.f32.xlu0 %v2330
      %v2332 = vpop.xlane.xlu0 %2331
      %v2333 = vcvt.f32.s32 %v2332
      %v2334 = vcvt.f32.s32 %v2328
      %v2335 = vshll.u32 %v2334, 16
      %v2336 = vadd.s32 %v2335, %v2333
      %v2337 = vand.u32 %v1727, 65535
      %v2338 = vshra.s32 %v1727, 16
      %v2339 = vcvt.s32.f32 %v2337
      %v2340 = vcvt.s32.f32 %v2338
      %2341 = vmin.xlane.f32.xlu0 %v2340
      %v2342 = vpop.xlane.xlu0 %2341
      %vm2343 = vcmp.eq.f32.partialorder %v2340, %v2342
      %v2344 = vsel %vm2343, %v2339, inf
      %2345 = vmin.xlane.f32.xlu0 %v2344
      %v2346 = vpop.xlane.xlu0 %2345
      %v2347 = vcvt.f32.s32 %v2346
      %v2348 = vcvt.f32.s32 %v2342
      %v2349 = vshll.u32 %v2348, 16
      %v2350 = vadd.s32 %v2349, %v2347
      %v2351 = vand.u32 %v1728, 65535
      %v2352 = vshra.s32 %v1728, 16
      %v2353 = vcvt.s32.f32 %v2351
      %v2354 = vcvt.s32.f32 %v2352
      %2355 = vmin.xlane.f32.xlu0 %v2354
      %v2356 = vpop.xlane.xlu0 %2355
      %vm2357 = vcmp.eq.f32.partialorder %v2354, %v2356
      %v2358 = vsel %vm2357, %v2353, inf
      %2359 = vmin.xlane.f32.xlu0 %v2358
      %v2360 = vpop.xlane.xlu0 %2359
      %v2361 = vcvt.f32.s32 %v2360
      %v2362 = vcvt.f32.s32 %v2356
      %v2363 = vshll.u32 %v2362, 16
      %v2364 = vadd.s32 %v2363, %v2361
      %v2365 = vand.u32 %v1729, 65535
      %v2366 = vshra.s32 %v1729, 16
      %v2367 = vcvt.s32.f32 %v2365
      %v2368 = vcvt.s32.f32 %v2366
      %2369 = vmin.xlane.f32.xlu0 %v2368
      %v2370 = vpop.xlane.xlu0 %2369
      %vm2371 = vcmp.eq.f32.partialorder %v2368, %v2370
      %v2372 = vsel %vm2371, %v2367, inf
      %2373 = vmin.xlane.f32.xlu0 %v2372
      %v2374 = vpop.xlane.xlu0 %2373
      %v2375 = vcvt.f32.s32 %v2374
      %v2376 = vcvt.f32.s32 %v2370
      %v2377 = vshll.u32 %v2376, 16
      %v2378 = vadd.s32 %v2377, %v2375
      %v2379 = vand.u32 %v1730, 65535
      %v2380 = vshra.s32 %v1730, 16
      %v2381 = vcvt.s32.f32 %v2379
      %v2382 = vcvt.s32.f32 %v2380
      %2383 = vmin.xlane.f32.xlu0 %v2382
      %v2384 = vpop.xlane.xlu0 %2383
      %vm2385 = vcmp.eq.f32.partialorder %v2382, %v2384
      %v2386 = vsel %vm2385, %v2381, inf
      %2387 = vmin.xlane.f32.xlu0 %v2386
      %v2388 = vpop.xlane.xlu0 %2387
      %v2389 = vcvt.f32.s32 %v2388
      %v2390 = vcvt.f32.s32 %v2384
      %v2391 = vshll.u32 %v2390, 16
      %v2392 = vadd.s32 %v2391, %v2389
      %v2393 = vand.u32 %v1731, 65535
      %v2394 = vshra.s32 %v1731, 16
      %v2395 = vcvt.s32.f32 %v2393
      %v2396 = vcvt.s32.f32 %v2394
      %2397 = vmin.xlane.f32.xlu0 %v2396
      %v2398 = vpop.xlane.xlu0 %2397
      %vm2399 = vcmp.eq.f32.partialorder %v2396, %v2398
      %v2400 = vsel %vm2399, %v2395, inf
      %2401 = vmin.xlane.f32.xlu0 %v2400
      %v2402 = vpop.xlane.xlu0 %2401
      %v2403 = vcvt.f32.s32 %v2402
      %v2404 = vcvt.f32.s32 %v2398
      %v2405 = vshll.u32 %v2404, 16
      %v2406 = vadd.s32 %v2405, %v2403
      %v2407 = vand.u32 %v1732, 65535
      %v2408 = vshra.s32 %v1732, 16
      %v2409 = vcvt.s32.f32 %v2407
      %v2410 = vcvt.s32.f32 %v2408
      %2411 = vmin.xlane.f32.xlu0 %v2410
      %v2412 = vpop.xlane.xlu0 %2411
      %vm2413 = vcmp.eq.f32.partialorder %v2410, %v2412
      %v2414 = vsel %vm2413, %v2409, inf
      %2415 = vmin.xlane.f32.xlu0 %v2414
      %v2416 = vpop.xlane.xlu0 %2415
      %v2417 = vcvt.f32.s32 %v2416
      %v2418 = vcvt.f32.s32 %v2412
      %v2419 = vshll.u32 %v2418, 16
      %v2420 = vadd.s32 %v2419, %v2417
      %v2421 = vand.u32 %v1733, 65535
      %v2422 = vshra.s32 %v1733, 16
      %v2423 = vcvt.s32.f32 %v2421
      %v2424 = vcvt.s32.f32 %v2422
      %2425 = vmin.xlane.f32.xlu0 %v2424
      %v2426 = vpop.xlane.xlu0 %2425
      %vm2427 = vcmp.eq.f32.partialorder %v2424, %v2426
      %v2428 = vsel %vm2427, %v2423, inf
      %2429 = vmin.xlane.f32.xlu0 %v2428
      %v2430 = vpop.xlane.xlu0 %2429
      %v2431 = vcvt.f32.s32 %v2430
      %v2432 = vcvt.f32.s32 %v2426
      %v2433 = vshll.u32 %v2432, 16
      %v2434 = vadd.s32 %v2433, %v2431
      %v2435 = vand.u32 %v1734, 65535
      %v2436 = vshra.s32 %v1734, 16
      %v2437 = vcvt.s32.f32 %v2435
      %v2438 = vcvt.s32.f32 %v2436
      %2439 = vmin.xlane.f32.xlu0 %v2438
      %v2440 = vpop.xlane.xlu0 %2439
      %vm2441 = vcmp.eq.f32.partialorder %v2438, %v2440
      %v2442 = vsel %vm2441, %v2437, inf
      %2443 = vmin.xlane.f32.xlu0 %v2442
      %v2444 = vpop.xlane.xlu0 %2443
      %v2445 = vcvt.f32.s32 %v2444
      %v2446 = vcvt.f32.s32 %v2440
      %v2447 = vshll.u32 %v2446, 16
      %v2448 = vadd.s32 %v2447, %v2445
      %v2449 = vand.u32 %v1735, 65535
      %v2450 = vshra.s32 %v1735, 16
      %v2451 = vcvt.s32.f32 %v2449
      %v2452 = vcvt.s32.f32 %v2450
      %2453 = vmin.xlane.f32.xlu0 %v2452
      %v2454 = vpop.xlane.xlu0 %2453
      %vm2455 = vcmp.eq.f32.partialorder %v2452, %v2454
      %v2456 = vsel %vm2455, %v2451, inf
      %2457 = vmin.xlane.f32.xlu0 %v2456
      %v2458 = vpop.xlane.xlu0 %2457
      %v2459 = vcvt.f32.s32 %v2458
      %v2460 = vcvt.f32.s32 %v2454
      %v2461 = vshll.u32 %v2460, 16
      %v2462 = vadd.s32 %v2461, %v2459
      %v2463 = vand.u32 %v1736, 65535
      %v2464 = vshra.s32 %v1736, 16
      %v2465 = vcvt.s32.f32 %v2463
      %v2466 = vcvt.s32.f32 %v2464
      %2467 = vmin.xlane.f32.xlu0 %v2466
      %v2468 = vpop.xlane.xlu0 %2467
      %vm2469 = vcmp.eq.f32.partialorder %v2466, %v2468
      %v2470 = vsel %vm2469, %v2465, inf
      %2471 = vmin.xlane.f32.xlu0 %v2470
      %v2472 = vpop.xlane.xlu0 %2471
      %v2473 = vcvt.f32.s32 %v2472
      %v2474 = vcvt.f32.s32 %v2468
      %v2475 = vshll.u32 %v2474, 16
      %v2476 = vadd.s32 %v2475, %v2473
      %v2477 = vand.u32 %v1737, 65535
      %v2478 = vshra.s32 %v1737, 16
      %v2479 = vcvt.s32.f32 %v2477
      %v2480 = vcvt.s32.f32 %v2478
      %2481 = vmin.xlane.f32.xlu0 %v2480
      %v2482 = vpop.xlane.xlu0 %2481
      %vm2483 = vcmp.eq.f32.partialorder %v2480, %v2482
      %v2484 = vsel %vm2483, %v2479, inf
      %2485 = vmin.xlane.f32.xlu0 %v2484
      %v2486 = vpop.xlane.xlu0 %2485
      %v2487 = vcvt.f32.s32 %v2486
      %v2488 = vcvt.f32.s32 %v2482
      %v2489 = vshll.u32 %v2488, 16
      %v2490 = vadd.s32 %v2489, %v2487
      %v2491 = vand.u32 %v1738, 65535
      %v2492 = vshra.s32 %v1738, 16
      %v2493 = vcvt.s32.f32 %v2491
      %v2494 = vcvt.s32.f32 %v2492
      %2495 = vmin.xlane.f32.xlu0 %v2494
      %v2496 = vpop.xlane.xlu0 %2495
      %vm2497 = vcmp.eq.f32.partialorder %v2494, %v2496
      %v2498 = vsel %vm2497, %v2493, inf
      %2499 = vmin.xlane.f32.xlu0 %v2498
      %v2500 = vpop.xlane.xlu0 %2499
      %v2501 = vcvt.f32.s32 %v2500
      %v2502 = vcvt.f32.s32 %v2496
      %v2503 = vshll.u32 %v2502, 16
      %v2504 = vadd.s32 %v2503, %v2501
      %v2505 = vand.u32 %v1739, 65535
      %v2506 = vshra.s32 %v1739, 16
      %v2507 = vcvt.s32.f32 %v2505
      %v2508 = vcvt.s32.f32 %v2506
      %2509 = vmin.xlane.f32.xlu0 %v2508
      %v2510 = vpop.xlane.xlu0 %2509
      %vm2511 = vcmp.eq.f32.partialorder %v2508, %v2510
      %v2512 = vsel %vm2511, %v2507, inf
      %2513 = vmin.xlane.f32.xlu0 %v2512
      %v2514 = vpop.xlane.xlu0 %2513
      %v2515 = vcvt.f32.s32 %v2514
      %v2516 = vcvt.f32.s32 %v2510
      %v2517 = vshll.u32 %v2516, 16
      %v2518 = vadd.s32 %v2517, %v2515
      %v2519 = vand.u32 %v1740, 65535
      %v2520 = vshra.s32 %v1740, 16
      %v2521 = vcvt.s32.f32 %v2519
      %v2522 = vcvt.s32.f32 %v2520
      %2523 = vmin.xlane.f32.xlu0 %v2522
      %v2524 = vpop.xlane.xlu0 %2523
      %vm2525 = vcmp.eq.f32.partialorder %v2522, %v2524
      %v2526 = vsel %vm2525, %v2521, inf
      %2527 = vmin.xlane.f32.xlu0 %v2526
      %v2528 = vpop.xlane.xlu0 %2527
      %v2529 = vcvt.f32.s32 %v2528
      %v2530 = vcvt.f32.s32 %v2524
      %v2531 = vshll.u32 %v2530, 16
      %v2532 = vadd.s32 %v2531, %v2529
      %v2533 = vand.u32 %v1741, 65535
      %v2534 = vshra.s32 %v1741, 16
      %v2535 = vcvt.s32.f32 %v2533
      %v2536 = vcvt.s32.f32 %v2534
      %2537 = vmin.xlane.f32.xlu0 %v2536
      %v2538 = vpop.xlane.xlu0 %2537
      %vm2539 = vcmp.eq.f32.partialorder %v2536, %v2538
      %v2540 = vsel %vm2539, %v2535, inf
      %2541 = vmin.xlane.f32.xlu0 %v2540
      %v2542 = vpop.xlane.xlu0 %2541
      %v2543 = vcvt.f32.s32 %v2542
      %v2544 = vcvt.f32.s32 %v2538
      %v2545 = vshll.u32 %v2544, 16
      %v2546 = vadd.s32 %v2545, %v2543
      %v2547 = vand.u32 %v1742, 65535
      %v2548 = vshra.s32 %v1742, 16
      %v2549 = vcvt.s32.f32 %v2547
      %v2550 = vcvt.s32.f32 %v2548
      %2551 = vmin.xlane.f32.xlu0 %v2550
      %v2552 = vpop.xlane.xlu0 %2551
      %vm2553 = vcmp.eq.f32.partialorder %v2550, %v2552
      %v2554 = vsel %vm2553, %v2549, inf
      %2555 = vmin.xlane.f32.xlu0 %v2554
      %v2556 = vpop.xlane.xlu0 %2555
      %v2557 = vcvt.f32.s32 %v2556
      %v2558 = vcvt.f32.s32 %v2552
      %v2559 = vshll.u32 %v2558, 16
      %v2560 = vadd.s32 %v2559, %v2557
      %v2561 = vand.u32 %v1743, 65535
      %v2562 = vshra.s32 %v1743, 16
      %v2563 = vcvt.s32.f32 %v2561
      %v2564 = vcvt.s32.f32 %v2562
      %2565 = vmin.xlane.f32.xlu0 %v2564
      %v2566 = vpop.xlane.xlu0 %2565
      %vm2567 = vcmp.eq.f32.partialorder %v2564, %v2566
      %v2568 = vsel %vm2567, %v2563, inf
      %2569 = vmin.xlane.f32.xlu0 %v2568
      %v2570 = vpop.xlane.xlu0 %2569
      %v2571 = vcvt.f32.s32 %v2570
      %v2572 = vcvt.f32.s32 %v2566
      %v2573 = vshll.u32 %v2572, 16
      %v2574 = vadd.s32 %v2573, %v2571
      %v2575 = vand.u32 %v1744, 65535
      %v2576 = vshra.s32 %v1744, 16
      %v2577 = vcvt.s32.f32 %v2575
      %v2578 = vcvt.s32.f32 %v2576
      %2579 = vmin.xlane.f32.xlu0 %v2578
      %v2580 = vpop.xlane.xlu0 %2579
      %vm2581 = vcmp.eq.f32.partialorder %v2578, %v2580
      %v2582 = vsel %vm2581, %v2577, inf
      %2583 = vmin.xlane.f32.xlu0 %v2582
      %v2584 = vpop.xlane.xlu0 %2583
      %v2585 = vcvt.f32.s32 %v2584
      %v2586 = vcvt.f32.s32 %v2580
      %v2587 = vshll.u32 %v2586, 16
      %v2588 = vadd.s32 %v2587, %v2585
      %v2589 = vand.u32 %v1745, 65535
      %v2590 = vshra.s32 %v1745, 16
      %v2591 = vcvt.s32.f32 %v2589
      %v2592 = vcvt.s32.f32 %v2590
      %2593 = vmin.xlane.f32.xlu0 %v2592
      %v2594 = vpop.xlane.xlu0 %2593
      %vm2595 = vcmp.eq.f32.partialorder %v2592, %v2594
      %v2596 = vsel %vm2595, %v2591, inf
      %2597 = vmin.xlane.f32.xlu0 %v2596
      %v2598 = vpop.xlane.xlu0 %2597
      %v2599 = vcvt.f32.s32 %v2598
      %v2600 = vcvt.f32.s32 %v2594
      %v2601 = vshll.u32 %v2600, 16
      %v2602 = vadd.s32 %v2601, %v2599
      %v2603 = vand.u32 %v1746, 65535
      %v2604 = vshra.s32 %v1746, 16
      %v2605 = vcvt.s32.f32 %v2603
      %v2606 = vcvt.s32.f32 %v2604
      %2607 = vmin.xlane.f32.xlu0 %v2606
      %v2608 = vpop.xlane.xlu0 %2607
      %vm2609 = vcmp.eq.f32.partialorder %v2606, %v2608
      %v2610 = vsel %vm2609, %v2605, inf
      %2611 = vmin.xlane.f32.xlu0 %v2610
      %v2612 = vpop.xlane.xlu0 %2611
      %v2613 = vcvt.f32.s32 %v2612
      %v2614 = vcvt.f32.s32 %v2608
      %v2615 = vshll.u32 %v2614, 16
      %v2616 = vadd.s32 %v2615, %v2613
      %v2617 = vand.u32 %v1747, 65535
      %v2618 = vshra.s32 %v1747, 16
      %v2619 = vcvt.s32.f32 %v2617
      %v2620 = vcvt.s32.f32 %v2618
      %2621 = vmin.xlane.f32.xlu0 %v2620
      %v2622 = vpop.xlane.xlu0 %2621
      %vm2623 = vcmp.eq.f32.partialorder %v2620, %v2622
      %v2624 = vsel %vm2623, %v2619, inf
      %2625 = vmin.xlane.f32.xlu0 %v2624
      %v2626 = vpop.xlane.xlu0 %2625
      %v2627 = vcvt.f32.s32 %v2626
      %v2628 = vcvt.f32.s32 %v2622
      %v2629 = vshll.u32 %v2628, 16
      %v2630 = vadd.s32 %v2629, %v2627
      %v2631 = vand.u32 %v1748, 65535
      %v2632 = vshra.s32 %v1748, 16
      %v2633 = vcvt.s32.f32 %v2631
      %v2634 = vcvt.s32.f32 %v2632
      %2635 = vmin.xlane.f32.xlu0 %v2634
      %v2636 = vpop.xlane.xlu0 %2635
      %vm2637 = vcmp.eq.f32.partialorder %v2634, %v2636
      %v2638 = vsel %vm2637, %v2633, inf
      %2639 = vmin.xlane.f32.xlu0 %v2638
      %v2640 = vpop.xlane.xlu0 %2639
      %v2641 = vcvt.f32.s32 %v2640
      %v2642 = vcvt.f32.s32 %v2636
      %v2643 = vshll.u32 %v2642, 16
      %v2644 = vadd.s32 %v2643, %v2641
      %v2645 = vlaneseq
      %v2646 = vshrl.u32 %v2645, 7
      %v2647 = vsub.s32 %v213, %v2646
      %v2648 = vrot.slane %v1762, %v2647
      %v2649 = vadd.s32 %v213, 4294967288
      %v2650 = vlaneseq
      %v2651 = vshrl.u32 %v2650, 7
      %v2652 = vsub.s32 %v2649, %v2651
      %v2653 = vrot.slane %v1776, %v2652
      %vm2654 = vcmask 130112
      %v2655 = vsel %vm2654, %v2653, %v2648
      %v2656 = vadd.s32 %v213, 4294967280
      %v2657 = vlaneseq
      %v2658 = vshrl.u32 %v2657, 7
      %v2659 = vsub.s32 %v2656, %v2658
      %v2660 = vrot.slane %v1790, %v2659
      %vm2661 = vcmask 195712
      %v2662 = vsel %vm2661, %v2660, %v2655
      %v2663 = vadd.s32 %v213, 4294967272
      %v2664 = vlaneseq
      %v2665 = vshrl.u32 %v2664, 7
      %v2666 = vsub.s32 %v2663, %v2665
      %v2667 = vrot.slane %v1804, %v2666
      %vm2668 = vcmask 261312
      %v2669 = vsel %vm2668, %v2667, %v2662
      %v2670 = vadd.s32 %v213, 4294967264
      %v2671 = vlaneseq
      %v2672 = vshrl.u32 %v2671, 7
      %v2673 = vsub.s32 %v2670, %v2672
      %v2674 = vrot.slane %v1818, %v2673
      %vm2675 = vcmask 326912
      %v2676 = vsel %vm2675, %v2674, %v2669
      %v2677 = vadd.s32 %v213, 4294967256
      %v2678 = vlaneseq
      %v2679 = vshrl.u32 %v2678, 7
      %v2680 = vsub.s32 %v2677, %v2679
      %v2681 = vrot.slane %v1832, %v2680
      %vm2682 = vcmask 392512
      %v2683 = vsel %vm2682, %v2681, %v2676
      %v2684 = vadd.s32 %v213, 4294967248
      %v2685 = vlaneseq
      %v2686 = vshrl.u32 %v2685, 7
      %v2687 = vsub.s32 %v2684, %v2686
      %v2688 = vrot.slane %v1846, %v2687
      %vm2689 = vcmask 458112
      %v2690 = vsel %vm2689, %v2688, %v2683
      %v2691 = vadd.s32 %v213, 4294967240
      %v2692 = vlaneseq
      %v2693 = vshrl.u32 %v2692, 7
      %v2694 = vsub.s32 %v2691, %v2693
      %v2695 = vrot.slane %v1860, %v2694
      %vm2696 = vcmask 523712
      %v2697 = vsel %vm2696, %v2695, %v2690
      %v2698 = vadd.s32 %v213, 4294967232
      %v2699 = vlaneseq
      %v2700 = vshrl.u32 %v2699, 7
      %v2701 = vsub.s32 %v2698, %v2700
      %v2702 = vrot.slane %v1874, %v2701
      %vm2703 = vcmask 589312
      %v2704 = vsel %vm2703, %v2702, %v2697
      %v2705 = vadd.s32 %v213, 4294967224
      %v2706 = vlaneseq
      %v2707 = vshrl.u32 %v2706, 7
      %v2708 = vsub.s32 %v2705, %v2707
      %v2709 = vrot.slane %v1888, %v2708
      %vm2710 = vcmask 654912
      %v2711 = vsel %vm2710, %v2709, %v2704
      %v2712 = vadd.s32 %v213, 4294967216
      %v2713 = vlaneseq
      %v2714 = vshrl.u32 %v2713, 7
      %v2715 = vsub.s32 %v2712, %v2714
      %v2716 = vrot.slane %v1902, %v2715
      %vm2717 = vcmask 720512
      %v2718 = vsel %vm2717, %v2716, %v2711
      %v2719 = vadd.s32 %v213, 4294967208
      %v2720 = vlaneseq
      %v2721 = vshrl.u32 %v2720, 7
      %v2722 = vsub.s32 %v2719, %v2721
      %v2723 = vrot.slane %v1916, %v2722
      %vm2724 = vcmask 786112
      %v2725 = vsel %vm2724, %v2723, %v2718
      %v2726 = vadd.s32 %v213, 4294967200
      %v2727 = vlaneseq
      %v2728 = vshrl.u32 %v2727, 7
      %v2729 = vsub.s32 %v2726, %v2728
      %v2730 = vrot.slane %v1930, %v2729
      %vm2731 = vcmask 851712
      %v2732 = vsel %vm2731, %v2730, %v2725
      %v2733 = vadd.s32 %v213, 4294967192
      %v2734 = vlaneseq
      %v2735 = vshrl.u32 %v2734, 7
      %v2736 = vsub.s32 %v2733, %v2735
      %v2737 = vrot.slane %v1944, %v2736
      %vm2738 = vcmask 917312
      %v2739 = vsel %vm2738, %v2737, %v2732
      %v2740 = vadd.s32 %v213, 4294967184
      %v2741 = vlaneseq
      %v2742 = vshrl.u32 %v2741, 7
      %v2743 = vsub.s32 %v2740, %v2742
      %v2744 = vrot.slane %v1958, %v2743
      %vm2745 = vcmask 982912
      %v2746 = vsel %vm2745, %v2744, %v2739
      %v2747 = vadd.s32 %v213, 4294967176
      %v2748 = vlaneseq
      %v2749 = vshrl.u32 %v2748, 7
      %v2750 = vsub.s32 %v2747, %v2749
      %v2751 = vrot.slane %v1972, %v2750
      %vm2752 = vcmask 1048512
      %v2753 = vsel %vm2752, %v2751, %v2746
      %v2754 = vlaneseq
      %v2755 = vshrl.u32 %v2754, 7
      %v2756 = vsub.s32 %v213, %v2755
      %v2757 = vrot.slane %v1986, %v2756
      %v2758 = vlaneseq
      %v2759 = vshrl.u32 %v2758, 7
      %v2760 = vsub.s32 %v2649, %v2759
      %v2761 = vrot.slane %v2000, %v2760
      %v2762 = vsel %vm2654, %v2761, %v2757
      %v2763 = vlaneseq
      %v2764 = vshrl.u32 %v2763, 7
      %v2765 = vsub.s32 %v2656, %v2764
      %v2766 = vrot.slane %v2014, %v2765
      %v2767 = vsel %vm2661, %v2766, %v2762
      %v2768 = vlaneseq
      %v2769 = vshrl.u32 %v2768, 7
      %v2770 = vsub.s32 %v2663, %v2769
      %v2771 = vrot.slane %v2028, %v2770
      %v2772 = vsel %vm2668, %v2771, %v2767
      %v2773 = vlaneseq
      %v2774 = vshrl.u32 %v2773, 7
      %v2775 = vsub.s32 %v2670, %v2774
      %v2776 = vrot.slane %v2042, %v2775
      %v2777 = vsel %vm2675, %v2776, %v2772
      %v2778 = vlaneseq
      %v2779 = vshrl.u32 %v2778, 7
      %v2780 = vsub.s32 %v2677, %v2779
      %v2781 = vrot.slane %v2056, %v2780
      %v2782 = vsel %vm2682, %v2781, %v2777
      %v2783 = vlaneseq
      %v2784 = vshrl.u32 %v2783, 7
      %v2785 = vsub.s32 %v2684, %v2784
      %v2786 = vrot.slane %v2070, %v2785
      %v2787 = vsel %vm2689, %v2786, %v2782
      %v2788 = vlaneseq
      %v2789 = vshrl.u32 %v2788, 7
      %v2790 = vsub.s32 %v2691, %v2789
      %v2791 = vrot.slane %v2084, %v2790
      %v2792 = vsel %vm2696, %v2791, %v2787
      %v2793 = vlaneseq
      %v2794 = vshrl.u32 %v2793, 7
      %v2795 = vsub.s32 %v2698, %v2794
      %v2796 = vrot.slane %v2098, %v2795
      %v2797 = vsel %vm2703, %v2796, %v2792
      %v2798 = vlaneseq
      %v2799 = vshrl.u32 %v2798, 7
      %v2800 = vsub.s32 %v2705, %v2799
      %v2801 = vrot.slane %v2112, %v2800
      %v2802 = vsel %vm2710, %v2801, %v2797
      %v2803 = vlaneseq
      %v2804 = vshrl.u32 %v2803, 7
      %v2805 = vsub.s32 %v2712, %v2804
      %v2806 = vrot.slane %v2126, %v2805
      %v2807 = vsel %vm2717, %v2806, %v2802
      %v2808 = vlaneseq
      %v2809 = vshrl.u32 %v2808, 7
      %v2810 = vsub.s32 %v2719, %v2809
      %v2811 = vrot.slane %v2140, %v2810
      %v2812 = vsel %vm2724, %v2811, %v2807
      %v2813 = vlaneseq
      %v2814 = vshrl.u32 %v2813, 7
      %v2815 = vsub.s32 %v2726, %v2814
      %v2816 = vrot.slane %v2154, %v2815
      %v2817 = vsel %vm2731, %v2816, %v2812
      %v2818 = vlaneseq
      %v2819 = vshrl.u32 %v2818, 7
      %v2820 = vsub.s32 %v2733, %v2819
      %v2821 = vrot.slane %v2168, %v2820
      %v2822 = vsel %vm2738, %v2821, %v2817
      %v2823 = vlaneseq
      %v2824 = vshrl.u32 %v2823, 7
      %v2825 = vsub.s32 %v2740, %v2824
      %v2826 = vrot.slane %v2182, %v2825
      %v2827 = vsel %vm2745, %v2826, %v2822
      %v2828 = vlaneseq
      %v2829 = vshrl.u32 %v2828, 7
      %v2830 = vsub.s32 %v2747, %v2829
      %v2831 = vrot.slane %v2196, %v2830
      %v2832 = vsel %vm2752, %v2831, %v2827
      %v2833 = vlaneseq
      %v2834 = vshrl.u32 %v2833, 7
      %v2835 = vsub.s32 %v213, %v2834
      %v2836 = vrot.slane %v2210, %v2835
      %v2837 = vlaneseq
      %v2838 = vshrl.u32 %v2837, 7
      %v2839 = vsub.s32 %v2649, %v2838
      %v2840 = vrot.slane %v2224, %v2839
      %v2841 = vsel %vm2654, %v2840, %v2836
      %v2842 = vlaneseq
      %v2843 = vshrl.u32 %v2842, 7
      %v2844 = vsub.s32 %v2656, %v2843
      %v2845 = vrot.slane %v2238, %v2844
      %v2846 = vsel %vm2661, %v2845, %v2841
      %v2847 = vlaneseq
      %v2848 = vshrl.u32 %v2847, 7
      %v2849 = vsub.s32 %v2663, %v2848
      %v2850 = vrot.slane %v2252, %v2849
      %v2851 = vsel %vm2668, %v2850, %v2846
      %v2852 = vlaneseq
      %v2853 = vshrl.u32 %v2852, 7
      %v2854 = vsub.s32 %v2670, %v2853
      %v2855 = vrot.slane %v2266, %v2854
      %v2856 = vsel %vm2675, %v2855, %v2851
      %v2857 = vlaneseq
      %v2858 = vshrl.u32 %v2857, 7
      %v2859 = vsub.s32 %v2677, %v2858
      %v2860 = vrot.slane %v2280, %v2859
      %v2861 = vsel %vm2682, %v2860, %v2856
      %v2862 = vlaneseq
      %v2863 = vshrl.u32 %v2862, 7
      %v2864 = vsub.s32 %v2684, %v2863
      %v2865 = vrot.slane %v2294, %v2864
      %v2866 = vsel %vm2689, %v2865, %v2861
      %v2867 = vlaneseq
      %v2868 = vshrl.u32 %v2867, 7
      %v2869 = vsub.s32 %v2691, %v2868
      %v2870 = vrot.slane %v2308, %v2869
      %v2871 = vsel %vm2696, %v2870, %v2866
      %v2872 = vlaneseq
      %v2873 = vshrl.u32 %v2872, 7
      %v2874 = vsub.s32 %v2698, %v2873
      %v2875 = vrot.slane %v2322, %v2874
      %v2876 = vsel %vm2703, %v2875, %v2871
      %v2877 = vlaneseq
      %v2878 = vshrl.u32 %v2877, 7
      %v2879 = vsub.s32 %v2705, %v2878
      %v2880 = vrot.slane %v2336, %v2879
      %v2881 = vsel %vm2710, %v2880, %v2876
      %v2882 = vlaneseq
      %v2883 = vshrl.u32 %v2882, 7
      %v2884 = vsub.s32 %v2712, %v2883
      %v2885 = vrot.slane %v2350, %v2884
      %v2886 = vsel %vm2717, %v2885, %v2881
      %v2887 = vlaneseq
      %v2888 = vshrl.u32 %v2887, 7
      %v2889 = vsub.s32 %v2719, %v2888
      %v2890 = vrot.slane %v2364, %v2889
      %v2891 = vsel %vm2724, %v2890, %v2886
      %v2892 = vlaneseq
      %v2893 = vshrl.u32 %v2892, 7
      %v2894 = vsub.s32 %v2726, %v2893
      %v2895 = vrot.slane %v2378, %v2894
      %v2896 = vsel %vm2731, %v2895, %v2891
      %v2897 = vlaneseq
      %v2898 = vshrl.u32 %v2897, 7
      %v2899 = vsub.s32 %v2733, %v2898
      %v2900 = vrot.slane %v2392, %v2899
      %v2901 = vsel %vm2738, %v2900, %v2896
      %v2902 = vlaneseq
      %v2903 = vshrl.u32 %v2902, 7
      %v2904 = vsub.s32 %v2740, %v2903
      %v2905 = vrot.slane %v2406, %v2904
      %v2906 = vsel %vm2745, %v2905, %v2901
      %v2907 = vlaneseq
      %v2908 = vshrl.u32 %v2907, 7
      %v2909 = vsub.s32 %v2747, %v2908
      %v2910 = vrot.slane %v2420, %v2909
      %v2911 = vsel %vm2752, %v2910, %v2906
      %v2912 = vlaneseq
      %v2913 = vshrl.u32 %v2912, 7
      %v2914 = vsub.s32 %v213, %v2913
      %v2915 = vrot.slane %v2434, %v2914
      %v2916 = vlaneseq
      %v2917 = vshrl.u32 %v2916, 7
      %v2918 = vsub.s32 %v2649, %v2917
      %v2919 = vrot.slane %v2448, %v2918
      %v2920 = vsel %vm2654, %v2919, %v2915
      %v2921 = vlaneseq
      %v2922 = vshrl.u32 %v2921, 7
      %v2923 = vsub.s32 %v2656, %v2922
      %v2924 = vrot.slane %v2462, %v2923
      %v2925 = vsel %vm2661, %v2924, %v2920
      %v2926 = vlaneseq
      %v2927 = vshrl.u32 %v2926, 7
      %v2928 = vsub.s32 %v2663, %v2927
      %v2929 = vrot.slane %v2476, %v2928
      %v2930 = vsel %vm2668, %v2929, %v2925
      %v2931 = vlaneseq
      %v2932 = vshrl.u32 %v2931, 7
      %v2933 = vsub.s32 %v2670, %v2932
      %v2934 = vrot.slane %v2490, %v2933
      %v2935 = vsel %vm2675, %v2934, %v2930
      %v2936 = vlaneseq
      %v2937 = vshrl.u32 %v2936, 7
      %v2938 = vsub.s32 %v2677, %v2937
      %v2939 = vrot.slane %v2504, %v2938
      %v2940 = vsel %vm2682, %v2939, %v2935
      %v2941 = vlaneseq
      %v2942 = vshrl.u32 %v2941, 7
      %v2943 = vsub.s32 %v2684, %v2942
      %v2944 = vrot.slane %v2518, %v2943
      %v2945 = vsel %vm2689, %v2944, %v2940
      %v2946 = vlaneseq
      %v2947 = vshrl.u32 %v2946, 7
      %v2948 = vsub.s32 %v2691, %v2947
      %v2949 = vrot.slane %v2532, %v2948
      %v2950 = vsel %vm2696, %v2949, %v2945
      %v2951 = vlaneseq
      %v2952 = vshrl.u32 %v2951, 7
      %v2953 = vsub.s32 %v2698, %v2952
      %v2954 = vrot.slane %v2546, %v2953
      %v2955 = vsel %vm2703, %v2954, %v2950
      %v2956 = vlaneseq
      %v2957 = vshrl.u32 %v2956, 7
      %v2958 = vsub.s32 %v2705, %v2957
      %v2959 = vrot.slane %v2560, %v2958
      %v2960 = vsel %vm2710, %v2959, %v2955
      %v2961 = vlaneseq
      %v2962 = vshrl.u32 %v2961, 7
      %v2963 = vsub.s32 %v2712, %v2962
      %v2964 = vrot.slane %v2574, %v2963
      %v2965 = vsel %vm2717, %v2964, %v2960
      %v2966 = vlaneseq
      %v2967 = vshrl.u32 %v2966, 7
      %v2968 = vsub.s32 %v2719, %v2967
      %v2969 = vrot.slane %v2588, %v2968
      %v2970 = vsel %vm2724, %v2969, %v2965
      %v2971 = vlaneseq
      %v2972 = vshrl.u32 %v2971, 7
      %v2973 = vsub.s32 %v2726, %v2972
      %v2974 = vrot.slane %v2602, %v2973
      %v2975 = vsel %vm2731, %v2974, %v2970
      %v2976 = vlaneseq
      %v2977 = vshrl.u32 %v2976, 7
      %v2978 = vsub.s32 %v2733, %v2977
      %v2979 = vrot.slane %v2616, %v2978
      %v2980 = vsel %vm2738, %v2979, %v2975
      %v2981 = vlaneseq
      %v2982 = vshrl.u32 %v2981, 7
      %v2983 = vsub.s32 %v2740, %v2982
      %v2984 = vrot.slane %v2630, %v2983
      %v2985 = vsel %vm2745, %v2984, %v2980
      %v2986 = vlaneseq
      %v2987 = vshrl.u32 %v2986, 7
      %v2988 = vsub.s32 %v2747, %v2987
      %v2989 = vrot.slane %v2644, %v2988
      %v2990 = vsel %vm2752, %v2989, %v2985
      %vm2991 = vcmask 1041409
      %v2992 = vsel %vm2991, %v2832, %v2753
      %vm2993 = vcmask 1042434
      %v2994 = vsel %vm2993, %v2911, %v2992
      %vm2995 = vcmask 1043459
      %v2996 = vsel %vm2995, %v2990, %v2994
      %2997 = vst [vmem:[#allocation4] sm:$0xf] %v2996
    $region21: #{tpu_custom_call.1} parent=1 // pred_fallthru
      _
    // Predicated region
    $region22: #{tpu_custom_call.1} parent=1 // pred_check
      _
    $region23: #{tpu_custom_call.1} parent=1 // pred_check_branch
      %2999 = sbr.rel (0) target = $region25
    $region24: #{tpu_custom_call.1} parent=1 // pred_region
      %s3001 = ssub.s32 64, 64
      %3002 = vsyncadd [#allocation5], %s3001
      %s3004 = sshll.u32 [#allocation4], 4
      %s3005 = int_to_ptr.vmem [resolvable:$true] %s3004
      %3007 = dma.vmem_to_hbm [thread:$0]  %s3005, 64, %s3, [#allocation5]
    $region25: #{tpu_custom_call.1} parent=1 // pred_fallthru
      _
    // Predicated region
    $region26: #{tpu_custom_call.1} parent=1 // pred_check
      _
    $region27: #{tpu_custom_call.1} parent=1 // pred_check_branch
      %3009 = sbr.rel (0) target = $region29
    $region28: #{tpu_custom_call.1} parent=1 // pred_region
      %3010 = dma.done [#allocation5], 64
    $region29: #{tpu_custom_call.1} parent=1 // pred_fallthru
      _
    %3011 = vsyncpa [#allocation5], 1

</llo_original>
